<compile_context>
chip_gen: v7x
topology: tpu7x:2x2x1
jax: 0.10.0
libtpu: 0.0.40
codegen_flags: <defaults>
</compile_context>

<pallas_src>
import jax
import jax.numpy as jnp
from jax import lax
from jax.experimental import pallas as pl
from jax.experimental.pallas import tpu as pltpu


def _round_up(x, m):
    return ((x + m - 1) // m) * m


# ---------------------------------------------------------------------------
# Fused GRU kernel.  grid = (batch_blocks, time_blocks); time innermost.
# Only h_{t-1} @ W_hh remains on the serial critical path.
# ---------------------------------------------------------------------------
def gru_kernel(x_ref, wih_ref, whh_ref, bih_ref, bhn_ref, out_ref, h_scr, gx_scr):
    """x_ref  : (TT, tb, H)      embedded inputs (time-major block), param_dtype
       wih_ref: (H, 3Hp)         fused input weights [W_ir|W_iz|W_in] (x @ W form)
       whh_ref: (Hp, 3Hp)        fused recurrent weights [W_hr|W_hz|W_hn]
       bih_ref: (1, 3Hp) f32     b_ih with b_hr/b_hz folded in (n slot = b_in only)
       bhn_ref: (1, Hp)  f32     b_hn (must stay inside the r* term per PyTorch)
       out_ref: (TT, tb, Hp)     time-major hidden states for this block
       h_scr  : (tb, Hp)  f32    carry of h across time blocks (reset at block 0)
       gx_scr : (TT, tb, 3Hp) f32 staged input-side gate pre-activations
    """
    tc = pl.program_id(1)  # time-block index (innermost, "arbitrary")

    # NOTE: the h carry relies on the grid order (batch outer/"parallel",
    # time inner/"arbitrary"): every time block of one batch block runs
    # consecutively on one core.  Do not reorder the grid axes.
    @pl.when(tc == 0)
    def _():
        h_scr[...] = jnp.zeros_like(h_scr)

    tt_steps, tb, _ = x_ref.shape
    hp = h_scr.shape[-1]
    wdt = whh_ref.dtype

    # ---- Hoisted input projection for the whole time block (off critical path)
    bih_b = jnp.broadcast_to(bih_ref[...].astype(jnp.float32), (tb, 3 * hp))
    for t in range(tt_steps):                      # independent GEMMs, no carry
        gx_scr[t] = jnp.dot(x_ref[t], wih_ref[...],
                            preferred_element_type=jnp.float32) + bih_b

    bhn_b = jnp.broadcast_to(bhn_ref[...].astype(jnp.float32), (tb, hp))  # hoisted

    # ---- Serial recurrence: one fused (tb,Hp)x(Hp,3Hp) MXU push per step ------
    def step(t, h):
        g_x = gx_scr[t]                                            # (tb, 3Hp) f32
        g_h = jnp.dot(h.astype(wdt), whh_ref[...],
                      preferred_element_type=jnp.float32)          # (tb, 3Hp) f32
        r = jax.nn.sigmoid(g_x[:, 0:hp] + g_h[:, 0:hp])
        z = jax.nn.sigmoid(g_x[:, hp:2 * hp] + g_h[:, hp:2 * hp])
        n = jnp.tanh(g_x[:, 2 * hp:3 * hp] + r * (g_h[:, 2 * hp:3 * hp] + bhn_b))
        h = (1.0 - z) * n + z * h                                  # PyTorch GRU
        out_ref[t] = h.astype(out_ref.dtype)                       # dense store
        return h

    h_scr[...] = lax.fori_loop(0, tt_steps, step, h_scr[...], unroll=True)


# ---------------------------------------------------------------------------
# Wrapper: PyTorch-layout params (gate order r, z, n).
# ---------------------------------------------------------------------------
def encoder_rnn_forward(input_ids, emb_table, w_ih, w_hh, b_ih, b_hh,
                        *, param_dtype=jnp.float32, time_block=8, batch_block=None):
    """input_ids (B,T) int32; emb_table (V,H); w_ih/w_hh (3H,H); b_ih/b_hh (3H,).
    Returns (output (B,T,H), hidden (1,B,H)) matching nn.GRU(batch_first=True)."""
    B, T = input_ids.shape
    V, H = emb_table.shape
    Hp = _round_up(H, 128)                           # lane-dense hidden dim
    f32 = jnp.float32

    # Time blocking: always pad T up (never fall back to a single T-sized block).
    tt = max(1, int(time_block))
    T_pad = _round_up(T, tt)

    # Batch blocking: give the "parallel" axis >= 2 blocks whenever possible
    # (feeds both v7x TensorCores / megacore), keep M large for the MXU.
    if batch_block is not None:
        tb = batch_block
    else:
        tb = B
        if B >= 16:
            for cand in (256, 128, 64, 32, 16, 8):
                if cand <= B // 2 and B % cand == 0:
                    tb = cand
                    break
    assert B % tb == 0 and (tb % 8 == 0 or tb == B)

    # --- Fuse/pad weights into "x @ W" form with 128-lane-aligned gate slots ----
    def fuse_pad_w(w, k_dim):        # (3H, H) torch layout -> (k_dim, 3Hp)
        wt = w.T.astype(f32)         # (H, 3H); gate g occupies cols [g*H,(g+1)*H)
        out = jnp.zeros((k_dim, 3 * Hp), f32)
        for g in range(3):
            out = out.at[:H, g * Hp:g * Hp + H].set(wt[:, g * H:(g + 1) * H])
        return out.astype(param_dtype)

    wih_f = fuse_pad_w(w_ih, H)      # (H, 3Hp)  -- K dim left at width H
    whh_f = fuse_pad_w(w_hh, Hp)     # (Hp, 3Hp)

    # b_ih with b_hr/b_hz folded in; b_hn kept separate (inside r* per PyTorch).
    bih_fused = jnp.zeros((1, 3 * Hp), f32)
    for g in range(3):
        bg = b_ih[g * H:(g + 1) * H].astype(f32)
        if g < 2:
            bg = bg + b_hh[g * H:(g + 1) * H].astype(f32)
        bih_fused = bih_fused.at[0, g * Hp:g * Hp + H].set(bg)
    bhn = jnp.zeros((1, Hp), f32).at[0, :H].set(b_hh[2 * H:3 * H].astype(f32))

    # Embedding gather at width H in param_dtype (no padded f32 table copy).
    # Dropout: eval-mode identity.
    # TODO(synk): training-mode dropout (random mask) not implemented.
    x_tm = jnp.take(emb_table.astype(param_dtype), input_ids.T, axis=0)  # (T,B,H)
    if T_pad != T:
        x_tm = jnp.pad(x_tm, ((0, T_pad - T), (0, 0), (0, 0)))

    # --- VMEM budget (double-buffered blocks + resident weights + scratch) -----
    it_w = jnp.dtype(param_dtype).itemsize
    vmem_need = (2 * tt * tb * H * it_w              # x input block
                 + 2 * tt * tb * Hp * 4              # f32 output block
                 + 2 * (H + Hp) * 3 * Hp * it_w      # W_ih + W_hh
                 + tt * tb * 3 * Hp * 4              # gx scratch
                 + tb * Hp * 4                       # h carry
                 + 16 * 3 * Hp * 4)                  # biases (padded)
    try:
        vmem_cap = int(pltpu.get_tpu_info().vmem_capacity_bytes)
    except Exception:
        vmem_cap = 64 << 20                          # conservative (v7x per-TC)
    vmem_limit = int(min(max(vmem_need * 3 // 2 + (2 << 20), 32 << 20),
                         int(vmem_cap * 0.9)))

    out_tm = pl.pallas_call(
        gru_kernel,
        out_shape=jax.ShapeDtypeStruct((T_pad, B, Hp), jnp.float32),
        grid_spec=pltpu.PrefetchScalarGridSpec(
            num_scalar_prefetch=0,
            grid=(B // tb, T_pad // tt),
            in_specs=[
                pl.BlockSpec((tt, tb, H), lambda b, c: (c, b, 0)),      # x block
                pl.BlockSpec((H, 3 * Hp), lambda b, c: (0, 0)),         # W_ih fused
                pl.BlockSpec((Hp, 3 * Hp), lambda b, c: (0, 0)),        # W_hh fused
                pl.BlockSpec((1, 3 * Hp), lambda b, c: (0, 0)),         # b_ih fused
                pl.BlockSpec((1, Hp), lambda b, c: (0, 0)),             # b_hn
            ],
            out_specs=pl.BlockSpec((tt, tb, Hp), lambda b, c: (c, b, 0)),  # time-major
            scratch_shapes=[
                pltpu.VMEM((tb, Hp), jnp.float32),            # h carry
                pltpu.VMEM((tt, tb, 3 * Hp), jnp.float32),    # staged gate pre-acts
            ],
        ),
        compiler_params=pltpu.CompilerParams(
            dimension_semantics=("parallel", "arbitrary"),
            vmem_limit_bytes=vmem_limit),
    )(x_tm, wih_f, whh_f, bih_fused, bhn)

    # One layout pass outside the kernel: drop time/lane padding, time-major ->
    # batch-first.
    output = jnp.transpose(out_tm[:T, :, :H], (1, 0, 2))     # (B, T, H) f32
    # NOTE: final hidden = last output step; valid because there is no
    # variable-length masking/packing (all sequences run the full T steps).
    hidden = output[:, -1, :][None]                           # (1, B, H)
    return output, hidden


# ---------------------------------------------------------------------------
# Pure-JAX reference (lax.scan) with identical PyTorch GRU semantics.
# ---------------------------------------------------------------------------
def reference_encoder(input_ids, emb_table, w_ih, w_hh, b_ih, b_hh):
    B, T = input_ids.shape
    H = emb_table.shape[1]
    x = jnp.transpose(emb_table[input_ids].astype(jnp.float32), (1, 0, 2))  # (T,B,H)
    h0 = jnp.zeros((B, H), jnp.float32)

    def step(h, x_t):
        gi = x_t @ w_ih.T + b_ih
        gh = h @ w_hh.T + b_hh
        r = jax.nn.sigmoid(gi[:, :H] + gh[:, :H])
        z = jax.nn.sigmoid(gi[:, H:2 * H] + gh[:, H:2 * H])
        n = jnp.tanh(gi[:, 2 * H:] + r * gh[:, 2 * H:])
        h_new = (1.0 - z) * n + z * h
        return h_new, h_new

    hN, ys = lax.scan(step, h0, x)
    return jnp.transpose(ys, (1, 0, 2)), hN[None]


if __name__ == "__main__":
    # Small shapes: vocab=16, hidden=32, batch=2, seq=16 (2 time blocks of 8).
    VOCAB, HIDDEN, B, T = 16, 32, 2, 16

    key = jax.random.PRNGKey(0)
    k_ids, k_emb, k_wih, k_whh, k_bih, k_bhh = jax.random.split(key, 6)

    bound = 1.0 / (HIDDEN ** 0.5)                 # PyTorch default GRU init scale
    input_ids = jax.random.randint(k_ids, (B, T), 0, VOCAB, dtype=jnp.int32)
    emb_table = jax.random.normal(k_emb, (VOCAB, HIDDEN), jnp.float32)
    w_ih = jax.random.uniform(k_wih, (3 * HIDDEN, HIDDEN), jnp.float32, -bound, bound)
    w_hh = jax.random.uniform(k_whh, (3 * HIDDEN, HIDDEN), jnp.float32, -bound, bound)
    b_ih = jax.random.uniform(k_bih, (3 * HIDDEN,), jnp.float32, -bound, bound)
    b_hh = jax.random.uniform(k_bhh, (3 * HIDDEN,), jnp.float32, -bound, bound)

    ref_out, ref_hid = reference_encoder(input_ids, emb_table, w_ih, w_hh, b_ih, b_hh)

    # f32 path (tight check).
    output, hidden = encoder_rnn_forward(input_ids, emb_table, w_ih, w_hh, b_ih, b_hh)
    output, hidden = jax.block_until_ready((output, hidden))
    assert output.shape == (B, T, HIDDEN) and hidden.shape == (1, B, HIDDEN)
    assert jnp.allclose(output, ref_out, atol=1e-4, rtol=1e-4)
    assert jnp.allclose(hidden, ref_hid, atol=1e-4, rtol=1e-4)

    # bf16 weight/activation path (f32 carry + f32 MXU accumulation), loose check.
    out_bf, hid_bf = encoder_rnn_forward(input_ids, emb_table, w_ih, w_hh, b_ih, b_hh,
                                         param_dtype=jnp.bfloat16)
    out_bf, hid_bf = jax.block_until_ready((out_bf, hid_bf))
    assert out_bf.shape == (B, T, HIDDEN) and hid_bf.shape == (1, B, HIDDEN)
    assert jnp.allclose(out_bf, ref_out, atol=1e-1, rtol=1e-1)

    print("KERNEL_OK")
</pallas_src>

<mosaic_0001>
module attributes {stable_mosaic.version = 11 : i64} {
  func.func @gru_kernel(%arg0: i32, %arg1: i32, %arg2: memref<8x2x32xf32, #tpu.memory_space<vmem>>, %arg3: memref<32x384xf32, #tpu.memory_space<vmem>>, %arg4: memref<128x384xf32, #tpu.memory_space<vmem>>, %arg5: memref<1x384xf32, #tpu.memory_space<vmem>>, %arg6: memref<1x128xf32, #tpu.memory_space<vmem>>, %arg7: memref<8x2x128xf32, #tpu.memory_space<vmem>>, %arg8: memref<2x128xf32, #tpu.memory_space<vmem>>, %arg9: memref<8x2x384xf32, #tpu.memory_space<vmem>>) attributes {dimension_semantics = [#tpu.dimension_semantics<parallel>, #tpu.dimension_semantics<arbitrary>], iteration_bounds = array<i64: 1, 2>, scalar_prefetch = 0 : i64, scratch_operands = 2 : i64, tpu.core_type = #tpu.core_type<tc>, window_params = [{transform_indices = @transform_0, window_bounds = array<i64: 8, 2, 32>}, {pipeline_mode = #tpu.pipeline_mode<synchronous>, transform_indices = @transform_1, window_bounds = array<i64: 32, 384>}, {pipeline_mode = #tpu.pipeline_mode<synchronous>, transform_indices = @transform_2, window_bounds = array<i64: 128, 384>}, {pipeline_mode = #tpu.pipeline_mode<synchronous>, transform_indices = @transform_3, window_bounds = array<i64: 1, 384>}, {pipeline_mode = #tpu.pipeline_mode<synchronous>, transform_indices = @transform_4, window_bounds = array<i64: 1, 128>}, {transform_indices = @transform_5, window_bounds = array<i64: 8, 2, 128>}]} {
    %c0_i32 = arith.constant 0 : i32
    %0 = arith.cmpi eq, %arg1, %c0_i32 : i32
    %1 = arith.extui %0 : i1 to i32
    %c0_i32_0 = arith.constant 0 : i32
    %2 = arith.cmpi ne, %1, %c0_i32_0 : i32
    scf.if %2 {
      %cst_153 = arith.constant 0.000000e+00 : f32
      %363 = vector.broadcast %cst_153 : f32 to vector<2x128xf32>
      %c0_154 = arith.constant 0 : index
      %c0_155 = arith.constant 0 : index
      %364 = vector.load %arg8[%c0_154, %c0_155] : memref<2x128xf32, #tpu.memory_space<vmem>>, vector<2x128xf32>
      tpu.vector_store %arg8[%c0_154, %c0_155], %363 {strides = array<i32>} : memref<2x128xf32, #tpu.memory_space<vmem>>, vector<2x128xf32>,
    } else {
    }
    %c0 = arith.constant 0 : index
    %c0_1 = arith.constant 0 : index
    %3 = vector.load %arg5[%c0, %c0_1] : memref<1x384xf32, #tpu.memory_space<vmem>>, vector<1x384xf32>
    %4 = vector.shape_cast %3 : vector<1x384xf32> to vector<1x384xf32>
    %5 = vector.broadcast %4 : vector<1x384xf32> to vector<2x384xf32>
    %c0_2 = arith.constant 0 : index
    %c0_3 = arith.constant 0 : index
    %c0_4 = arith.constant 0 : index
    %6 = vector.load %arg2[%c0_2, %c0_3, %c0_4] : memref<8x2x32xf32, #tpu.memory_space<vmem>>, vector<1x2x32xf32>
    %7 = vector.shape_cast %6 : vector<1x2x32xf32> to vector<2x32xf32>
    %c0_5 = arith.constant 0 : index
    %c0_6 = arith.constant 0 : index
    %8 = vector.load %arg3[%c0_5, %c0_6] : memref<32x384xf32, #tpu.memory_space<vmem>>, vector<32x384xf32>
    %cst = arith.constant dense<0.000000e+00> : vector<2x384xf32>
    %9 = tpu.matmul %7, %8, %cst {dimension_numbers = #tpu.dot_dimension_numbers<[1], [0], [0], [1], [0, 0, 1, 1], [], []>} : vector<2x32xf32>, vector<32x384xf32>, vector<2x384xf32> -> vector<2x384xf32>
    %10 = arith.addf %9, %5 : vector<2x384xf32>
    %c0_7 = arith.constant 0 : index
    %c0_8 = arith.constant 0 : index
    %c0_9 = arith.constant 0 : index
    %11 = vector.load %arg9[%c0_7, %c0_8, %c0_9] : memref<8x2x384xf32, #tpu.memory_space<vmem>>, vector<1x2x384xf32>
    %12 = vector.shape_cast %11 : vector<1x2x384xf32> to vector<2x384xf32>
    %13 = vector.shape_cast %10 : vector<2x384xf32> to vector<1x2x384xf32>
    tpu.vector_store %arg9[%c0_7, %c0_8, %c0_9], %13 {strides = array<i32>} : memref<8x2x384xf32, #tpu.memory_space<vmem>>, vector<1x2x384xf32>,
    %c1 = arith.constant 1 : index
    %c0_10 = arith.constant 0 : index
    %c0_11 = arith.constant 0 : index
    %14 = vector.load %arg2[%c1, %c0_10, %c0_11] : memref<8x2x32xf32, #tpu.memory_space<vmem>>, vector<1x2x32xf32>
    %15 = vector.shape_cast %14 : vector<1x2x32xf32> to vector<2x32xf32>
    %c0_12 = arith.constant 0 : index
    %c0_13 = arith.constant 0 : index
    %16 = vector.load %arg3[%c0_12, %c0_13] : memref<32x384xf32, #tpu.memory_space<vmem>>, vector<32x384xf32>
    %cst_14 = arith.constant dense<0.000000e+00> : vector<2x384xf32>
    %17 = tpu.matmul %15, %16, %cst_14 {dimension_numbers = #tpu.dot_dimension_numbers<[1], [0], [0], [1], [0, 0, 1, 1], [], []>} : vector<2x32xf32>, vector<32x384xf32>, vector<2x384xf32> -> vector<2x384xf32>
    %18 = arith.addf %17, %5 : vector<2x384xf32>
    %c1_15 = arith.constant 1 : index
    %c0_16 = arith.constant 0 : index
    %c0_17 = arith.constant 0 : index
    %19 = vector.load %arg9[%c1_15, %c0_16, %c0_17] : memref<8x2x384xf32, #tpu.memory_space<vmem>>, vector<1x2x384xf32>
    %20 = vector.shape_cast %19 : vector<1x2x384xf32> to vector<2x384xf32>
    %21 = vector.shape_cast %18 : vector<2x384xf32> to vector<1x2x384xf32>
    tpu.vector_store %arg9[%c1_15, %c0_16, %c0_17], %21 {strides = array<i32>} : memref<8x2x384xf32, #tpu.memory_space<vmem>>, vector<1x2x384xf32>,
    %c2 = arith.constant 2 : index
    %c0_18 = arith.constant 0 : index
    %c0_19 = arith.constant 0 : index
    %22 = vector.load %arg2[%c2, %c0_18, %c0_19] : memref<8x2x32xf32, #tpu.memory_space<vmem>>, vector<1x2x32xf32>
    %23 = vector.shape_cast %22 : vector<1x2x32xf32> to vector<2x32xf32>
    %c0_20 = arith.constant 0 : index
    %c0_21 = arith.constant 0 : index
    %24 = vector.load %arg3[%c0_20, %c0_21] : memref<32x384xf32, #tpu.memory_space<vmem>>, vector<32x384xf32>
    %cst_22 = arith.constant dense<0.000000e+00> : vector<2x384xf32>
    %25 = tpu.matmul %23, %24, %cst_22 {dimension_numbers = #tpu.dot_dimension_numbers<[1], [0], [0], [1], [0, 0, 1, 1], [], []>} : vector<2x32xf32>, vector<32x384xf32>, vector<2x384xf32> -> vector<2x384xf32>
    %26 = arith.addf %25, %5 : vector<2x384xf32>
    %c2_23 = arith.constant 2 : index
    %c0_24 = arith.constant 0 : index
    %c0_25 = arith.constant 0 : index
    %27 = vector.load %arg9[%c2_23, %c0_24, %c0_25] : memref<8x2x384xf32, #tpu.memory_space<vmem>>, vector<1x2x384xf32>
    %28 = vector.shape_cast %27 : vector<1x2x384xf32> to vector<2x384xf32>
    %29 = vector.shape_cast %26 : vector<2x384xf32> to vector<1x2x384xf32>
    tpu.vector_store %arg9[%c2_23, %c0_24, %c0_25], %29 {strides = array<i32>} : memref<8x2x384xf32, #tpu.memory_space<vmem>>, vector<1x2x384xf32>,
    %c3 = arith.constant 3 : index
    %c0_26 = arith.constant 0 : index
    %c0_27 = arith.constant 0 : index
    %30 = vector.load %arg2[%c3, %c0_26, %c0_27] : memref<8x2x32xf32, #tpu.memory_space<vmem>>, vector<1x2x32xf32>
    %31 = vector.shape_cast %30 : vector<1x2x32xf32> to vector<2x32xf32>
    %c0_28 = arith.constant 0 : index
    %c0_29 = arith.constant 0 : index
    %32 = vector.load %arg3[%c0_28, %c0_29] : memref<32x384xf32, #tpu.memory_space<vmem>>, vector<32x384xf32>
    %cst_30 = arith.constant dense<0.000000e+00> : vector<2x384xf32>
    %33 = tpu.matmul %31, %32, %cst_30 {dimension_numbers = #tpu.dot_dimension_numbers<[1], [0], [0], [1], [0, 0, 1, 1], [], []>} : vector<2x32xf32>, vector<32x384xf32>, vector<2x384xf32> -> vector<2x384xf32>
    %34 = arith.addf %33, %5 : vector<2x384xf32>
    %c3_31 = arith.constant 3 : index
    %c0_32 = arith.constant 0 : index
    %c0_33 = arith.constant 0 : index
    %35 = vector.load %arg9[%c3_31, %c0_32, %c0_33] : memref<8x2x384xf32, #tpu.memory_space<vmem>>, vector<1x2x384xf32>
    %36 = vector.shape_cast %35 : vector<1x2x384xf32> to vector<2x384xf32>
    %37 = vector.shape_cast %34 : vector<2x384xf32> to vector<1x2x384xf32>
    tpu.vector_store %arg9[%c3_31, %c0_32, %c0_33], %37 {strides = array<i32>} : memref<8x2x384xf32, #tpu.memory_space<vmem>>, vector<1x2x384xf32>,
    %c4 = arith.constant 4 : index
    %c0_34 = arith.constant 0 : index
    %c0_35 = arith.constant 0 : index
    %38 = vector.load %arg2[%c4, %c0_34, %c0_35] : memref<8x2x32xf32, #tpu.memory_space<vmem>>, vector<1x2x32xf32>
    %39 = vector.shape_cast %38 : vector<1x2x32xf32> to vector<2x32xf32>
    %c0_36 = arith.constant 0 : index
    %c0_37 = arith.constant 0 : index
    %40 = vector.load %arg3[%c0_36, %c0_37] : memref<32x384xf32, #tpu.memory_space<vmem>>, vector<32x384xf32>
    %cst_38 = arith.constant dense<0.000000e+00> : vector<2x384xf32>
    %41 = tpu.matmul %39, %40, %cst_38 {dimension_numbers = #tpu.dot_dimension_numbers<[1], [0], [0], [1], [0, 0, 1, 1], [], []>} : vector<2x32xf32>, vector<32x384xf32>, vector<2x384xf32> -> vector<2x384xf32>
    %42 = arith.addf %41, %5 : vector<2x384xf32>
    %c4_39 = arith.constant 4 : index
    %c0_40 = arith.constant 0 : index
    %c0_41 = arith.constant 0 : index
    %43 = vector.load %arg9[%c4_39, %c0_40, %c0_41] : memref<8x2x384xf32, #tpu.memory_space<vmem>>, vector<1x2x384xf32>
    %44 = vector.shape_cast %43 : vector<1x2x384xf32> to vector<2x384xf32>
    %45 = vector.shape_cast %42 : vector<2x384xf32> to vector<1x2x384xf32>
    tpu.vector_store %arg9[%c4_39, %c0_40, %c0_41], %45 {strides = array<i32>} : memref<8x2x384xf32, #tpu.memory_space<vmem>>, vector<1x2x384xf32>,
    %c5 = arith.constant 5 : index
    %c0_42 = arith.constant 0 : index
    %c0_43 = arith.constant 0 : index
    %46 = vector.load %arg2[%c5, %c0_42, %c0_43] : memref<8x2x32xf32, #tpu.memory_space<vmem>>, vector<1x2x32xf32>
    %47 = vector.shape_cast %46 : vector<1x2x32xf32> to vector<2x32xf32>
    %c0_44 = arith.constant 0 : index
    %c0_45 = arith.constant 0 : index
    %48 = vector.load %arg3[%c0_44, %c0_45] : memref<32x384xf32, #tpu.memory_space<vmem>>, vector<32x384xf32>
    %cst_46 = arith.constant dense<0.000000e+00> : vector<2x384xf32>
    %49 = tpu.matmul %47, %48, %cst_46 {dimension_numbers = #tpu.dot_dimension_numbers<[1], [0], [0], [1], [0, 0, 1, 1], [], []>} : vector<2x32xf32>, vector<32x384xf32>, vector<2x384xf32> -> vector<2x384xf32>
    %50 = arith.addf %49, %5 : vector<2x384xf32>
    %c5_47 = arith.constant 5 : index
    %c0_48 = arith.constant 0 : index
    %c0_49 = arith.constant 0 : index
    %51 = vector.load %arg9[%c5_47, %c0_48, %c0_49] : memref<8x2x384xf32, #tpu.memory_space<vmem>>, vector<1x2x384xf32>
    %52 = vector.shape_cast %51 : vector<1x2x384xf32> to vector<2x384xf32>
    %53 = vector.shape_cast %50 : vector<2x384xf32> to vector<1x2x384xf32>
    tpu.vector_store %arg9[%c5_47, %c0_48, %c0_49], %53 {strides = array<i32>} : memref<8x2x384xf32, #tpu.memory_space<vmem>>, vector<1x2x384xf32>,
    %c6 = arith.constant 6 : index
    %c0_50 = arith.constant 0 : index
    %c0_51 = arith.constant 0 : index
    %54 = vector.load %arg2[%c6, %c0_50, %c0_51] : memref<8x2x32xf32, #tpu.memory_space<vmem>>, vector<1x2x32xf32>
    %55 = vector.shape_cast %54 : vector<1x2x32xf32> to vector<2x32xf32>
    %c0_52 = arith.constant 0 : index
    %c0_53 = arith.constant 0 : index
    %56 = vector.load %arg3[%c0_52, %c0_53] : memref<32x384xf32, #tpu.memory_space<vmem>>, vector<32x384xf32>
    %cst_54 = arith.constant dense<0.000000e+00> : vector<2x384xf32>
    %57 = tpu.matmul %55, %56, %cst_54 {dimension_numbers = #tpu.dot_dimension_numbers<[1], [0], [0], [1], [0, 0, 1, 1], [], []>} : vector<2x32xf32>, vector<32x384xf32>, vector<2x384xf32> -> vector<2x384xf32>
    %58 = arith.addf %57, %5 : vector<2x384xf32>
    %c6_55 = arith.constant 6 : index
    %c0_56 = arith.constant 0 : index
    %c0_57 = arith.constant 0 : index
    %59 = vector.load %arg9[%c6_55, %c0_56, %c0_57] : memref<8x2x384xf32, #tpu.memory_space<vmem>>, vector<1x2x384xf32>
    %60 = vector.shape_cast %59 : vector<1x2x384xf32> to vector<2x384xf32>
    %61 = vector.shape_cast %58 : vector<2x384xf32> to vector<1x2x384xf32>
    tpu.vector_store %arg9[%c6_55, %c0_56, %c0_57], %61 {strides = array<i32>} : memref<8x2x384xf32, #tpu.memory_space<vmem>>, vector<1x2x384xf32>,
    %c7 = arith.constant 7 : index
    %c0_58 = arith.constant 0 : index
    %c0_59 = arith.constant 0 : index
    %62 = vector.load %arg2[%c7, %c0_58, %c0_59] : memref<8x2x32xf32, #tpu.memory_space<vmem>>, vector<1x2x32xf32>
    %63 = vector.shape_cast %62 : vector<1x2x32xf32> to vector<2x32xf32>
    %c0_60 = arith.constant 0 : index
    %c0_61 = arith.constant 0 : index
    %64 = vector.load %arg3[%c0_60, %c0_61] : memref<32x384xf32, #tpu.memory_space<vmem>>, vector<32x384xf32>
    %cst_62 = arith.constant dense<0.000000e+00> : vector<2x384xf32>
    %65 = tpu.matmul %63, %64, %cst_62 {dimension_numbers = #tpu.dot_dimension_numbers<[1], [0], [0], [1], [0, 0, 1, 1], [], []>} : vector<2x32xf32>, vector<32x384xf32>, vector<2x384xf32> -> vector<2x384xf32>
    %66 = arith.addf %65, %5 : vector<2x384xf32>
    %c7_63 = arith.constant 7 : index
    %c0_64 = arith.constant 0 : index
    %c0_65 = arith.constant 0 : index
    %67 = vector.load %arg9[%c7_63, %c0_64, %c0_65] : memref<8x2x384xf32, #tpu.memory_space<vmem>>, vector<1x2x384xf32>
    %68 = vector.shape_cast %67 : vector<1x2x384xf32> to vector<2x384xf32>
    %69 = vector.shape_cast %66 : vector<2x384xf32> to vector<1x2x384xf32>
    tpu.vector_store %arg9[%c7_63, %c0_64, %c0_65], %69 {strides = array<i32>} : memref<8x2x384xf32, #tpu.memory_space<vmem>>, vector<1x2x384xf32>,
    %c0_66 = arith.constant 0 : index
    %c0_67 = arith.constant 0 : index
    %70 = vector.load %arg6[%c0_66, %c0_67] : memref<1x128xf32, #tpu.memory_space<vmem>>, vector<1x128xf32>
    %71 = vector.shape_cast %70 : vector<1x128xf32> to vector<1x128xf32>
    %72 = vector.broadcast %71 : vector<1x128xf32> to vector<2x128xf32>
    %c0_68 = arith.constant 0 : index
    %c0_69 = arith.constant 0 : index
    %73 = vector.load %arg8[%c0_68, %c0_69] : memref<2x128xf32, #tpu.memory_space<vmem>>, vector<2x128xf32>
    %c0_i32_70 = arith.constant 0 : i32
    %74 = arith.index_cast %c0_i32_70 : i32 to index
    %c0_71 = arith.constant 0 : index
    %c0_72 = arith.constant 0 : index
    %75 = vector.load %arg9[%74, %c0_71, %c0_72] : memref<8x2x384xf32, #tpu.memory_space<vmem>>, vector<1x2x384xf32>
    %76 = vector.shape_cast %75 : vector<1x2x384xf32> to vector<2x384xf32>
    %c0_73 = arith.constant 0 : index
    %c0_74 = arith.constant 0 : index
    %77 = vector.load %arg4[%c0_73, %c0_74] : memref<128x384xf32, #tpu.memory_space<vmem>>, vector<128x384xf32>
    %cst_75 = arith.constant dense<0.000000e+00> : vector<2x384xf32>
    %78 = tpu.matmul %73, %77, %cst_75 {dimension_numbers = #tpu.dot_dimension_numbers<[1], [0], [0], [1], [0, 0, 1, 1], [], []>} : vector<2x128xf32>, vector<128x384xf32>, vector<2x384xf32> -> vector<2x384xf32>
    %79 = vector.extract_strided_slice %76 {offsets = [0, 0], sizes = [2, 128], strides = [1, 1]} : vector<2x384xf32> to vector<2x128xf32>
    %80 = vector.extract_strided_slice %78 {offsets = [0, 0], sizes = [2, 128], strides = [1, 1]} : vector<2x384xf32> to vector<2x128xf32>
    %81 = arith.addf %79, %80 : vector<2x128xf32>
    %82 = arith.negf %81 : vector<2x128xf32>
    %83 = math.exp %82 : vector<2x128xf32>
    %cst_76 = arith.constant 1.000000e+00 : f32
    %84 = vector.broadcast %cst_76 : f32 to vector<2x128xf32>
    %85 = arith.addf %84, %83 : vector<2x128xf32>
    %86 = arith.divf %84, %85 : vector<2x128xf32>
    %87 = vector.extract_strided_slice %76 {offsets = [0, 128], sizes = [2, 128], strides = [1, 1]} : vector<2x384xf32> to vector<2x128xf32>
    %88 = vector.extract_strided_slice %78 {offsets = [0, 128], sizes = [2, 128], strides = [1, 1]} : vector<2x384xf32> to vector<2x128xf32>
    %89 = arith.addf %87, %88 : vector<2x128xf32>
    %90 = arith.negf %89 : vector<2x128xf32>
    %91 = math.exp %90 : vector<2x128xf32>
    %cst_77 = arith.constant 1.000000e+00 : f32
    %92 = vector.broadcast %cst_77 : f32 to vector<2x128xf32>
    %93 = arith.addf %92, %91 : vector<2x128xf32>
    %94 = arith.divf %92, %93 : vector<2x128xf32>
    %95 = vector.extract_strided_slice %76 {offsets = [0, 256], sizes = [2, 128], strides = [1, 1]} : vector<2x384xf32> to vector<2x128xf32>
    %96 = vector.extract_strided_slice %78 {offsets = [0, 256], sizes = [2, 128], strides = [1, 1]} : vector<2x384xf32> to vector<2x128xf32>
    %97 = arith.addf %96, %72 : vector<2x128xf32>
    %98 = arith.mulf %86, %97 : vector<2x128xf32>
    %99 = arith.addf %95, %98 : vector<2x128xf32>
    %100 = math.tanh %99 : vector<2x128xf32>
    %cst_78 = arith.constant 1.000000e+00 : f32
    %101 = vector.broadcast %cst_78 : f32 to vector<2x128xf32>
    %102 = arith.subf %101, %94 : vector<2x128xf32>
    %103 = arith.mulf %102, %100 : vector<2x128xf32>
    %104 = arith.mulf %94, %73 : vector<2x128xf32>
    %105 = arith.addf %103, %104 : vector<2x128xf32>
    %106 = arith.index_cast %c0_i32_70 : i32 to index
    %c0_79 = arith.constant 0 : index
    %c0_80 = arith.constant 0 : index
    %107 = vector.load %arg7[%106, %c0_79, %c0_80] : memref<8x2x128xf32, #tpu.memory_space<vmem>>, vector<1x2x128xf32>
    %108 = vector.shape_cast %107 : vector<1x2x128xf32> to vector<2x128xf32>
    %109 = vector.shape_cast %105 : vector<2x128xf32> to vector<1x2x128xf32>
    tpu.vector_store %arg7[%106, %c0_79, %c0_80], %109 {strides = array<i32>} : memref<8x2x128xf32, #tpu.memory_space<vmem>>, vector<1x2x128xf32>,
    %c1_i32 = arith.constant 1 : i32
    %110 = arith.index_cast %c1_i32 : i32 to index
    %c0_81 = arith.constant 0 : index
    %c0_82 = arith.constant 0 : index
    %111 = vector.load %arg9[%110, %c0_81, %c0_82] : memref<8x2x384xf32, #tpu.memory_space<vmem>>, vector<1x2x384xf32>
    %112 = vector.shape_cast %111 : vector<1x2x384xf32> to vector<2x384xf32>
    %c0_83 = arith.constant 0 : index
    %c0_84 = arith.constant 0 : index
    %113 = vector.load %arg4[%c0_83, %c0_84] : memref<128x384xf32, #tpu.memory_space<vmem>>, vector<128x384xf32>
    %cst_85 = arith.constant dense<0.000000e+00> : vector<2x384xf32>
    %114 = tpu.matmul %105, %113, %cst_85 {dimension_numbers = #tpu.dot_dimension_numbers<[1], [0], [0], [1], [0, 0, 1, 1], [], []>} : vector<2x128xf32>, vector<128x384xf32>, vector<2x384xf32> -> vector<2x384xf32>
    %115 = vector.extract_strided_slice %112 {offsets = [0, 0], sizes = [2, 128], strides = [1, 1]} : vector<2x384xf32> to vector<2x128xf32>
    %116 = vector.extract_strided_slice %114 {offsets = [0, 0], sizes = [2, 128], strides = [1, 1]} : vector<2x384xf32> to vector<2x128xf32>
    %117 = arith.addf %115, %116 : vector<2x128xf32>
    %118 = arith.negf %117 : vector<2x128xf32>
    %119 = math.exp %118 : vector<2x128xf32>
    %cst_86 = arith.constant 1.000000e+00 : f32
    %120 = vector.broadcast %cst_86 : f32 to vector<2x128xf32>
    %121 = arith.addf %120, %119 : vector<2x128xf32>
    %122 = arith.divf %120, %121 : vector<2x128xf32>
    %123 = vector.extract_strided_slice %112 {offsets = [0, 128], sizes = [2, 128], strides = [1, 1]} : vector<2x384xf32> to vector<2x128xf32>
    %124 = vector.extract_strided_slice %114 {offsets = [0, 128], sizes = [2, 128], strides = [1, 1]} : vector<2x384xf32> to vector<2x128xf32>
    %125 = arith.addf %123, %124 : vector<2x128xf32>
    %126 = arith.negf %125 : vector<2x128xf32>
    %127 = math.exp %126 : vector<2x128xf32>
    %cst_87 = arith.constant 1.000000e+00 : f32
    %128 = vector.broadcast %cst_87 : f32 to vector<2x128xf32>
    %129 = arith.addf %128, %127 : vector<2x128xf32>
    %130 = arith.divf %128, %129 : vector<2x128xf32>
    %131 = vector.extract_strided_slice %112 {offsets = [0, 256], sizes = [2, 128], strides = [1, 1]} : vector<2x384xf32> to vector<2x128xf32>
    %132 = vector.extract_strided_slice %114 {offsets = [0, 256], sizes = [2, 128], strides = [1, 1]} : vector<2x384xf32> to vector<2x128xf32>
    %133 = arith.addf %132, %72 : vector<2x128xf32>
    %134 = arith.mulf %122, %133 : vector<2x128xf32>
    %135 = arith.addf %131, %134 : vector<2x128xf32>
    %136 = math.tanh %135 : vector<2x128xf32>
    %cst_88 = arith.constant 1.000000e+00 : f32
    %137 = vector.broadcast %cst_88 : f32 to vector<2x128xf32>
    %138 = arith.subf %137, %130 : vector<2x128xf32>
    %139 = arith.mulf %138, %136 : vector<2x128xf32>
    %140 = arith.mulf %130, %105 : vector<2x128xf32>
    %141 = arith.addf %139, %140 : vector<2x128xf32>
    %142 = arith.index_cast %c1_i32 : i32 to index
    %c0_89 = arith.constant 0 : index
    %c0_90 = arith.constant 0 : index
    %143 = vector.load %arg7[%142, %c0_89, %c0_90] : memref<8x2x128xf32, #tpu.memory_space<vmem>>, vector<1x2x128xf32>
    %144 = vector.shape_cast %143 : vector<1x2x128xf32> to vector<2x128xf32>
    %145 = vector.shape_cast %141 : vector<2x128xf32> to vector<1x2x128xf32>
    tpu.vector_store %arg7[%142, %c0_89, %c0_90], %145 {strides = array<i32>} : memref<8x2x128xf32, #tpu.memory_space<vmem>>, vector<1x2x128xf32>,
    %c2_i32 = arith.constant 2 : i32
    %146 = arith.index_cast %c2_i32 : i32 to index
    %c0_91 = arith.constant 0 : index
    %c0_92 = arith.constant 0 : index
    %147 = vector.load %arg9[%146, %c0_91, %c0_92] : memref<8x2x384xf32, #tpu.memory_space<vmem>>, vector<1x2x384xf32>
    %148 = vector.shape_cast %147 : vector<1x2x384xf32> to vector<2x384xf32>
    %c0_93 = arith.constant 0 : index
    %c0_94 = arith.constant 0 : index
    %149 = vector.load %arg4[%c0_93, %c0_94] : memref<128x384xf32, #tpu.memory_space<vmem>>, vector<128x384xf32>
    %cst_95 = arith.constant dense<0.000000e+00> : vector<2x384xf32>
    %150 = tpu.matmul %141, %149, %cst_95 {dimension_numbers = #tpu.dot_dimension_numbers<[1], [0], [0], [1], [0, 0, 1, 1], [], []>} : vector<2x128xf32>, vector<128x384xf32>, vector<2x384xf32> -> vector<2x384xf32>
    %151 = vector.extract_strided_slice %148 {offsets = [0, 0], sizes = [2, 128], strides = [1, 1]} : vector<2x384xf32> to vector<2x128xf32>
    %152 = vector.extract_strided_slice %150 {offsets = [0, 0], sizes = [2, 128], strides = [1, 1]} : vector<2x384xf32> to vector<2x128xf32>
    %153 = arith.addf %151, %152 : vector<2x128xf32>
    %154 = arith.negf %153 : vector<2x128xf32>
    %155 = math.exp %154 : vector<2x128xf32>
    %cst_96 = arith.constant 1.000000e+00 : f32
    %156 = vector.broadcast %cst_96 : f32 to vector<2x128xf32>
    %157 = arith.addf %156, %155 : vector<2x128xf32>
    %158 = arith.divf %156, %157 : vector<2x128xf32>
    %159 = vector.extract_strided_slice %148 {offsets = [0, 128], sizes = [2, 128], strides = [1, 1]} : vector<2x384xf32> to vector<2x128xf32>
    %160 = vector.extract_strided_slice %150 {offsets = [0, 128], sizes = [2, 128], strides = [1, 1]} : vector<2x384xf32> to vector<2x128xf32>
    %161 = arith.addf %159, %160 : vector<2x128xf32>
    %162 = arith.negf %161 : vector<2x128xf32>
    %163 = math.exp %162 : vector<2x128xf32>
    %cst_97 = arith.constant 1.000000e+00 : f32
    %164 = vector.broadcast %cst_97 : f32 to vector<2x128xf32>
    %165 = arith.addf %164, %163 : vector<2x128xf32>
    %166 = arith.divf %164, %165 : vector<2x128xf32>
    %167 = vector.extract_strided_slice %148 {offsets = [0, 256], sizes = [2, 128], strides = [1, 1]} : vector<2x384xf32> to vector<2x128xf32>
    %168 = vector.extract_strided_slice %150 {offsets = [0, 256], sizes = [2, 128], strides = [1, 1]} : vector<2x384xf32> to vector<2x128xf32>
    %169 = arith.addf %168, %72 : vector<2x128xf32>
    %170 = arith.mulf %158, %169 : vector<2x128xf32>
    %171 = arith.addf %167, %170 : vector<2x128xf32>
    %172 = math.tanh %171 : vector<2x128xf32>
    %cst_98 = arith.constant 1.000000e+00 : f32
    %173 = vector.broadcast %cst_98 : f32 to vector<2x128xf32>
    %174 = arith.subf %173, %166 : vector<2x128xf32>
    %175 = arith.mulf %174, %172 : vector<2x128xf32>
    %176 = arith.mulf %166, %141 : vector<2x128xf32>
    %177 = arith.addf %175, %176 : vector<2x128xf32>
    %178 = arith.index_cast %c2_i32 : i32 to index
    %c0_99 = arith.constant 0 : index
    %c0_100 = arith.constant 0 : index
    %179 = vector.load %arg7[%178, %c0_99, %c0_100] : memref<8x2x128xf32, #tpu.memory_space<vmem>>, vector<1x2x128xf32>
    %180 = vector.shape_cast %179 : vector<1x2x128xf32> to vector<2x128xf32>
    %181 = vector.shape_cast %177 : vector<2x128xf32> to vector<1x2x128xf32>
    tpu.vector_store %arg7[%178, %c0_99, %c0_100], %181 {strides = array<i32>} : memref<8x2x128xf32, #tpu.memory_space<vmem>>, vector<1x2x128xf32>,
    %c3_i32 = arith.constant 3 : i32
    %182 = arith.index_cast %c3_i32 : i32 to index
    %c0_101 = arith.constant 0 : index
    %c0_102 = arith.constant 0 : index
    %183 = vector.load %arg9[%182, %c0_101, %c0_102] : memref<8x2x384xf32, #tpu.memory_space<vmem>>, vector<1x2x384xf32>
    %184 = vector.shape_cast %183 : vector<1x2x384xf32> to vector<2x384xf32>
    %c0_103 = arith.constant 0 : index
    %c0_104 = arith.constant 0 : index
    %185 = vector.load %arg4[%c0_103, %c0_104] : memref<128x384xf32, #tpu.memory_space<vmem>>, vector<128x384xf32>
    %cst_105 = arith.constant dense<0.000000e+00> : vector<2x384xf32>
    %186 = tpu.matmul %177, %185, %cst_105 {dimension_numbers = #tpu.dot_dimension_numbers<[1], [0], [0], [1], [0, 0, 1, 1], [], []>} : vector<2x128xf32>, vector<128x384xf32>, vector<2x384xf32> -> vector<2x384xf32>
    %187 = vector.extract_strided_slice %184 {offsets = [0, 0], sizes = [2, 128], strides = [1, 1]} : vector<2x384xf32> to vector<2x128xf32>
    %188 = vector.extract_strided_slice %186 {offsets = [0, 0], sizes = [2, 128], strides = [1, 1]} : vector<2x384xf32> to vector<2x128xf32>
    %189 = arith.addf %187, %188 : vector<2x128xf32>
    %190 = arith.negf %189 : vector<2x128xf32>
    %191 = math.exp %190 : vector<2x128xf32>
    %cst_106 = arith.constant 1.000000e+00 : f32
    %192 = vector.broadcast %cst_106 : f32 to vector<2x128xf32>
    %193 = arith.addf %192, %191 : vector<2x128xf32>
    %194 = arith.divf %192, %193 : vector<2x128xf32>
    %195 = vector.extract_strided_slice %184 {offsets = [0, 128], sizes = [2, 128], strides = [1, 1]} : vector<2x384xf32> to vector<2x128xf32>
    %196 = vector.extract_strided_slice %186 {offsets = [0, 128], sizes = [2, 128], strides = [1, 1]} : vector<2x384xf32> to vector<2x128xf32>
    %197 = arith.addf %195, %196 : vector<2x128xf32>
    %198 = arith.negf %197 : vector<2x128xf32>
    %199 = math.exp %198 : vector<2x128xf32>
    %cst_107 = arith.constant 1.000000e+00 : f32
    %200 = vector.broadcast %cst_107 : f32 to vector<2x128xf32>
    %201 = arith.addf %200, %199 : vector<2x128xf32>
    %202 = arith.divf %200, %201 : vector<2x128xf32>
    %203 = vector.extract_strided_slice %184 {offsets = [0, 256], sizes = [2, 128], strides = [1, 1]} : vector<2x384xf32> to vector<2x128xf32>
    %204 = vector.extract_strided_slice %186 {offsets = [0, 256], sizes = [2, 128], strides = [1, 1]} : vector<2x384xf32> to vector<2x128xf32>
    %205 = arith.addf %204, %72 : vector<2x128xf32>
    %206 = arith.mulf %194, %205 : vector<2x128xf32>
    %207 = arith.addf %203, %206 : vector<2x128xf32>
    %208 = math.tanh %207 : vector<2x128xf32>
    %cst_108 = arith.constant 1.000000e+00 : f32
    %209 = vector.broadcast %cst_108 : f32 to vector<2x128xf32>
    %210 = arith.subf %209, %202 : vector<2x128xf32>
    %211 = arith.mulf %210, %208 : vector<2x128xf32>
    %212 = arith.mulf %202, %177 : vector<2x128xf32>
    %213 = arith.addf %211, %212 : vector<2x128xf32>
    %214 = arith.index_cast %c3_i32 : i32 to index
    %c0_109 = arith.constant 0 : index
    %c0_110 = arith.constant 0 : index
    %215 = vector.load %arg7[%214, %c0_109, %c0_110] : memref<8x2x128xf32, #tpu.memory_space<vmem>>, vector<1x2x128xf32>
    %216 = vector.shape_cast %215 : vector<1x2x128xf32> to vector<2x128xf32>
    %217 = vector.shape_cast %213 : vector<2x128xf32> to vector<1x2x128xf32>
    tpu.vector_store %arg7[%214, %c0_109, %c0_110], %217 {strides = array<i32>} : memref<8x2x128xf32, #tpu.memory_space<vmem>>, vector<1x2x128xf32>,
    %c4_i32 = arith.constant 4 : i32
    %218 = arith.index_cast %c4_i32 : i32 to index
    %c0_111 = arith.constant 0 : index
    %c0_112 = arith.constant 0 : index
    %219 = vector.load %arg9[%218, %c0_111, %c0_112] : memref<8x2x384xf32, #tpu.memory_space<vmem>>, vector<1x2x384xf32>
    %220 = vector.shape_cast %219 : vector<1x2x384xf32> to vector<2x384xf32>
    %c0_113 = arith.constant 0 : index
    %c0_114 = arith.constant 0 : index
    %221 = vector.load %arg4[%c0_113, %c0_114] : memref<128x384xf32, #tpu.memory_space<vmem>>, vector<128x384xf32>
    %cst_115 = arith.constant dense<0.000000e+00> : vector<2x384xf32>
    %222 = tpu.matmul %213, %221, %cst_115 {dimension_numbers = #tpu.dot_dimension_numbers<[1], [0], [0], [1], [0, 0, 1, 1], [], []>} : vector<2x128xf32>, vector<128x384xf32>, vector<2x384xf32> -> vector<2x384xf32>
    %223 = vector.extract_strided_slice %220 {offsets = [0, 0], sizes = [2, 128], strides = [1, 1]} : vector<2x384xf32> to vector<2x128xf32>
    %224 = vector.extract_strided_slice %222 {offsets = [0, 0], sizes = [2, 128], strides = [1, 1]} : vector<2x384xf32> to vector<2x128xf32>
    %225 = arith.addf %223, %224 : vector<2x128xf32>
    %226 = arith.negf %225 : vector<2x128xf32>
    %227 = math.exp %226 : vector<2x128xf32>
    %cst_116 = arith.constant 1.000000e+00 : f32
    %228 = vector.broadcast %cst_116 : f32 to vector<2x128xf32>
    %229 = arith.addf %228, %227 : vector<2x128xf32>
    %230 = arith.divf %228, %229 : vector<2x128xf32>
    %231 = vector.extract_strided_slice %220 {offsets = [0, 128], sizes = [2, 128], strides = [1, 1]} : vector<2x384xf32> to vector<2x128xf32>
    %232 = vector.extract_strided_slice %222 {offsets = [0, 128], sizes = [2, 128], strides = [1, 1]} : vector<2x384xf32> to vector<2x128xf32>
    %233 = arith.addf %231, %232 : vector<2x128xf32>
    %234 = arith.negf %233 : vector<2x128xf32>
    %235 = math.exp %234 : vector<2x128xf32>
    %cst_117 = arith.constant 1.000000e+00 : f32
    %236 = vector.broadcast %cst_117 : f32 to vector<2x128xf32>
    %237 = arith.addf %236, %235 : vector<2x128xf32>
    %238 = arith.divf %236, %237 : vector<2x128xf32>
    %239 = vector.extract_strided_slice %220 {offsets = [0, 256], sizes = [2, 128], strides = [1, 1]} : vector<2x384xf32> to vector<2x128xf32>
    %240 = vector.extract_strided_slice %222 {offsets = [0, 256], sizes = [2, 128], strides = [1, 1]} : vector<2x384xf32> to vector<2x128xf32>
    %241 = arith.addf %240, %72 : vector<2x128xf32>
    %242 = arith.mulf %230, %241 : vector<2x128xf32>
    %243 = arith.addf %239, %242 : vector<2x128xf32>
    %244 = math.tanh %243 : vector<2x128xf32>
    %cst_118 = arith.constant 1.000000e+00 : f32
    %245 = vector.broadcast %cst_118 : f32 to vector<2x128xf32>
    %246 = arith.subf %245, %238 : vector<2x128xf32>
    %247 = arith.mulf %246, %244 : vector<2x128xf32>
    %248 = arith.mulf %238, %213 : vector<2x128xf32>
    %249 = arith.addf %247, %248 : vector<2x128xf32>
    %250 = arith.index_cast %c4_i32 : i32 to index
    %c0_119 = arith.constant 0 : index
    %c0_120 = arith.constant 0 : index
    %251 = vector.load %arg7[%250, %c0_119, %c0_120] : memref<8x2x128xf32, #tpu.memory_space<vmem>>, vector<1x2x128xf32>
    %252 = vector.shape_cast %251 : vector<1x2x128xf32> to vector<2x128xf32>
    %253 = vector.shape_cast %249 : vector<2x128xf32> to vector<1x2x128xf32>
    tpu.vector_store %arg7[%250, %c0_119, %c0_120], %253 {strides = array<i32>} : memref<8x2x128xf32, #tpu.memory_space<vmem>>, vector<1x2x128xf32>,
    %c5_i32 = arith.constant 5 : i32
    %254 = arith.index_cast %c5_i32 : i32 to index
    %c0_121 = arith.constant 0 : index
    %c0_122 = arith.constant 0 : index
    %255 = vector.load %arg9[%254, %c0_121, %c0_122] : memref<8x2x384xf32, #tpu.memory_space<vmem>>, vector<1x2x384xf32>
    %256 = vector.shape_cast %255 : vector<1x2x384xf32> to vector<2x384xf32>
    %c0_123 = arith.constant 0 : index
    %c0_124 = arith.constant 0 : index
    %257 = vector.load %arg4[%c0_123, %c0_124] : memref<128x384xf32, #tpu.memory_space<vmem>>, vector<128x384xf32>
    %cst_125 = arith.constant dense<0.000000e+00> : vector<2x384xf32>
    %258 = tpu.matmul %249, %257, %cst_125 {dimension_numbers = #tpu.dot_dimension_numbers<[1], [0], [0], [1], [0, 0, 1, 1], [], []>} : vector<2x128xf32>, vector<128x384xf32>, vector<2x384xf32> -> vector<2x384xf32>
    %259 = vector.extract_strided_slice %256 {offsets = [0, 0], sizes = [2, 128], strides = [1, 1]} : vector<2x384xf32> to vector<2x128xf32>
    %260 = vector.extract_strided_slice %258 {offsets = [0, 0], sizes = [2, 128], strides = [1, 1]} : vector<2x384xf32> to vector<2x128xf32>
    %261 = arith.addf %259, %260 : vector<2x128xf32>
    %262 = arith.negf %261 : vector<2x128xf32>
    %263 = math.exp %262 : vector<2x128xf32>
    %cst_126 = arith.constant 1.000000e+00 : f32
    %264 = vector.broadcast %cst_126 : f32 to vector<2x128xf32>
    %265 = arith.addf %264, %263 : vector<2x128xf32>
    %266 = arith.divf %264, %265 : vector<2x128xf32>
    %267 = vector.extract_strided_slice %256 {offsets = [0, 128], sizes = [2, 128], strides = [1, 1]} : vector<2x384xf32> to vector<2x128xf32>
    %268 = vector.extract_strided_slice %258 {offsets = [0, 128], sizes = [2, 128], strides = [1, 1]} : vector<2x384xf32> to vector<2x128xf32>
    %269 = arith.addf %267, %268 : vector<2x128xf32>
    %270 = arith.negf %269 : vector<2x128xf32>
    %271 = math.exp %270 : vector<2x128xf32>
    %cst_127 = arith.constant 1.000000e+00 : f32
    %272 = vector.broadcast %cst_127 : f32 to vector<2x128xf32>
    %273 = arith.addf %272, %271 : vector<2x128xf32>
    %274 = arith.divf %272, %273 : vector<2x128xf32>
    %275 = vector.extract_strided_slice %256 {offsets = [0, 256], sizes = [2, 128], strides = [1, 1]} : vector<2x384xf32> to vector<2x128xf32>
    %276 = vector.extract_strided_slice %258 {offsets = [0, 256], sizes = [2, 128], strides = [1, 1]} : vector<2x384xf32> to vector<2x128xf32>
    %277 = arith.addf %276, %72 : vector<2x128xf32>
    %278 = arith.mulf %266, %277 : vector<2x128xf32>
    %279 = arith.addf %275, %278 : vector<2x128xf32>
    %280 = math.tanh %279 : vector<2x128xf32>
    %cst_128 = arith.constant 1.000000e+00 : f32
    %281 = vector.broadcast %cst_128 : f32 to vector<2x128xf32>
    %282 = arith.subf %281, %274 : vector<2x128xf32>
    %283 = arith.mulf %282, %280 : vector<2x128xf32>
    %284 = arith.mulf %274, %249 : vector<2x128xf32>
    %285 = arith.addf %283, %284 : vector<2x128xf32>
    %286 = arith.index_cast %c5_i32 : i32 to index
    %c0_129 = arith.constant 0 : index
    %c0_130 = arith.constant 0 : index
    %287 = vector.load %arg7[%286, %c0_129, %c0_130] : memref<8x2x128xf32, #tpu.memory_space<vmem>>, vector<1x2x128xf32>
    %288 = vector.shape_cast %287 : vector<1x2x128xf32> to vector<2x128xf32>
    %289 = vector.shape_cast %285 : vector<2x128xf32> to vector<1x2x128xf32>
    tpu.vector_store %arg7[%286, %c0_129, %c0_130], %289 {strides = array<i32>} : memref<8x2x128xf32, #tpu.memory_space<vmem>>, vector<1x2x128xf32>,
    %c6_i32 = arith.constant 6 : i32
    %290 = arith.index_cast %c6_i32 : i32 to index
    %c0_131 = arith.constant 0 : index
    %c0_132 = arith.constant 0 : index
    %291 = vector.load %arg9[%290, %c0_131, %c0_132] : memref<8x2x384xf32, #tpu.memory_space<vmem>>, vector<1x2x384xf32>
    %292 = vector.shape_cast %291 : vector<1x2x384xf32> to vector<2x384xf32>
    %c0_133 = arith.constant 0 : index
    %c0_134 = arith.constant 0 : index
    %293 = vector.load %arg4[%c0_133, %c0_134] : memref<128x384xf32, #tpu.memory_space<vmem>>, vector<128x384xf32>
    %cst_135 = arith.constant dense<0.000000e+00> : vector<2x384xf32>
    %294 = tpu.matmul %285, %293, %cst_135 {dimension_numbers = #tpu.dot_dimension_numbers<[1], [0], [0], [1], [0, 0, 1, 1], [], []>} : vector<2x128xf32>, vector<128x384xf32>, vector<2x384xf32> -> vector<2x384xf32>
    %295 = vector.extract_strided_slice %292 {offsets = [0, 0], sizes = [2, 128], strides = [1, 1]} : vector<2x384xf32> to vector<2x128xf32>
    %296 = vector.extract_strided_slice %294 {offsets = [0, 0], sizes = [2, 128], strides = [1, 1]} : vector<2x384xf32> to vector<2x128xf32>
    %297 = arith.addf %295, %296 : vector<2x128xf32>
    %298 = arith.negf %297 : vector<2x128xf32>
    %299 = math.exp %298 : vector<2x128xf32>
    %cst_136 = arith.constant 1.000000e+00 : f32
    %300 = vector.broadcast %cst_136 : f32 to vector<2x128xf32>
    %301 = arith.addf %300, %299 : vector<2x128xf32>
    %302 = arith.divf %300, %301 : vector<2x128xf32>
    %303 = vector.extract_strided_slice %292 {offsets = [0, 128], sizes = [2, 128], strides = [1, 1]} : vector<2x384xf32> to vector<2x128xf32>
    %304 = vector.extract_strided_slice %294 {offsets = [0, 128], sizes = [2, 128], strides = [1, 1]} : vector<2x384xf32> to vector<2x128xf32>
    %305 = arith.addf %303, %304 : vector<2x128xf32>
    %306 = arith.negf %305 : vector<2x128xf32>
    %307 = math.exp %306 : vector<2x128xf32>
    %cst_137 = arith.constant 1.000000e+00 : f32
    %308 = vector.broadcast %cst_137 : f32 to vector<2x128xf32>
    %309 = arith.addf %308, %307 : vector<2x128xf32>
    %310 = arith.divf %308, %309 : vector<2x128xf32>
    %311 = vector.extract_strided_slice %292 {offsets = [0, 256], sizes = [2, 128], strides = [1, 1]} : vector<2x384xf32> to vector<2x128xf32>
    %312 = vector.extract_strided_slice %294 {offsets = [0, 256], sizes = [2, 128], strides = [1, 1]} : vector<2x384xf32> to vector<2x128xf32>
    %313 = arith.addf %312, %72 : vector<2x128xf32>
    %314 = arith.mulf %302, %313 : vector<2x128xf32>
    %315 = arith.addf %311, %314 : vector<2x128xf32>
    %316 = math.tanh %315 : vector<2x128xf32>
    %cst_138 = arith.constant 1.000000e+00 : f32
    %317 = vector.broadcast %cst_138 : f32 to vector<2x128xf32>
    %318 = arith.subf %317, %310 : vector<2x128xf32>
    %319 = arith.mulf %318, %316 : vector<2x128xf32>
    %320 = arith.mulf %310, %285 : vector<2x128xf32>
    %321 = arith.addf %319, %320 : vector<2x128xf32>
    %322 = arith.index_cast %c6_i32 : i32 to index
    %c0_139 = arith.constant 0 : index
    %c0_140 = arith.constant 0 : index
    %323 = vector.load %arg7[%322, %c0_139, %c0_140] : memref<8x2x128xf32, #tpu.memory_space<vmem>>, vector<1x2x128xf32>
    %324 = vector.shape_cast %323 : vector<1x2x128xf32> to vector<2x128xf32>
    %325 = vector.shape_cast %321 : vector<2x128xf32> to vector<1x2x128xf32>
    tpu.vector_store %arg7[%322, %c0_139, %c0_140], %325 {strides = array<i32>} : memref<8x2x128xf32, #tpu.memory_space<vmem>>, vector<1x2x128xf32>,
    %c7_i32 = arith.constant 7 : i32
    %326 = arith.index_cast %c7_i32 : i32 to index
    %c0_141 = arith.constant 0 : index
    %c0_142 = arith.constant 0 : index
    %327 = vector.load %arg9[%326, %c0_141, %c0_142] : memref<8x2x384xf32, #tpu.memory_space<vmem>>, vector<1x2x384xf32>
    %328 = vector.shape_cast %327 : vector<1x2x384xf32> to vector<2x384xf32>
    %c0_143 = arith.constant 0 : index
    %c0_144 = arith.constant 0 : index
    %329 = vector.load %arg4[%c0_143, %c0_144] : memref<128x384xf32, #tpu.memory_space<vmem>>, vector<128x384xf32>
    %cst_145 = arith.constant dense<0.000000e+00> : vector<2x384xf32>
    %330 = tpu.matmul %321, %329, %cst_145 {dimension_numbers = #tpu.dot_dimension_numbers<[1], [0], [0], [1], [0, 0, 1, 1], [], []>} : vector<2x128xf32>, vector<128x384xf32>, vector<2x384xf32> -> vector<2x384xf32>
    %331 = vector.extract_strided_slice %328 {offsets = [0, 0], sizes = [2, 128], strides = [1, 1]} : vector<2x384xf32> to vector<2x128xf32>
    %332 = vector.extract_strided_slice %330 {offsets = [0, 0], sizes = [2, 128], strides = [1, 1]} : vector<2x384xf32> to vector<2x128xf32>
    %333 = arith.addf %331, %332 : vector<2x128xf32>
    %334 = arith.negf %333 : vector<2x128xf32>
    %335 = math.exp %334 : vector<2x128xf32>
    %cst_146 = arith.constant 1.000000e+00 : f32
    %336 = vector.broadcast %cst_146 : f32 to vector<2x128xf32>
    %337 = arith.addf %336, %335 : vector<2x128xf32>
    %338 = arith.divf %336, %337 : vector<2x128xf32>
    %339 = vector.extract_strided_slice %328 {offsets = [0, 128], sizes = [2, 128], strides = [1, 1]} : vector<2x384xf32> to vector<2x128xf32>
    %340 = vector.extract_strided_slice %330 {offsets = [0, 128], sizes = [2, 128], strides = [1, 1]} : vector<2x384xf32> to vector<2x128xf32>
    %341 = arith.addf %339, %340 : vector<2x128xf32>
    %342 = arith.negf %341 : vector<2x128xf32>
    %343 = math.exp %342 : vector<2x128xf32>
    %cst_147 = arith.constant 1.000000e+00 : f32
    %344 = vector.broadcast %cst_147 : f32 to vector<2x128xf32>
    %345 = arith.addf %344, %343 : vector<2x128xf32>
    %346 = arith.divf %344, %345 : vector<2x128xf32>
    %347 = vector.extract_strided_slice %328 {offsets = [0, 256], sizes = [2, 128], strides = [1, 1]} : vector<2x384xf32> to vector<2x128xf32>
    %348 = vector.extract_strided_slice %330 {offsets = [0, 256], sizes = [2, 128], strides = [1, 1]} : vector<2x384xf32> to vector<2x128xf32>
    %349 = arith.addf %348, %72 : vector<2x128xf32>
    %350 = arith.mulf %338, %349 : vector<2x128xf32>
    %351 = arith.addf %347, %350 : vector<2x128xf32>
    %352 = math.tanh %351 : vector<2x128xf32>
    %cst_148 = arith.constant 1.000000e+00 : f32
    %353 = vector.broadcast %cst_148 : f32 to vector<2x128xf32>
    %354 = arith.subf %353, %346 : vector<2x128xf32>
    %355 = arith.mulf %354, %352 : vector<2x128xf32>
    %356 = arith.mulf %346, %321 : vector<2x128xf32>
    %357 = arith.addf %355, %356 : vector<2x128xf32>
    %358 = arith.index_cast %c7_i32 : i32 to index
    %c0_149 = arith.constant 0 : index
    %c0_150 = arith.constant 0 : index
    %359 = vector.load %arg7[%358, %c0_149, %c0_150] : memref<8x2x128xf32, #tpu.memory_space<vmem>>, vector<1x2x128xf32>
    %360 = vector.shape_cast %359 : vector<1x2x128xf32> to vector<2x128xf32>
    %361 = vector.shape_cast %357 : vector<2x128xf32> to vector<1x2x128xf32>
    tpu.vector_store %arg7[%358, %c0_149, %c0_150], %361 {strides = array<i32>} : memref<8x2x128xf32, #tpu.memory_space<vmem>>, vector<1x2x128xf32>,
    %c8_i32 = arith.constant 8 : i32
    %c0_151 = arith.constant 0 : index
    %c0_152 = arith.constant 0 : index
    %362 = vector.load %arg8[%c0_151, %c0_152] : memref<2x128xf32, #tpu.memory_space<vmem>>, vector<2x128xf32>
    tpu.vector_store %arg8[%c0_151, %c0_152], %357 {strides = array<i32>} : memref<2x128xf32, #tpu.memory_space<vmem>>, vector<2x128xf32>,
    return
  }
  func.func @transform_0(%arg0: i32, %arg1: i32) -> (i32, i32, i32) {
    %c0_i32 = arith.constant 0 : i32
    %c0_i32_0 = arith.constant 0 : i32
    return %arg1, %arg0, %c0_i32 : i32, i32, i32
  }
  func.func @transform_1(%arg0: i32, %arg1: i32) -> (i32, i32) {
    %c0_i32 = arith.constant 0 : i32
    %c0_i32_0 = arith.constant 0 : i32
    %c0_i32_1 = arith.constant 0 : i32
    return %c0_i32, %c0_i32_0 : i32, i32
  }
  func.func @transform_2(%arg0: i32, %arg1: i32) -> (i32, i32) {
    %c0_i32 = arith.constant 0 : i32
    %c0_i32_0 = arith.constant 0 : i32
    %c0_i32_1 = arith.constant 0 : i32
    return %c0_i32, %c0_i32_0 : i32, i32
  }
  func.func @transform_3(%arg0: i32, %arg1: i32) -> (i32, i32) {
    %c0_i32 = arith.constant 0 : i32
    %c0_i32_0 = arith.constant 0 : i32
    %c0_i32_1 = arith.constant 0 : i32
    return %c0_i32, %c0_i32_0 : i32, i32
  }
  func.func @transform_4(%arg0: i32, %arg1: i32) -> (i32, i32) {
    %c0_i32 = arith.constant 0 : i32
    %c0_i32_0 = arith.constant 0 : i32
    %c0_i32_1 = arith.constant 0 : i32
    return %c0_i32, %c0_i32_0 : i32, i32
  }
  func.func @transform_5(%arg0: i32, %arg1: i32) -> (i32, i32, i32) {
    %c0_i32 = arith.constant 0 : i32
    %c0_i32_0 = arith.constant 0 : i32
    return %arg1, %arg0, %c0_i32 : i32, i32, i32
  }
}

</mosaic_0001>

<llo_original>
// kernel: tpu_custom_call.1
$region0: #{tpu_custom_call.1}
  #allocation0 [shape = 'u32[]', space=smem, size = 0x4, offset = 0x4, fixed_abs, tag = 'smem constant byte address 0x4 - core index']
  #allocation1 [shape = 'u32[144,128]{1,0:T(1,128)}', space=vmem, size = 0x12000, scoped, tag = 'internal scratch']
  #allocation2 [shape = 'f32[2,128]{1,0:T(2,128)}', space=vmem, size = 0x400, scoped, tag = 'scratch operand']
  #allocation3 [shape = 'f32[8,2,384]{2,1,0:T(2,128)}', space=vmem, size = 0x6000, scoped, tag = 'scratch operand']
  %s0 = inlined_call_operand.hbm [shape: f32[16,2,32], index: 0, kind: input, shape index: {}]
  %s1 = inlined_call_operand.hbm [shape: f32[32,384], index: 1, kind: input, shape index: {}]
  %s2 = inlined_call_operand.hbm [shape: f32[128,384], index: 2, kind: input, shape index: {}]
  %s3 = inlined_call_operand.vmem [shape: f32[1,384], index: 3, kind: input, shape index: {}]
  %s4 = inlined_call_operand.vmem [shape: f32[1,128], index: 4, kind: input, shape index: {}]
  %s5 = inlined_call_operand.hbm [shape: f32[16,2,128], index: 5, kind: output, shape index: {}]
  %s6 = sld [smem:[#allocation0]]
  $region69: #{tpu_custom_call.1} parent=0
    _
  %s8 = ssub.s32 1, %s6
  %s9 = scalar_select 0, %s8, %s6
  $region1: #{tpu_custom_call.1} parent=0
    #allocation4 [shape = 'u8[16384]{0}', space=vmem, size = 0x4000, scoped, tag = 'input window, operand 0']
    #allocation5 [shape = 's32[2]{0}', space=sflag, size = 0x8, scoped, tag = 'scoped memory for tpu_custom_call.1']
    #allocation6 [shape = 's32[2]{0}', space=sflag, size = 0x8, scoped, tag = 'scoped memory for tpu_custom_call.1']
    #allocation7 [shape = 'u8[49152]{0}', space=vmem, size = 0xc000, scoped, tag = 'input window, operand 1, single buffered']
    #allocation8 [shape = 's32[1]{0}', space=sflag, size = 0x4, scoped, tag = 'scoped memory for tpu_custom_call.1']
    #allocation9 [shape = 'u8[196608]{0}', space=vmem, size = 0x30000, scoped, tag = 'input window, operand 2, single buffered']
    #allocation10 [shape = 'u8[16384]{0}', space=vmem, size = 0x4000, scoped, tag = 'output window, operand 0']
    %10 = vsyncpa [#allocation5], 0
    %s11 = scalar_lea.sflag [#allocation5], 1
    %12 = vsyncpa %s11, 0
    %13 = vsyncpa [#allocation8], 0
    %14 = vsyncpa [#allocation6], 0
    %s15 = scalar_lea.sflag [#allocation6], 1
    %16 = vsyncpa %s15, 0
    loop: start=0, step=1, limit=4
    $region2: #{tpu_custom_call.1} parent=1 // loop_pre_header
      _
    $region3: #{tpu_custom_call.1} parent=1 // loop_header
      %s18 = sphi 0, %s22
      %p19 = scmp.ge.s32.totalorder %s18, 4
      %s25 = sphi 0, %s37
      %s26 = sphi 0, %s33
      %s27 = sphi 0, %s25
      %s28 = sphi 0, %s26
      %s29 = sphi 0, %s27
      %s30 = sphi 0, %s28
      %s42 = sphi 0, %s44
      %s45 = sphi 0, %s42
      %s46 = sphi 0, %s45
      %s62 = sphi 0, %s46
      %s66 = sphi 0, %s66
      %s68 = sphi 0, %s66
      %s69 = sphi 0, %s68
      %s83 = sphi 0, %s69
      %s87 = sphi 0, %s87
      %s89 = sphi 0, %s87
      %s90 = sphi 0, %s89
      %s104 = sphi 0, %s90
      %s108 = sphi 0, %s108
      %s110 = sphi 0, %s108
      %s111 = sphi 0, %s110
      %s125 = sphi 0, %s111
      %s129 = sphi 0, %s129
      %s131 = sphi 0, %s129
      %s132 = sphi 0, %s131
      %s146 = sphi 0, %s132
      %s154 = sphi 0, %s156
      %s157 = sphi 0, %s154
      %s158 = sphi 0, %s157
      %s174 = sphi 0, %s158
    $region4: #{tpu_custom_call.1} parent=1 // loop_header_branch
      %21 = sbr.rel (%p19) target = $region8
    $region5: #{tpu_custom_call.1} parent=1 // loop_body
      %s23 = ssub.s32 %s18, 1
      %s24 = ssub.s32 %s18, 2
      %s31 = sadd.s32 1, %s26
      %p32 = scmp.ge.s32.totalorder %s31, 2
      %s33 = scalar_select %p32, 0, %s31
      %s34 = sadd.s32 1, %s25
      %s35 = scalar_select %p32, %s34, %s25
      %p36 = scmp.ge.s32.totalorder %s35, 1
      %s37 = scalar_select %p36, 0, %s35
      %s38 = ssub.s32 %s26, %s33
      %s39 = ssub.s32 %s25, %s37
      %s40 = sor.u32 %s38, %s39
      %p41 = scmp.eq.s32.totalorder %s40, 0
      %s43 = sadd.s32 %s42, 1
      %s44 = scalar_select %p41, %s42, %s43
      %p47 = pneg %p41
      %p48 = scmp.eq.s32.totalorder %s18, 1
      %p49 = por %p47, %p48
      %p50 = scmp.ne.s32.totalorder %s42, %s45
      %p51 = scmp.eq.s32.totalorder %s18, 0
      %p52 = por %p50, %p51
      %p53 = scmp.ne.s32.totalorder %s42, %s45
      %p54 = scmp.eq.s32.totalorder %s23, 1
      %p55 = por %p53, %p54
      %p56 = scmp.ne.s32.totalorder %s45, %s46
      %p57 = scmp.eq.s32.totalorder %s23, 0
      %p58 = por %p56, %p57
      %p59 = scmp.ne.s32.totalorder %s45, %s46
      %p60 = scmp.eq.s32.totalorder %s24, 1
      %p61 = por %p59, %p60
      %p63 = scmp.ne.s32.totalorder %s46, %s62
      %p64 = scmp.eq.s32.totalorder %s24, 0
      %p65 = por %p63, %p64
      %s67 = sadd.s32 %s66, 1
      %p70 = scmp.eq.s32.totalorder %s18, 1
      %p71 = scmp.ne.s32.totalorder %s66, %s68
      %p72 = scmp.eq.s32.totalorder %s18, 0
      %p73 = por %p71, %p72
      %p74 = scmp.ne.s32.totalorder %s66, %s68
      %p75 = scmp.eq.s32.totalorder %s23, 1
      %p76 = por %p74, %p75
      %p77 = scmp.ne.s32.totalorder %s68, %s69
      %p78 = scmp.eq.s32.totalorder %s23, 0
      %p79 = por %p77, %p78
      %p80 = scmp.ne.s32.totalorder %s68, %s69
      %p81 = scmp.eq.s32.totalorder %s24, 1
      %p82 = por %p80, %p81
      %p84 = scmp.ne.s32.totalorder %s69, %s83
      %p85 = scmp.eq.s32.totalorder %s24, 0
      %p86 = por %p84, %p85
      %s88 = sadd.s32 %s87, 1
      %p91 = scmp.eq.s32.totalorder %s18, 1
      %p92 = scmp.ne.s32.totalorder %s87, %s89
      %p93 = scmp.eq.s32.totalorder %s18, 0
      %p94 = por %p92, %p93
      %p95 = scmp.ne.s32.totalorder %s87, %s89
      %p96 = scmp.eq.s32.totalorder %s23, 1
      %p97 = por %p95, %p96
      %p98 = scmp.ne.s32.totalorder %s89, %s90
      %p99 = scmp.eq.s32.totalorder %s23, 0
      %p100 = por %p98, %p99
      %p101 = scmp.ne.s32.totalorder %s89, %s90
      %p102 = scmp.eq.s32.totalorder %s24, 1
      %p103 = por %p101, %p102
      %p105 = scmp.ne.s32.totalorder %s90, %s104
      %p106 = scmp.eq.s32.totalorder %s24, 0
      %p107 = por %p105, %p106
      %s109 = sadd.s32 %s108, 1
      %p112 = scmp.eq.s32.totalorder %s18, 1
      %p113 = scmp.ne.s32.totalorder %s108, %s110
      %p114 = scmp.eq.s32.totalorder %s18, 0
      %p115 = por %p113, %p114
      %p116 = scmp.ne.s32.totalorder %s108, %s110
      %p117 = scmp.eq.s32.totalorder %s23, 1
      %p118 = por %p116, %p117
      %p119 = scmp.ne.s32.totalorder %s110, %s111
      %p120 = scmp.eq.s32.totalorder %s23, 0
      %p121 = por %p119, %p120
      %p122 = scmp.ne.s32.totalorder %s110, %s111
      %p123 = scmp.eq.s32.totalorder %s24, 1
      %p124 = por %p122, %p123
      %p126 = scmp.ne.s32.totalorder %s111, %s125
      %p127 = scmp.eq.s32.totalorder %s24, 0
      %p128 = por %p126, %p127
      %s130 = sadd.s32 %s129, 1
      %p133 = scmp.eq.s32.totalorder %s18, 1
      %p134 = scmp.ne.s32.totalorder %s129, %s131
      %p135 = scmp.eq.s32.totalorder %s18, 0
      %p136 = por %p134, %p135
      %p137 = scmp.ne.s32.totalorder %s129, %s131
      %p138 = scmp.eq.s32.totalorder %s23, 1
      %p139 = por %p137, %p138
      %p140 = scmp.ne.s32.totalorder %s131, %s132
      %p141 = scmp.eq.s32.totalorder %s23, 0
      %p142 = por %p140, %p141
      %p143 = scmp.ne.s32.totalorder %s131, %s132
      %p144 = scmp.eq.s32.totalorder %s24, 1
      %p145 = por %p143, %p144
      %p147 = scmp.ne.s32.totalorder %s132, %s146
      %p148 = scmp.eq.s32.totalorder %s24, 0
      %p149 = por %p147, %p148
      %s150 = ssub.s32 %s26, %s33
      %s151 = ssub.s32 %s25, %s37
      %s152 = sor.u32 %s150, %s151
      %p153 = scmp.eq.s32.totalorder %s152, 0
      %s155 = sadd.s32 %s154, 1
      %s156 = scalar_select %p153, %s154, %s155
      %p159 = pneg %p153
      %p160 = scmp.eq.s32.totalorder %s18, 1
      %p161 = por %p159, %p160
      %p162 = scmp.ne.s32.totalorder %s154, %s157
      %p163 = scmp.eq.s32.totalorder %s18, 0
      %p164 = por %p162, %p163
      %p165 = scmp.ne.s32.totalorder %s154, %s157
      %p166 = scmp.eq.s32.totalorder %s23, 1
      %p167 = por %p165, %p166
      %p168 = scmp.ne.s32.totalorder %s157, %s158
      %p169 = scmp.eq.s32.totalorder %s23, 0
      %p170 = por %p168, %p169
      %p171 = scmp.ne.s32.totalorder %s157, %s158
      %p172 = scmp.eq.s32.totalorder %s24, 1
      %p173 = por %p171, %p172
      %p175 = scmp.ne.s32.totalorder %s158, %s174
      %p176 = scmp.eq.s32.totalorder %s24, 0
      %p177 = por %p175, %p176
      %p178 = scmp.le.s32.totalorder 1, %s18
      %p179 = scmp.lt.s32.totalorder %s18, 3
      %p180 = pnand %p178, %p179
      %p181 = pneg %p180
      // Predicated region
      $region9: #{tpu_custom_call.1} parent=5 // pred_check
        _
      $region10: #{tpu_custom_call.1} parent=5 // pred_check_branch
        %183 = sbr.rel (%p180) target = $region12
      $region11: #{tpu_custom_call.1} parent=5 // pred_region
        %s184 = ssub.s32 %s18, 1
        // Predicated region
        $region13: #{tpu_custom_call.1} parent=11 // pred_check
          %p185 = pneg %p79
        $region14: #{tpu_custom_call.1} parent=11 // pred_check_branch
          %187 = sbr.rel (%p185) target = $region16
        $region15: #{tpu_custom_call.1} parent=11 // pred_region
          %s189 = ssub.s32 1536, 1536
          %190 = vsyncadd [#allocation8], %s189
          %s191 = sshll.u32 [#allocation7], 4
          %s192 = int_to_ptr.vmem [resolvable:$true] %s191
          %197 = dma.hbm_to_vmem [thread:$0]  %s1, 1536, %s192, [#allocation8], 384, 384, 24
        $region16: #{tpu_custom_call.1} parent=11 // pred_fallthru
          _
        // Predicated region
        $region17: #{tpu_custom_call.1} parent=11 // pred_check
          %p198 = pneg %p100
        $region18: #{tpu_custom_call.1} parent=11 // pred_check_branch
          %200 = sbr.rel (%p198) target = $region20
        $region19: #{tpu_custom_call.1} parent=11 // pred_region
          %s202 = ssub.s32 6144, 6144
          %203 = vsyncadd [#allocation8], %s202
          %s204 = sshll.u32 [#allocation9], 4
          %s205 = int_to_ptr.vmem [resolvable:$true] %s204
          %210 = dma.hbm_to_vmem [thread:$0]  %s2, 6144, %s205, [#allocation8], 384, 384, 24
        $region20: #{tpu_custom_call.1} parent=11 // pred_fallthru
          _
        // Predicated region
        $region21: #{tpu_custom_call.1} parent=11 // pred_check
          %p211 = pneg %p121
        $region22: #{tpu_custom_call.1} parent=11 // pred_check_branch
          %213 = sbr.rel (%p211) target = $region24
        $region23: #{tpu_custom_call.1} parent=11 // pred_region
          _
        $region24: #{tpu_custom_call.1} parent=11 // pred_fallthru
          _
        // Predicated region
        $region25: #{tpu_custom_call.1} parent=11 // pred_check
          %p214 = pneg %p142
        $region26: #{tpu_custom_call.1} parent=11 // pred_check_branch
          %216 = sbr.rel (%p214) target = $region28
        $region27: #{tpu_custom_call.1} parent=11 // pred_region
          _
        $region28: #{tpu_custom_call.1} parent=11 // pred_fallthru
          _
      $region12: #{tpu_custom_call.1} parent=5 // pred_fallthru
        _
      %p217 = scmp.lt.s32.totalorder %s18, 2
      // Predicated region
      $region29: #{tpu_custom_call.1} parent=5 // pred_check
        %p218 = pneg %p217
      $region30: #{tpu_custom_call.1} parent=5 // pred_check_branch
        %220 = sbr.rel (%p218) target = $region32
      $region31: #{tpu_custom_call.1} parent=5 // pred_region
        // Predicated region
        $region33: #{tpu_custom_call.1} parent=31 // pred_check
          %p221 = pneg %p52
        $region34: #{tpu_custom_call.1} parent=31 // pred_check_branch
          %223 = sbr.rel (%p221) target = $region36
        $region35: #{tpu_custom_call.1} parent=31 // pred_region
          %s224 = sand.u32 %s42, 1
          %s225 = scalar_lea.sflag [#allocation5], %s224
          %s226 = sand.u32 %s42, 1
          %s227 = smul.addr %s226, 16
          %s228 = scalar_lea.vmem [#allocation4], %s227
          %s229 = smul.u32 8, %s26
          %s231 = ssub.s32 256, 256
          %232 = vsyncadd %s225, %s231
          %s233 = sadd.s32 %s25, %s229
          %s234 = smul.addr %s233, 32
          %s235 = scalar_lea.hbm %s0, %s234
          %s236 = sshll.u32 %s228, 4
          %s237 = int_to_ptr.vmem [resolvable:$true] %s236
          %242 = dma.hbm_to_vmem [thread:$0]  %s235, 256, %s237, %s225, 32, 32, 2
        $region36: #{tpu_custom_call.1} parent=31 // pred_fallthru
          _
      $region32: #{tpu_custom_call.1} parent=5 // pred_fallthru
        _
      %p243 = scmp.le.s32.totalorder 1, %s18
      %p244 = scmp.lt.s32.totalorder %s18, 3
      %p245 = pnand %p243, %p244
      %p246 = pneg %p245
      // Predicated region
      $region37: #{tpu_custom_call.1} parent=5 // pred_check
        _
      $region38: #{tpu_custom_call.1} parent=5 // pred_check_branch
        %248 = sbr.rel (%p245) target = $region40
      $region39: #{tpu_custom_call.1} parent=5 // pred_region
        %s249 = ssub.s32 %s18, 1
        %s250 = sand.u32 %s45, 1
        %s251 = scalar_lea.sflag [#allocation5], %s250
        %s252 = sand.u32 %s45, 1
        %s253 = smul.addr %s252, 16
        %s254 = scalar_lea.vmem [#allocation4], %s253
        // Predicated region
        $region41: #{tpu_custom_call.1} parent=39 // pred_check
          %p255 = pneg %p58
        $region42: #{tpu_custom_call.1} parent=39 // pred_check_branch
          %257 = sbr.rel (%p255) target = $region44
        $region43: #{tpu_custom_call.1} parent=39 // pred_region
          %258 = dma.done %s251, 256
        $region44: #{tpu_custom_call.1} parent=39 // pred_fallthru
          _
        // Predicated region
        $region45: #{tpu_custom_call.1} parent=39 // pred_check
          %p259 = pneg %p79
        $region46: #{tpu_custom_call.1} parent=39 // pred_check_branch
          %261 = sbr.rel (%p259) target = $region48
        $region47: #{tpu_custom_call.1} parent=39 // pred_region
          %262 = dma.done [#allocation8], 1536
        $region48: #{tpu_custom_call.1} parent=39 // pred_fallthru
          _
        // Predicated region
        $region49: #{tpu_custom_call.1} parent=39 // pred_check
          %p263 = pneg %p100
        $region50: #{tpu_custom_call.1} parent=39 // pred_check_branch
          %265 = sbr.rel (%p263) target = $region52
        $region51: #{tpu_custom_call.1} parent=39 // pred_region
          %266 = dma.done [#allocation8], 6144
        $region52: #{tpu_custom_call.1} parent=39 // pred_fallthru
          _
        %s267 = sand.u32 %s45, 1
        %s268 = scalar_lea.sflag [#allocation5], %s267
        %s269 = sand.u32 %s45, 1
        %s270 = smul.addr %s269, 16
        %s271 = scalar_lea.vmem [#allocation4], %s270
        %p272 = pneg %p58
        %p273 = pneg %p55
        %p274 = pneg %p79
        %p275 = pneg %p76
        %p276 = pneg %p100
        %p277 = pneg %p97
        %p278 = pneg %p121
        %p279 = pneg %p118
        %p280 = pneg %p142
        %p281 = pneg %p139
        %p282 = pneg %p170
        %p283 = pneg %p167
        %s284 = sand.u32 %s157, 1
        %s285 = scalar_lea.sflag [#allocation6], %s284
        %s286 = sand.u32 %s157, 1
        %s287 = smul.addr %s286, 16
        %s288 = scalar_lea.vmem [#allocation10], %s287
        %s289 = smul.u32 8, %s28
        %s290 = smul.u32 8, %s28
        %p291 = scmp.eq.s32.totalorder %s28, 0
        // Predicated region
        $region53: #{tpu_custom_call.1} parent=39 // pred_check
          %p292 = pneg %p291
        $region54: #{tpu_custom_call.1} parent=39 // pred_check_branch
          %294 = sbr.rel (%p292) target = $region56
        $region55: #{tpu_custom_call.1} parent=39 // pred_region
          %295 = vst [vmem:[#allocation2] sm:$0x3] 0.0
        $region56: #{tpu_custom_call.1} parent=39 // pred_fallthru
          _
        %v296 = vld [vmem:[%s3] sm:$0x7]
        %v298 = vlaneseq
        %v299 = vshrl.u32 %v298, 7
        %v300 = vsub.s32 0, %v299
        %v301 = vrot.slane %v296, %v300
        %v302 = vlaneseq
        %v303 = vshrl.u32 %v302, 7
        %v304 = vsub.s32 1, %v303
        %v305 = vrot.slane %v296, %v304
        %v306 = vlaneseq
        %v307 = vshrl.u32 %v306, 7
        %v308 = vsub.s32 2, %v307
        %v309 = vrot.slane %v296, %v308
        %v313 = vld [vmem:[%s254] sm:$0x3]
        %v314 = vld [vmem:[#allocation7] sm:$0xff]
        %v315 = vld [vmem:[#allocation7 + $0x8] sm:$0xff]
        %v316 = vld [vmem:[#allocation7 + $0x10] sm:$0xff]
        %v317 = vld [vmem:[#allocation7 + $0x18] sm:$0xff]
        %v318 = vld [vmem:[#allocation7 + $0x20] sm:$0xff]
        %v319 = vld [vmem:[#allocation7 + $0x28] sm:$0xff]
        %v320 = vld [vmem:[#allocation7 + $0x30] sm:$0xff]
        %v321 = vld [vmem:[#allocation7 + $0x38] sm:$0xff]
        %v322 = vld [vmem:[#allocation7 + $0x40] sm:$0xff]
        %v323 = vld [vmem:[#allocation7 + $0x48] sm:$0xff]
        %v324 = vld [vmem:[#allocation7 + $0x50] sm:$0xff]
        %v325 = vld [vmem:[#allocation7 + $0x58] sm:$0xff]
        %vm326 = vcmask 261120
        %v328 = vsel %vm326, %v313, 0
        %330 = vmatprep.subr.mxu0 %v315
        %331 = vmatpush1.msra.mxu0 %v314
        %332 = vmatprep.subr.mxu0 %v318
        %333 = vmatpush1.msra.mxu0 %v317
        %334 = vmatprep.subr.mxu0 %v321
        %335 = vmatpush1.msra.mxu0 %v320
        %336 = vmatprep.subr.mxu0 %v324
        %337 = vmatpush1.msra.mxu0 %v323
        %338 = vmatprep.subr.mxu0 0.0
        %339 = vmatpush1.msra.mxu0 0.0
        %340 = vmatprep.subr.mxu0 0.0
        %341 = vmatpush1.msra.mxu0 0.0
        %342 = vmatprep.subr.mxu0 0.0
        %343 = vmatpush1.msra.mxu0 0.0
        %344 = vmatprep.subr.mxu0 0.0
        %345 = vmatpush1.msra.mxu0 0.0
        %346 = vmatprep.subr.mxu0 0.0
        %347 = vmatpush1.msra.mxu0 0.0
        %348 = vmatprep.subr.mxu0 0.0
        %349 = vmatpush1.msra.mxu0 0.0
        %350 = vmatprep.subr.mxu0 0.0
        %351 = vmatpush1.msra.mxu0 0.0
        %352 = vmatprep.subr.mxu0 0.0
        %353 = vmatpush1.msra.mxu0 0.0
        %354 = vmatprep.subr.mxu0 0.0
        %355 = vmatpush1.msra.mxu0 0.0
        %356 = vmatprep.subr.mxu0 0.0
        %357 = vmatpush1.msra.mxu0 0.0
        %358 = vmatprep.subr.mxu0 0.0
        %359 = vmatpush1.msra.mxu0 0.0
        %360 = vmatprep.subr.mxu0 0.0
        %361 = vmatpush1.msra.mxu0 0.0
        %362 = vmatprep.subr.mxu0 0.0
        %363 = vmatpush1.msra.mxu0 0.0
        %364 = vmatprep.subr.mxu0 0.0
        %365 = vmatpush1.msra.mxu0 0.0
        %366 = vmatprep.subr.mxu0 0.0
        %367 = vmatpush1.msra.mxu0 0.0
        %368 = vmatprep.subr.mxu0 0.0
        %369 = vmatpush1.msra.mxu0 0.0
        %370 = vmatprep.subr.mxu0 0.0
        %371 = vmatpush1.msra.mxu0 0.0
        %372 = vmatprep.subr.mxu0 0.0
        %373 = vmatpush1.msra.mxu0 0.0
        %374 = vmatprep.subr.mxu0 0.0
        %375 = vmatpush1.msra.mxu0 0.0
        %376 = vmatprep.subr.mxu0 0.0
        %377 = vmatpush1.msra.mxu0 0.0
        %378 = vmatprep.subr.mxu0 0.0
        %379 = vmatpush1.msra.mxu0 0.0
        %380 = vmatprep.subr.mxu0 0.0
        %381 = vmatpush1.msra.mxu0 0.0
        %382 = vmatprep.subr.mxu0 0.0
        %383 = vmatpush1.msra.mxu0 0.0
        %384 = vmatprep.subr.mxu0 0.0
        %385 = vmatpush1.msra.mxu0 0.0
        %386 = vmatprep.subr.mxu0 0.0
        %387 = vmatpush1.msra.mxu0 0.0
        %388 = vmatprep.subr.mxu0 0.0
        %389 = vmatpush1.msra.mxu0 0.0
        %390 = vmatprep.subr.mxu0 0.0
        %391 = vmatpush1.msra.mxu0 0.0
        %392 = vmatprep.subr.mxu0 0.0
        %393 = vmatpush1.msra.mxu0 0.0
        %394 = vmatprep.mubr.f32.mxu0 0.0
        %395 = vmatmul.mubr.f32.gmra.mrb[0].mxu0 %v328
        %v396 = vpop.f32.mrb[0].mxu0
        %v397 = vadd.f32 %v301, %v396
        %v398 = vpop.f32.mrb[0].mxu0
        %v399 = vadd.f32 %v305, %v398
        %400 = vdwg.mxu0
        %401 = vmatprep.subr.mxu0 0.0
        %402 = vmatpush1.msra.mxu0 %v316
        %403 = vmatprep.subr.mxu0 0.0
        %404 = vmatpush1.msra.mxu0 %v319
        %405 = vmatprep.subr.mxu0 0.0
        %406 = vmatpush1.msra.mxu0 %v322
        %407 = vmatprep.subr.mxu0 0.0
        %408 = vmatpush1.msra.mxu0 %v325
        %409 = vmatprep.subr.mxu0 0.0
        %410 = vmatpush1.msra.mxu0 0.0
        %411 = vmatprep.subr.mxu0 0.0
        %412 = vmatpush1.msra.mxu0 0.0
        %413 = vmatprep.subr.mxu0 0.0
        %414 = vmatpush1.msra.mxu0 0.0
        %415 = vmatprep.subr.mxu0 0.0
        %416 = vmatpush1.msra.mxu0 0.0
        %417 = vmatprep.subr.mxu0 0.0
        %418 = vmatpush1.msra.mxu0 0.0
        %419 = vmatprep.subr.mxu0 0.0
        %420 = vmatpush1.msra.mxu0 0.0
        %421 = vmatprep.subr.mxu0 0.0
        %422 = vmatpush1.msra.mxu0 0.0
        %423 = vmatprep.subr.mxu0 0.0
        %424 = vmatpush1.msra.mxu0 0.0
        %425 = vmatprep.subr.mxu0 0.0
        %426 = vmatpush1.msra.mxu0 0.0
        %427 = vmatprep.subr.mxu0 0.0
        %428 = vmatpush1.msra.mxu0 0.0
        %429 = vmatprep.subr.mxu0 0.0
        %430 = vmatpush1.msra.mxu0 0.0
        %431 = vmatprep.subr.mxu0 0.0
        %432 = vmatpush1.msra.mxu0 0.0
        %433 = vmatprep.subr.mxu0 0.0
        %434 = vmatpush1.msra.mxu0 0.0
        %435 = vmatprep.subr.mxu0 0.0
        %436 = vmatpush1.msra.mxu0 0.0
        %437 = vmatprep.subr.mxu0 0.0
        %438 = vmatpush1.msra.mxu0 0.0
        %439 = vmatprep.subr.mxu0 0.0
        %440 = vmatpush1.msra.mxu0 0.0
        %441 = vmatprep.subr.mxu0 0.0
        %442 = vmatpush1.msra.mxu0 0.0
        %443 = vmatprep.subr.mxu0 0.0
        %444 = vmatpush1.msra.mxu0 0.0
        %445 = vmatprep.subr.mxu0 0.0
        %446 = vmatpush1.msra.mxu0 0.0
        %447 = vmatprep.subr.mxu0 0.0
        %448 = vmatpush1.msra.mxu0 0.0
        %449 = vmatprep.subr.mxu0 0.0
        %450 = vmatpush1.msra.mxu0 0.0
        %451 = vmatprep.subr.mxu0 0.0
        %452 = vmatpush1.msra.mxu0 0.0
        %453 = vmatprep.subr.mxu0 0.0
        %454 = vmatpush1.msra.mxu0 0.0
        %455 = vmatprep.subr.mxu0 0.0
        %456 = vmatpush1.msra.mxu0 0.0
        %457 = vmatprep.subr.mxu0 0.0
        %458 = vmatpush1.msra.mxu0 0.0
        %459 = vmatprep.subr.mxu0 0.0
        %460 = vmatpush1.msra.mxu0 0.0
        %461 = vmatprep.subr.mxu0 0.0
        %462 = vmatpush1.msra.mxu0 0.0
        %463 = vmatprep.subr.mxu0 0.0
        %464 = vmatpush1.msra.mxu0 0.0
        %465 = vmatprep.mubr.f32.mxu0 0.0
        %466 = vmatmul.mubr.f32.gmra.mrb[0].mxu0 %v328
        %v467 = vpop.f32.mrb[0].mxu0
        %v468 = vadd.f32 %v309, %v467
        %v469 = vpop.f32.mrb[0].mxu0
        %470 = vdwg.mxu0
        %v474 = vcombine.low %v397, %v399
        %v476 = vunpack.c.l.s4 1983009808
        %v477 = vunpack.c.0.s8 %v476
        %v478 = vlaneseq
        %v479 = vshrl.u32 %v478, 7
        %v480 = vsub.s32 %v477, %v479
        %v481 = vrot.slane %v474, %v480
        %v483 = vunpack.c.l.s4 1983009808
        %v484 = vunpack.c.0.s8 %v483
        %v485 = vlaneseq
        %v486 = vshrl.u32 %v485, 7
        %v487 = vsub.s32 %v484, %v486
        %v488 = vrot.slane %v468, %v487
        %v489 = vcombine.low %v481, %v488
        %491 = vst [vmem:[#allocation3] sm:$0x3f] %v489
        %s492 = scalar_lea.vmem %s254, 2 [#allocation4]
        %v493 = vld [vmem:[%s492] sm:$0x3]
        %v494 = vld [vmem:[#allocation7] sm:$0xff]
        %v495 = vld [vmem:[#allocation7 + $0x8] sm:$0xff]
        %v496 = vld [vmem:[#allocation7 + $0x10] sm:$0xff]
        %v497 = vld [vmem:[#allocation7 + $0x18] sm:$0xff]
        %v498 = vld [vmem:[#allocation7 + $0x20] sm:$0xff]
        %v499 = vld [vmem:[#allocation7 + $0x28] sm:$0xff]
        %v500 = vld [vmem:[#allocation7 + $0x30] sm:$0xff]
        %v501 = vld [vmem:[#allocation7 + $0x38] sm:$0xff]
        %v502 = vld [vmem:[#allocation7 + $0x40] sm:$0xff]
        %v503 = vld [vmem:[#allocation7 + $0x48] sm:$0xff]
        %v504 = vld [vmem:[#allocation7 + $0x50] sm:$0xff]
        %v505 = vld [vmem:[#allocation7 + $0x58] sm:$0xff]
        %v507 = vsel %vm326, %v493, 0
        %509 = vmatprep.subr.mxu0 %v495
        %510 = vmatpush1.msra.mxu0 %v494
        %511 = vmatprep.subr.mxu0 %v498
        %512 = vmatpush1.msra.mxu0 %v497
        %513 = vmatprep.subr.mxu0 %v501
        %514 = vmatpush1.msra.mxu0 %v500
        %515 = vmatprep.subr.mxu0 %v504
        %516 = vmatpush1.msra.mxu0 %v503
        %517 = vmatprep.subr.mxu0 0.0
        %518 = vmatpush1.msra.mxu0 0.0
        %519 = vmatprep.subr.mxu0 0.0
        %520 = vmatpush1.msra.mxu0 0.0
        %521 = vmatprep.subr.mxu0 0.0
        %522 = vmatpush1.msra.mxu0 0.0
        %523 = vmatprep.subr.mxu0 0.0
        %524 = vmatpush1.msra.mxu0 0.0
        %525 = vmatprep.subr.mxu0 0.0
        %526 = vmatpush1.msra.mxu0 0.0
        %527 = vmatprep.subr.mxu0 0.0
        %528 = vmatpush1.msra.mxu0 0.0
        %529 = vmatprep.subr.mxu0 0.0
        %530 = vmatpush1.msra.mxu0 0.0
        %531 = vmatprep.subr.mxu0 0.0
        %532 = vmatpush1.msra.mxu0 0.0
        %533 = vmatprep.subr.mxu0 0.0
        %534 = vmatpush1.msra.mxu0 0.0
        %535 = vmatprep.subr.mxu0 0.0
        %536 = vmatpush1.msra.mxu0 0.0
        %537 = vmatprep.subr.mxu0 0.0
        %538 = vmatpush1.msra.mxu0 0.0
        %539 = vmatprep.subr.mxu0 0.0
        %540 = vmatpush1.msra.mxu0 0.0
        %541 = vmatprep.subr.mxu0 0.0
        %542 = vmatpush1.msra.mxu0 0.0
        %543 = vmatprep.subr.mxu0 0.0
        %544 = vmatpush1.msra.mxu0 0.0
        %545 = vmatprep.subr.mxu0 0.0
        %546 = vmatpush1.msra.mxu0 0.0
        %547 = vmatprep.subr.mxu0 0.0
        %548 = vmatpush1.msra.mxu0 0.0
        %549 = vmatprep.subr.mxu0 0.0
        %550 = vmatpush1.msra.mxu0 0.0
        %551 = vmatprep.subr.mxu0 0.0
        %552 = vmatpush1.msra.mxu0 0.0
        %553 = vmatprep.subr.mxu0 0.0
        %554 = vmatpush1.msra.mxu0 0.0
        %555 = vmatprep.subr.mxu0 0.0
        %556 = vmatpush1.msra.mxu0 0.0
        %557 = vmatprep.subr.mxu0 0.0
        %558 = vmatpush1.msra.mxu0 0.0
        %559 = vmatprep.subr.mxu0 0.0
        %560 = vmatpush1.msra.mxu0 0.0
        %561 = vmatprep.subr.mxu0 0.0
        %562 = vmatpush1.msra.mxu0 0.0
        %563 = vmatprep.subr.mxu0 0.0
        %564 = vmatpush1.msra.mxu0 0.0
        %565 = vmatprep.subr.mxu0 0.0
        %566 = vmatpush1.msra.mxu0 0.0
        %567 = vmatprep.subr.mxu0 0.0
        %568 = vmatpush1.msra.mxu0 0.0
        %569 = vmatprep.subr.mxu0 0.0
        %570 = vmatpush1.msra.mxu0 0.0
        %571 = vmatprep.subr.mxu0 0.0
        %572 = vmatpush1.msra.mxu0 0.0
        %573 = vmatprep.mubr.f32.mxu0 0.0
        %574 = vmatmul.mubr.f32.gmra.mrb[0].mxu0 %v507
        %v575 = vpop.f32.mrb[0].mxu0
        %v576 = vadd.f32 %v301, %v575
        %v577 = vpop.f32.mrb[0].mxu0
        %v578 = vadd.f32 %v305, %v577
        %579 = vdwg.mxu0
        %580 = vmatprep.subr.mxu0 0.0
        %581 = vmatpush1.msra.mxu0 %v496
        %582 = vmatprep.subr.mxu0 0.0
        %583 = vmatpush1.msra.mxu0 %v499
        %584 = vmatprep.subr.mxu0 0.0
        %585 = vmatpush1.msra.mxu0 %v502
        %586 = vmatprep.subr.mxu0 0.0
        %587 = vmatpush1.msra.mxu0 %v505
        %588 = vmatprep.subr.mxu0 0.0
        %589 = vmatpush1.msra.mxu0 0.0
        %590 = vmatprep.subr.mxu0 0.0
        %591 = vmatpush1.msra.mxu0 0.0
        %592 = vmatprep.subr.mxu0 0.0
        %593 = vmatpush1.msra.mxu0 0.0
        %594 = vmatprep.subr.mxu0 0.0
        %595 = vmatpush1.msra.mxu0 0.0
        %596 = vmatprep.subr.mxu0 0.0
        %597 = vmatpush1.msra.mxu0 0.0
        %598 = vmatprep.subr.mxu0 0.0
        %599 = vmatpush1.msra.mxu0 0.0
        %600 = vmatprep.subr.mxu0 0.0
        %601 = vmatpush1.msra.mxu0 0.0
        %602 = vmatprep.subr.mxu0 0.0
        %603 = vmatpush1.msra.mxu0 0.0
        %604 = vmatprep.subr.mxu0 0.0
        %605 = vmatpush1.msra.mxu0 0.0
        %606 = vmatprep.subr.mxu0 0.0
        %607 = vmatpush1.msra.mxu0 0.0
        %608 = vmatprep.subr.mxu0 0.0
        %609 = vmatpush1.msra.mxu0 0.0
        %610 = vmatprep.subr.mxu0 0.0
        %611 = vmatpush1.msra.mxu0 0.0
        %612 = vmatprep.subr.mxu0 0.0
        %613 = vmatpush1.msra.mxu0 0.0
        %614 = vmatprep.subr.mxu0 0.0
        %615 = vmatpush1.msra.mxu0 0.0
        %616 = vmatprep.subr.mxu0 0.0
        %617 = vmatpush1.msra.mxu0 0.0
        %618 = vmatprep.subr.mxu0 0.0
        %619 = vmatpush1.msra.mxu0 0.0
        %620 = vmatprep.subr.mxu0 0.0
        %621 = vmatpush1.msra.mxu0 0.0
        %622 = vmatprep.subr.mxu0 0.0
        %623 = vmatpush1.msra.mxu0 0.0
        %624 = vmatprep.subr.mxu0 0.0
        %625 = vmatpush1.msra.mxu0 0.0
        %626 = vmatprep.subr.mxu0 0.0
        %627 = vmatpush1.msra.mxu0 0.0
        %628 = vmatprep.subr.mxu0 0.0
        %629 = vmatpush1.msra.mxu0 0.0
        %630 = vmatprep.subr.mxu0 0.0
        %631 = vmatpush1.msra.mxu0 0.0
        %632 = vmatprep.subr.mxu0 0.0
        %633 = vmatpush1.msra.mxu0 0.0
        %634 = vmatprep.subr.mxu0 0.0
        %635 = vmatpush1.msra.mxu0 0.0
        %636 = vmatprep.subr.mxu0 0.0
        %637 = vmatpush1.msra.mxu0 0.0
        %638 = vmatprep.subr.mxu0 0.0
        %639 = vmatpush1.msra.mxu0 0.0
        %640 = vmatprep.subr.mxu0 0.0
        %641 = vmatpush1.msra.mxu0 0.0
        %642 = vmatprep.subr.mxu0 0.0
        %643 = vmatpush1.msra.mxu0 0.0
        %644 = vmatprep.mubr.f32.mxu0 0.0
        %645 = vmatmul.mubr.f32.gmra.mrb[0].mxu0 %v507
        %v646 = vpop.f32.mrb[0].mxu0
        %v647 = vadd.f32 %v309, %v646
        %v648 = vpop.f32.mrb[0].mxu0
        %649 = vdwg.mxu0
        %v653 = vcombine.low %v576, %v578
        %v655 = vunpack.c.l.s4 1983009808
        %v656 = vunpack.c.0.s8 %v655
        %v657 = vlaneseq
        %v658 = vshrl.u32 %v657, 7
        %v659 = vsub.s32 %v656, %v658
        %v660 = vrot.slane %v653, %v659
        %v662 = vunpack.c.l.s4 1983009808
        %v663 = vunpack.c.0.s8 %v662
        %v664 = vlaneseq
        %v665 = vshrl.u32 %v664, 7
        %v666 = vsub.s32 %v663, %v665
        %v667 = vrot.slane %v647, %v666
        %v668 = vcombine.low %v660, %v667
        %s670 = scalar_lea.vmem [#allocation3], 6
        %671 = vst [vmem:[%s670] sm:$0x3f] %v668
        %s672 = scalar_lea.vmem %s254, 4 [#allocation4]
        %v673 = vld [vmem:[%s672] sm:$0x3]
        %v674 = vld [vmem:[#allocation7] sm:$0xff]
        %v675 = vld [vmem:[#allocation7 + $0x8] sm:$0xff]
        %v676 = vld [vmem:[#allocation7 + $0x10] sm:$0xff]
        %v677 = vld [vmem:[#allocation7 + $0x18] sm:$0xff]
        %v678 = vld [vmem:[#allocation7 + $0x20] sm:$0xff]
        %v679 = vld [vmem:[#allocation7 + $0x28] sm:$0xff]
        %v680 = vld [vmem:[#allocation7 + $0x30] sm:$0xff]
        %v681 = vld [vmem:[#allocation7 + $0x38] sm:$0xff]
        %v682 = vld [vmem:[#allocation7 + $0x40] sm:$0xff]
        %v683 = vld [vmem:[#allocation7 + $0x48] sm:$0xff]
        %v684 = vld [vmem:[#allocation7 + $0x50] sm:$0xff]
        %v685 = vld [vmem:[#allocation7 + $0x58] sm:$0xff]
        %v687 = vsel %vm326, %v673, 0
        %689 = vmatprep.subr.mxu0 %v675
        %690 = vmatpush1.msra.mxu0 %v674
        %691 = vmatprep.subr.mxu0 %v678
        %692 = vmatpush1.msra.mxu0 %v677
        %693 = vmatprep.subr.mxu0 %v681
        %694 = vmatpush1.msra.mxu0 %v680
        %695 = vmatprep.subr.mxu0 %v684
        %696 = vmatpush1.msra.mxu0 %v683
        %697 = vmatprep.subr.mxu0 0.0
        %698 = vmatpush1.msra.mxu0 0.0
        %699 = vmatprep.subr.mxu0 0.0
        %700 = vmatpush1.msra.mxu0 0.0
        %701 = vmatprep.subr.mxu0 0.0
        %702 = vmatpush1.msra.mxu0 0.0
        %703 = vmatprep.subr.mxu0 0.0
        %704 = vmatpush1.msra.mxu0 0.0
        %705 = vmatprep.subr.mxu0 0.0
        %706 = vmatpush1.msra.mxu0 0.0
        %707 = vmatprep.subr.mxu0 0.0
        %708 = vmatpush1.msra.mxu0 0.0
        %709 = vmatprep.subr.mxu0 0.0
        %710 = vmatpush1.msra.mxu0 0.0
        %711 = vmatprep.subr.mxu0 0.0
        %712 = vmatpush1.msra.mxu0 0.0
        %713 = vmatprep.subr.mxu0 0.0
        %714 = vmatpush1.msra.mxu0 0.0
        %715 = vmatprep.subr.mxu0 0.0
        %716 = vmatpush1.msra.mxu0 0.0
        %717 = vmatprep.subr.mxu0 0.0
        %718 = vmatpush1.msra.mxu0 0.0
        %719 = vmatprep.subr.mxu0 0.0
        %720 = vmatpush1.msra.mxu0 0.0
        %721 = vmatprep.subr.mxu0 0.0
        %722 = vmatpush1.msra.mxu0 0.0
        %723 = vmatprep.subr.mxu0 0.0
        %724 = vmatpush1.msra.mxu0 0.0
        %725 = vmatprep.subr.mxu0 0.0
        %726 = vmatpush1.msra.mxu0 0.0
        %727 = vmatprep.subr.mxu0 0.0
        %728 = vmatpush1.msra.mxu0 0.0
        %729 = vmatprep.subr.mxu0 0.0
        %730 = vmatpush1.msra.mxu0 0.0
        %731 = vmatprep.subr.mxu0 0.0
        %732 = vmatpush1.msra.mxu0 0.0
        %733 = vmatprep.subr.mxu0 0.0
        %734 = vmatpush1.msra.mxu0 0.0
        %735 = vmatprep.subr.mxu0 0.0
        %736 = vmatpush1.msra.mxu0 0.0
        %737 = vmatprep.subr.mxu0 0.0
        %738 = vmatpush1.msra.mxu0 0.0
        %739 = vmatprep.subr.mxu0 0.0
        %740 = vmatpush1.msra.mxu0 0.0
        %741 = vmatprep.subr.mxu0 0.0
        %742 = vmatpush1.msra.mxu0 0.0
        %743 = vmatprep.subr.mxu0 0.0
        %744 = vmatpush1.msra.mxu0 0.0
        %745 = vmatprep.subr.mxu0 0.0
        %746 = vmatpush1.msra.mxu0 0.0
        %747 = vmatprep.subr.mxu0 0.0
        %748 = vmatpush1.msra.mxu0 0.0
        %749 = vmatprep.subr.mxu0 0.0
        %750 = vmatpush1.msra.mxu0 0.0
        %751 = vmatprep.subr.mxu0 0.0
        %752 = vmatpush1.msra.mxu0 0.0
        %753 = vmatprep.mubr.f32.mxu0 0.0
        %754 = vmatmul.mubr.f32.gmra.mrb[0].mxu0 %v687
        %v755 = vpop.f32.mrb[0].mxu0
        %v756 = vadd.f32 %v301, %v755
        %v757 = vpop.f32.mrb[0].mxu0
        %v758 = vadd.f32 %v305, %v757
        %759 = vdwg.mxu0
        %760 = vmatprep.subr.mxu0 0.0
        %761 = vmatpush1.msra.mxu0 %v676
        %762 = vmatprep.subr.mxu0 0.0
        %763 = vmatpush1.msra.mxu0 %v679
        %764 = vmatprep.subr.mxu0 0.0
        %765 = vmatpush1.msra.mxu0 %v682
        %766 = vmatprep.subr.mxu0 0.0
        %767 = vmatpush1.msra.mxu0 %v685
        %768 = vmatprep.subr.mxu0 0.0
        %769 = vmatpush1.msra.mxu0 0.0
        %770 = vmatprep.subr.mxu0 0.0
        %771 = vmatpush1.msra.mxu0 0.0
        %772 = vmatprep.subr.mxu0 0.0
        %773 = vmatpush1.msra.mxu0 0.0
        %774 = vmatprep.subr.mxu0 0.0
        %775 = vmatpush1.msra.mxu0 0.0
        %776 = vmatprep.subr.mxu0 0.0
        %777 = vmatpush1.msra.mxu0 0.0
        %778 = vmatprep.subr.mxu0 0.0
        %779 = vmatpush1.msra.mxu0 0.0
        %780 = vmatprep.subr.mxu0 0.0
        %781 = vmatpush1.msra.mxu0 0.0
        %782 = vmatprep.subr.mxu0 0.0
        %783 = vmatpush1.msra.mxu0 0.0
        %784 = vmatprep.subr.mxu0 0.0
        %785 = vmatpush1.msra.mxu0 0.0
        %786 = vmatprep.subr.mxu0 0.0
        %787 = vmatpush1.msra.mxu0 0.0
        %788 = vmatprep.subr.mxu0 0.0
        %789 = vmatpush1.msra.mxu0 0.0
        %790 = vmatprep.subr.mxu0 0.0
        %791 = vmatpush1.msra.mxu0 0.0
        %792 = vmatprep.subr.mxu0 0.0
        %793 = vmatpush1.msra.mxu0 0.0
        %794 = vmatprep.subr.mxu0 0.0
        %795 = vmatpush1.msra.mxu0 0.0
        %796 = vmatprep.subr.mxu0 0.0
        %797 = vmatpush1.msra.mxu0 0.0
        %798 = vmatprep.subr.mxu0 0.0
        %799 = vmatpush1.msra.mxu0 0.0
        %800 = vmatprep.subr.mxu0 0.0
        %801 = vmatpush1.msra.mxu0 0.0
        %802 = vmatprep.subr.mxu0 0.0
        %803 = vmatpush1.msra.mxu0 0.0
        %804 = vmatprep.subr.mxu0 0.0
        %805 = vmatpush1.msra.mxu0 0.0
        %806 = vmatprep.subr.mxu0 0.0
        %807 = vmatpush1.msra.mxu0 0.0
        %808 = vmatprep.subr.mxu0 0.0
        %809 = vmatpush1.msra.mxu0 0.0
        %810 = vmatprep.subr.mxu0 0.0
        %811 = vmatpush1.msra.mxu0 0.0
        %812 = vmatprep.subr.mxu0 0.0
        %813 = vmatpush1.msra.mxu0 0.0
        %814 = vmatprep.subr.mxu0 0.0
        %815 = vmatpush1.msra.mxu0 0.0
        %816 = vmatprep.subr.mxu0 0.0
        %817 = vmatpush1.msra.mxu0 0.0
        %818 = vmatprep.subr.mxu0 0.0
        %819 = vmatpush1.msra.mxu0 0.0
        %820 = vmatprep.subr.mxu0 0.0
        %821 = vmatpush1.msra.mxu0 0.0
        %822 = vmatprep.subr.mxu0 0.0
        %823 = vmatpush1.msra.mxu0 0.0
        %824 = vmatprep.mubr.f32.mxu0 0.0
        %825 = vmatmul.mubr.f32.gmra.mrb[0].mxu0 %v687
        %v826 = vpop.f32.mrb[0].mxu0
        %v827 = vadd.f32 %v309, %v826
        %v828 = vpop.f32.mrb[0].mxu0
        %829 = vdwg.mxu0
        %v833 = vcombine.low %v756, %v758
        %v835 = vunpack.c.l.s4 1983009808
        %v836 = vunpack.c.0.s8 %v835
        %v837 = vlaneseq
        %v838 = vshrl.u32 %v837, 7
        %v839 = vsub.s32 %v836, %v838
        %v840 = vrot.slane %v833, %v839
        %v842 = vunpack.c.l.s4 1983009808
        %v843 = vunpack.c.0.s8 %v842
        %v844 = vlaneseq
        %v845 = vshrl.u32 %v844, 7
        %v846 = vsub.s32 %v843, %v845
        %v847 = vrot.slane %v827, %v846
        %v848 = vcombine.low %v840, %v847
        %s850 = scalar_lea.vmem [#allocation3], 12
        %851 = vst [vmem:[%s850] sm:$0x3f] %v848
        %s852 = scalar_lea.vmem %s254, 6 [#allocation4]
        %v853 = vld [vmem:[%s852] sm:$0x3]
        %v854 = vld [vmem:[#allocation7] sm:$0xff]
        %v855 = vld [vmem:[#allocation7 + $0x8] sm:$0xff]
        %v856 = vld [vmem:[#allocation7 + $0x10] sm:$0xff]
        %v857 = vld [vmem:[#allocation7 + $0x18] sm:$0xff]
        %v858 = vld [vmem:[#allocation7 + $0x20] sm:$0xff]
        %v859 = vld [vmem:[#allocation7 + $0x28] sm:$0xff]
        %v860 = vld [vmem:[#allocation7 + $0x30] sm:$0xff]
        %v861 = vld [vmem:[#allocation7 + $0x38] sm:$0xff]
        %v862 = vld [vmem:[#allocation7 + $0x40] sm:$0xff]
        %v863 = vld [vmem:[#allocation7 + $0x48] sm:$0xff]
        %v864 = vld [vmem:[#allocation7 + $0x50] sm:$0xff]
        %v865 = vld [vmem:[#allocation7 + $0x58] sm:$0xff]
        %v867 = vsel %vm326, %v853, 0
        %869 = vmatprep.subr.mxu0 %v855
        %870 = vmatpush1.msra.mxu0 %v854
        %871 = vmatprep.subr.mxu0 %v858
        %872 = vmatpush1.msra.mxu0 %v857
        %873 = vmatprep.subr.mxu0 %v861
        %874 = vmatpush1.msra.mxu0 %v860
        %875 = vmatprep.subr.mxu0 %v864
        %876 = vmatpush1.msra.mxu0 %v863
        %877 = vmatprep.subr.mxu0 0.0
        %878 = vmatpush1.msra.mxu0 0.0
        %879 = vmatprep.subr.mxu0 0.0
        %880 = vmatpush1.msra.mxu0 0.0
        %881 = vmatprep.subr.mxu0 0.0
        %882 = vmatpush1.msra.mxu0 0.0
        %883 = vmatprep.subr.mxu0 0.0
        %884 = vmatpush1.msra.mxu0 0.0
        %885 = vmatprep.subr.mxu0 0.0
        %886 = vmatpush1.msra.mxu0 0.0
        %887 = vmatprep.subr.mxu0 0.0
        %888 = vmatpush1.msra.mxu0 0.0
        %889 = vmatprep.subr.mxu0 0.0
        %890 = vmatpush1.msra.mxu0 0.0
        %891 = vmatprep.subr.mxu0 0.0
        %892 = vmatpush1.msra.mxu0 0.0
        %893 = vmatprep.subr.mxu0 0.0
        %894 = vmatpush1.msra.mxu0 0.0
        %895 = vmatprep.subr.mxu0 0.0
        %896 = vmatpush1.msra.mxu0 0.0
        %897 = vmatprep.subr.mxu0 0.0
        %898 = vmatpush1.msra.mxu0 0.0
        %899 = vmatprep.subr.mxu0 0.0
        %900 = vmatpush1.msra.mxu0 0.0
        %901 = vmatprep.subr.mxu0 0.0
        %902 = vmatpush1.msra.mxu0 0.0
        %903 = vmatprep.subr.mxu0 0.0
        %904 = vmatpush1.msra.mxu0 0.0
        %905 = vmatprep.subr.mxu0 0.0
        %906 = vmatpush1.msra.mxu0 0.0
        %907 = vmatprep.subr.mxu0 0.0
        %908 = vmatpush1.msra.mxu0 0.0
        %909 = vmatprep.subr.mxu0 0.0
        %910 = vmatpush1.msra.mxu0 0.0
        %911 = vmatprep.subr.mxu0 0.0
        %912 = vmatpush1.msra.mxu0 0.0
        %913 = vmatprep.subr.mxu0 0.0
        %914 = vmatpush1.msra.mxu0 0.0
        %915 = vmatprep.subr.mxu0 0.0
        %916 = vmatpush1.msra.mxu0 0.0
        %917 = vmatprep.subr.mxu0 0.0
        %918 = vmatpush1.msra.mxu0 0.0
        %919 = vmatprep.subr.mxu0 0.0
        %920 = vmatpush1.msra.mxu0 0.0
        %921 = vmatprep.subr.mxu0 0.0
        %922 = vmatpush1.msra.mxu0 0.0
        %923 = vmatprep.subr.mxu0 0.0
        %924 = vmatpush1.msra.mxu0 0.0
        %925 = vmatprep.subr.mxu0 0.0
        %926 = vmatpush1.msra.mxu0 0.0
        %927 = vmatprep.subr.mxu0 0.0
        %928 = vmatpush1.msra.mxu0 0.0
        %929 = vmatprep.subr.mxu0 0.0
        %930 = vmatpush1.msra.mxu0 0.0
        %931 = vmatprep.subr.mxu0 0.0
        %932 = vmatpush1.msra.mxu0 0.0
        %933 = vmatprep.mubr.f32.mxu0 0.0
        %934 = vmatmul.mubr.f32.gmra.mrb[0].mxu0 %v867
        %v935 = vpop.f32.mrb[0].mxu0
        %v936 = vadd.f32 %v301, %v935
        %v937 = vpop.f32.mrb[0].mxu0
        %v938 = vadd.f32 %v305, %v937
        %939 = vdwg.mxu0
        %940 = vmatprep.subr.mxu0 0.0
        %941 = vmatpush1.msra.mxu0 %v856
        %942 = vmatprep.subr.mxu0 0.0
        %943 = vmatpush1.msra.mxu0 %v859
        %944 = vmatprep.subr.mxu0 0.0
        %945 = vmatpush1.msra.mxu0 %v862
        %946 = vmatprep.subr.mxu0 0.0
        %947 = vmatpush1.msra.mxu0 %v865
        %948 = vmatprep.subr.mxu0 0.0
        %949 = vmatpush1.msra.mxu0 0.0
        %950 = vmatprep.subr.mxu0 0.0
        %951 = vmatpush1.msra.mxu0 0.0
        %952 = vmatprep.subr.mxu0 0.0
        %953 = vmatpush1.msra.mxu0 0.0
        %954 = vmatprep.subr.mxu0 0.0
        %955 = vmatpush1.msra.mxu0 0.0
        %956 = vmatprep.subr.mxu0 0.0
        %957 = vmatpush1.msra.mxu0 0.0
        %958 = vmatprep.subr.mxu0 0.0
        %959 = vmatpush1.msra.mxu0 0.0
        %960 = vmatprep.subr.mxu0 0.0
        %961 = vmatpush1.msra.mxu0 0.0
        %962 = vmatprep.subr.mxu0 0.0
        %963 = vmatpush1.msra.mxu0 0.0
        %964 = vmatprep.subr.mxu0 0.0
        %965 = vmatpush1.msra.mxu0 0.0
        %966 = vmatprep.subr.mxu0 0.0
        %967 = vmatpush1.msra.mxu0 0.0
        %968 = vmatprep.subr.mxu0 0.0
        %969 = vmatpush1.msra.mxu0 0.0
        %970 = vmatprep.subr.mxu0 0.0
        %971 = vmatpush1.msra.mxu0 0.0
        %972 = vmatprep.subr.mxu0 0.0
        %973 = vmatpush1.msra.mxu0 0.0
        %974 = vmatprep.subr.mxu0 0.0
        %975 = vmatpush1.msra.mxu0 0.0
        %976 = vmatprep.subr.mxu0 0.0
        %977 = vmatpush1.msra.mxu0 0.0
        %978 = vmatprep.subr.mxu0 0.0
        %979 = vmatpush1.msra.mxu0 0.0
        %980 = vmatprep.subr.mxu0 0.0
        %981 = vmatpush1.msra.mxu0 0.0
        %982 = vmatprep.subr.mxu0 0.0
        %983 = vmatpush1.msra.mxu0 0.0
        %984 = vmatprep.subr.mxu0 0.0
        %985 = vmatpush1.msra.mxu0 0.0
        %986 = vmatprep.subr.mxu0 0.0
        %987 = vmatpush1.msra.mxu0 0.0
        %988 = vmatprep.subr.mxu0 0.0
        %989 = vmatpush1.msra.mxu0 0.0
        %990 = vmatprep.subr.mxu0 0.0
        %991 = vmatpush1.msra.mxu0 0.0
        %992 = vmatprep.subr.mxu0 0.0
        %993 = vmatpush1.msra.mxu0 0.0
        %994 = vmatprep.subr.mxu0 0.0
        %995 = vmatpush1.msra.mxu0 0.0
        %996 = vmatprep.subr.mxu0 0.0
        %997 = vmatpush1.msra.mxu0 0.0
        %998 = vmatprep.subr.mxu0 0.0
        %999 = vmatpush1.msra.mxu0 0.0
        %1000 = vmatprep.subr.mxu0 0.0
        %1001 = vmatpush1.msra.mxu0 0.0
        %1002 = vmatprep.subr.mxu0 0.0
        %1003 = vmatpush1.msra.mxu0 0.0
        %1004 = vmatprep.mubr.f32.mxu0 0.0
        %1005 = vmatmul.mubr.f32.gmra.mrb[0].mxu0 %v867
        %v1006 = vpop.f32.mrb[0].mxu0
        %v1007 = vadd.f32 %v309, %v1006
        %v1008 = vpop.f32.mrb[0].mxu0
        %1009 = vdwg.mxu0
        %v1013 = vcombine.low %v936, %v938
        %v1015 = vunpack.c.l.s4 1983009808
        %v1016 = vunpack.c.0.s8 %v1015
        %v1017 = vlaneseq
        %v1018 = vshrl.u32 %v1017, 7
        %v1019 = vsub.s32 %v1016, %v1018
        %v1020 = vrot.slane %v1013, %v1019
        %v1022 = vunpack.c.l.s4 1983009808
        %v1023 = vunpack.c.0.s8 %v1022
        %v1024 = vlaneseq
        %v1025 = vshrl.u32 %v1024, 7
        %v1026 = vsub.s32 %v1023, %v1025
        %v1027 = vrot.slane %v1007, %v1026
        %v1028 = vcombine.low %v1020, %v1027
        %s1030 = scalar_lea.vmem [#allocation3], 18
        %1031 = vst [vmem:[%s1030] sm:$0x3f] %v1028
        %s1032 = scalar_lea.vmem %s254, 8 [#allocation4]
        %v1033 = vld [vmem:[%s1032] sm:$0x3]
        %v1034 = vld [vmem:[#allocation7] sm:$0xff]
        %v1035 = vld [vmem:[#allocation7 + $0x8] sm:$0xff]
        %v1036 = vld [vmem:[#allocation7 + $0x10] sm:$0xff]
        %v1037 = vld [vmem:[#allocation7 + $0x18] sm:$0xff]
        %v1038 = vld [vmem:[#allocation7 + $0x20] sm:$0xff]
        %v1039 = vld [vmem:[#allocation7 + $0x28] sm:$0xff]
        %v1040 = vld [vmem:[#allocation7 + $0x30] sm:$0xff]
        %v1041 = vld [vmem:[#allocation7 + $0x38] sm:$0xff]
        %v1042 = vld [vmem:[#allocation7 + $0x40] sm:$0xff]
        %v1043 = vld [vmem:[#allocation7 + $0x48] sm:$0xff]
        %v1044 = vld [vmem:[#allocation7 + $0x50] sm:$0xff]
        %v1045 = vld [vmem:[#allocation7 + $0x58] sm:$0xff]
        %v1047 = vsel %vm326, %v1033, 0
        %1049 = vmatprep.subr.mxu0 %v1035
        %1050 = vmatpush1.msra.mxu0 %v1034
        %1051 = vmatprep.subr.mxu0 %v1038
        %1052 = vmatpush1.msra.mxu0 %v1037
        %1053 = vmatprep.subr.mxu0 %v1041
        %1054 = vmatpush1.msra.mxu0 %v1040
        %1055 = vmatprep.subr.mxu0 %v1044
        %1056 = vmatpush1.msra.mxu0 %v1043
        %1057 = vmatprep.subr.mxu0 0.0
        %1058 = vmatpush1.msra.mxu0 0.0
        %1059 = vmatprep.subr.mxu0 0.0
        %1060 = vmatpush1.msra.mxu0 0.0
        %1061 = vmatprep.subr.mxu0 0.0
        %1062 = vmatpush1.msra.mxu0 0.0
        %1063 = vmatprep.subr.mxu0 0.0
        %1064 = vmatpush1.msra.mxu0 0.0
        %1065 = vmatprep.subr.mxu0 0.0
        %1066 = vmatpush1.msra.mxu0 0.0
        %1067 = vmatprep.subr.mxu0 0.0
        %1068 = vmatpush1.msra.mxu0 0.0
        %1069 = vmatprep.subr.mxu0 0.0
        %1070 = vmatpush1.msra.mxu0 0.0
        %1071 = vmatprep.subr.mxu0 0.0
        %1072 = vmatpush1.msra.mxu0 0.0
        %1073 = vmatprep.subr.mxu0 0.0
        %1074 = vmatpush1.msra.mxu0 0.0
        %1075 = vmatprep.subr.mxu0 0.0
        %1076 = vmatpush1.msra.mxu0 0.0
        %1077 = vmatprep.subr.mxu0 0.0
        %1078 = vmatpush1.msra.mxu0 0.0
        %1079 = vmatprep.subr.mxu0 0.0
        %1080 = vmatpush1.msra.mxu0 0.0
        %1081 = vmatprep.subr.mxu0 0.0
        %1082 = vmatpush1.msra.mxu0 0.0
        %1083 = vmatprep.subr.mxu0 0.0
        %1084 = vmatpush1.msra.mxu0 0.0
        %1085 = vmatprep.subr.mxu0 0.0
        %1086 = vmatpush1.msra.mxu0 0.0
        %1087 = vmatprep.subr.mxu0 0.0
        %1088 = vmatpush1.msra.mxu0 0.0
        %1089 = vmatprep.subr.mxu0 0.0
        %1090 = vmatpush1.msra.mxu0 0.0
        %1091 = vmatprep.subr.mxu0 0.0
        %1092 = vmatpush1.msra.mxu0 0.0
        %1093 = vmatprep.subr.mxu0 0.0
        %1094 = vmatpush1.msra.mxu0 0.0
        %1095 = vmatprep.subr.mxu0 0.0
        %1096 = vmatpush1.msra.mxu0 0.0
        %1097 = vmatprep.subr.mxu0 0.0
        %1098 = vmatpush1.msra.mxu0 0.0
        %1099 = vmatprep.subr.mxu0 0.0
        %1100 = vmatpush1.msra.mxu0 0.0
        %1101 = vmatprep.subr.mxu0 0.0
        %1102 = vmatpush1.msra.mxu0 0.0
        %1103 = vmatprep.subr.mxu0 0.0
        %1104 = vmatpush1.msra.mxu0 0.0
        %1105 = vmatprep.subr.mxu0 0.0
        %1106 = vmatpush1.msra.mxu0 0.0
        %1107 = vmatprep.subr.mxu0 0.0
        %1108 = vmatpush1.msra.mxu0 0.0
        %1109 = vmatprep.subr.mxu0 0.0
        %1110 = vmatpush1.msra.mxu0 0.0
        %1111 = vmatprep.subr.mxu0 0.0
        %1112 = vmatpush1.msra.mxu0 0.0
        %1113 = vmatprep.mubr.f32.mxu0 0.0
        %1114 = vmatmul.mubr.f32.gmra.mrb[0].mxu0 %v1047
        %v1115 = vpop.f32.mrb[0].mxu0
        %v1116 = vadd.f32 %v301, %v1115
        %v1117 = vpop.f32.mrb[0].mxu0
        %v1118 = vadd.f32 %v305, %v1117
        %1119 = vdwg.mxu0
        %1120 = vmatprep.subr.mxu0 0.0
        %1121 = vmatpush1.msra.mxu0 %v1036
        %1122 = vmatprep.subr.mxu0 0.0
        %1123 = vmatpush1.msra.mxu0 %v1039
        %1124 = vmatprep.subr.mxu0 0.0
        %1125 = vmatpush1.msra.mxu0 %v1042
        %1126 = vmatprep.subr.mxu0 0.0
        %1127 = vmatpush1.msra.mxu0 %v1045
        %1128 = vmatprep.subr.mxu0 0.0
        %1129 = vmatpush1.msra.mxu0 0.0
        %1130 = vmatprep.subr.mxu0 0.0
        %1131 = vmatpush1.msra.mxu0 0.0
        %1132 = vmatprep.subr.mxu0 0.0
        %1133 = vmatpush1.msra.mxu0 0.0
        %1134 = vmatprep.subr.mxu0 0.0
        %1135 = vmatpush1.msra.mxu0 0.0
        %1136 = vmatprep.subr.mxu0 0.0
        %1137 = vmatpush1.msra.mxu0 0.0
        %1138 = vmatprep.subr.mxu0 0.0
        %1139 = vmatpush1.msra.mxu0 0.0
        %1140 = vmatprep.subr.mxu0 0.0
        %1141 = vmatpush1.msra.mxu0 0.0
        %1142 = vmatprep.subr.mxu0 0.0
        %1143 = vmatpush1.msra.mxu0 0.0
        %1144 = vmatprep.subr.mxu0 0.0
        %1145 = vmatpush1.msra.mxu0 0.0
        %1146 = vmatprep.subr.mxu0 0.0
        %1147 = vmatpush1.msra.mxu0 0.0
        %1148 = vmatprep.subr.mxu0 0.0
        %1149 = vmatpush1.msra.mxu0 0.0
        %1150 = vmatprep.subr.mxu0 0.0
        %1151 = vmatpush1.msra.mxu0 0.0
        %1152 = vmatprep.subr.mxu0 0.0
        %1153 = vmatpush1.msra.mxu0 0.0
        %1154 = vmatprep.subr.mxu0 0.0
        %1155 = vmatpush1.msra.mxu0 0.0
        %1156 = vmatprep.subr.mxu0 0.0
        %1157 = vmatpush1.msra.mxu0 0.0
        %1158 = vmatprep.subr.mxu0 0.0
        %1159 = vmatpush1.msra.mxu0 0.0
        %1160 = vmatprep.subr.mxu0 0.0
        %1161 = vmatpush1.msra.mxu0 0.0
        %1162 = vmatprep.subr.mxu0 0.0
        %1163 = vmatpush1.msra.mxu0 0.0
        %1164 = vmatprep.subr.mxu0 0.0
        %1165 = vmatpush1.msra.mxu0 0.0
        %1166 = vmatprep.subr.mxu0 0.0
        %1167 = vmatpush1.msra.mxu0 0.0
        %1168 = vmatprep.subr.mxu0 0.0
        %1169 = vmatpush1.msra.mxu0 0.0
        %1170 = vmatprep.subr.mxu0 0.0
        %1171 = vmatpush1.msra.mxu0 0.0
        %1172 = vmatprep.subr.mxu0 0.0
        %1173 = vmatpush1.msra.mxu0 0.0
        %1174 = vmatprep.subr.mxu0 0.0
        %1175 = vmatpush1.msra.mxu0 0.0
        %1176 = vmatprep.subr.mxu0 0.0
        %1177 = vmatpush1.msra.mxu0 0.0
        %1178 = vmatprep.subr.mxu0 0.0
        %1179 = vmatpush1.msra.mxu0 0.0
        %1180 = vmatprep.subr.mxu0 0.0
        %1181 = vmatpush1.msra.mxu0 0.0
        %1182 = vmatprep.subr.mxu0 0.0
        %1183 = vmatpush1.msra.mxu0 0.0
        %1184 = vmatprep.mubr.f32.mxu0 0.0
        %1185 = vmatmul.mubr.f32.gmra.mrb[0].mxu0 %v1047
        %v1186 = vpop.f32.mrb[0].mxu0
        %v1187 = vadd.f32 %v309, %v1186
        %v1188 = vpop.f32.mrb[0].mxu0
        %1189 = vdwg.mxu0
        %v1193 = vcombine.low %v1116, %v1118
        %v1195 = vunpack.c.l.s4 1983009808
        %v1196 = vunpack.c.0.s8 %v1195
        %v1197 = vlaneseq
        %v1198 = vshrl.u32 %v1197, 7
        %v1199 = vsub.s32 %v1196, %v1198
        %v1200 = vrot.slane %v1193, %v1199
        %v1202 = vunpack.c.l.s4 1983009808
        %v1203 = vunpack.c.0.s8 %v1202
        %v1204 = vlaneseq
        %v1205 = vshrl.u32 %v1204, 7
        %v1206 = vsub.s32 %v1203, %v1205
        %v1207 = vrot.slane %v1187, %v1206
        %v1208 = vcombine.low %v1200, %v1207
        %s1210 = scalar_lea.vmem [#allocation3], 24
        %1211 = vst [vmem:[%s1210] sm:$0x3f] %v1208
        %s1212 = scalar_lea.vmem %s254, 10 [#allocation4]
        %v1213 = vld [vmem:[%s1212] sm:$0x3]
        %v1214 = vld [vmem:[#allocation7] sm:$0xff]
        %v1215 = vld [vmem:[#allocation7 + $0x8] sm:$0xff]
        %v1216 = vld [vmem:[#allocation7 + $0x10] sm:$0xff]
        %v1217 = vld [vmem:[#allocation7 + $0x18] sm:$0xff]
        %v1218 = vld [vmem:[#allocation7 + $0x20] sm:$0xff]
        %v1219 = vld [vmem:[#allocation7 + $0x28] sm:$0xff]
        %v1220 = vld [vmem:[#allocation7 + $0x30] sm:$0xff]
        %v1221 = vld [vmem:[#allocation7 + $0x38] sm:$0xff]
        %v1222 = vld [vmem:[#allocation7 + $0x40] sm:$0xff]
        %v1223 = vld [vmem:[#allocation7 + $0x48] sm:$0xff]
        %v1224 = vld [vmem:[#allocation7 + $0x50] sm:$0xff]
        %v1225 = vld [vmem:[#allocation7 + $0x58] sm:$0xff]
        %v1227 = vsel %vm326, %v1213, 0
        %1229 = vmatprep.subr.mxu0 %v1215
        %1230 = vmatpush1.msra.mxu0 %v1214
        %1231 = vmatprep.subr.mxu0 %v1218
        %1232 = vmatpush1.msra.mxu0 %v1217
        %1233 = vmatprep.subr.mxu0 %v1221
        %1234 = vmatpush1.msra.mxu0 %v1220
        %1235 = vmatprep.subr.mxu0 %v1224
        %1236 = vmatpush1.msra.mxu0 %v1223
        %1237 = vmatprep.subr.mxu0 0.0
        %1238 = vmatpush1.msra.mxu0 0.0
        %1239 = vmatprep.subr.mxu0 0.0
        %1240 = vmatpush1.msra.mxu0 0.0
        %1241 = vmatprep.subr.mxu0 0.0
        %1242 = vmatpush1.msra.mxu0 0.0
        %1243 = vmatprep.subr.mxu0 0.0
        %1244 = vmatpush1.msra.mxu0 0.0
        %1245 = vmatprep.subr.mxu0 0.0
        %1246 = vmatpush1.msra.mxu0 0.0
        %1247 = vmatprep.subr.mxu0 0.0
        %1248 = vmatpush1.msra.mxu0 0.0
        %1249 = vmatprep.subr.mxu0 0.0
        %1250 = vmatpush1.msra.mxu0 0.0
        %1251 = vmatprep.subr.mxu0 0.0
        %1252 = vmatpush1.msra.mxu0 0.0
        %1253 = vmatprep.subr.mxu0 0.0
        %1254 = vmatpush1.msra.mxu0 0.0
        %1255 = vmatprep.subr.mxu0 0.0
        %1256 = vmatpush1.msra.mxu0 0.0
        %1257 = vmatprep.subr.mxu0 0.0
        %1258 = vmatpush1.msra.mxu0 0.0
        %1259 = vmatprep.subr.mxu0 0.0
        %1260 = vmatpush1.msra.mxu0 0.0
        %1261 = vmatprep.subr.mxu0 0.0
        %1262 = vmatpush1.msra.mxu0 0.0
        %1263 = vmatprep.subr.mxu0 0.0
        %1264 = vmatpush1.msra.mxu0 0.0
        %1265 = vmatprep.subr.mxu0 0.0
        %1266 = vmatpush1.msra.mxu0 0.0
        %1267 = vmatprep.subr.mxu0 0.0
        %1268 = vmatpush1.msra.mxu0 0.0
        %1269 = vmatprep.subr.mxu0 0.0
        %1270 = vmatpush1.msra.mxu0 0.0
        %1271 = vmatprep.subr.mxu0 0.0
        %1272 = vmatpush1.msra.mxu0 0.0
        %1273 = vmatprep.subr.mxu0 0.0
        %1274 = vmatpush1.msra.mxu0 0.0
        %1275 = vmatprep.subr.mxu0 0.0
        %1276 = vmatpush1.msra.mxu0 0.0
        %1277 = vmatprep.subr.mxu0 0.0
        %1278 = vmatpush1.msra.mxu0 0.0
        %1279 = vmatprep.subr.mxu0 0.0
        %1280 = vmatpush1.msra.mxu0 0.0
        %1281 = vmatprep.subr.mxu0 0.0
        %1282 = vmatpush1.msra.mxu0 0.0
        %1283 = vmatprep.subr.mxu0 0.0
        %1284 = vmatpush1.msra.mxu0 0.0
        %1285 = vmatprep.subr.mxu0 0.0
        %1286 = vmatpush1.msra.mxu0 0.0
        %1287 = vmatprep.subr.mxu0 0.0
        %1288 = vmatpush1.msra.mxu0 0.0
        %1289 = vmatprep.subr.mxu0 0.0
        %1290 = vmatpush1.msra.mxu0 0.0
        %1291 = vmatprep.subr.mxu0 0.0
        %1292 = vmatpush1.msra.mxu0 0.0
        %1293 = vmatprep.mubr.f32.mxu0 0.0
        %1294 = vmatmul.mubr.f32.gmra.mrb[0].mxu0 %v1227
        %v1295 = vpop.f32.mrb[0].mxu0
        %v1296 = vadd.f32 %v301, %v1295
        %v1297 = vpop.f32.mrb[0].mxu0
        %v1298 = vadd.f32 %v305, %v1297
        %1299 = vdwg.mxu0
        %1300 = vmatprep.subr.mxu0 0.0
        %1301 = vmatpush1.msra.mxu0 %v1216
        %1302 = vmatprep.subr.mxu0 0.0
        %1303 = vmatpush1.msra.mxu0 %v1219
        %1304 = vmatprep.subr.mxu0 0.0
        %1305 = vmatpush1.msra.mxu0 %v1222
        %1306 = vmatprep.subr.mxu0 0.0
        %1307 = vmatpush1.msra.mxu0 %v1225
        %1308 = vmatprep.subr.mxu0 0.0
        %1309 = vmatpush1.msra.mxu0 0.0
        %1310 = vmatprep.subr.mxu0 0.0
        %1311 = vmatpush1.msra.mxu0 0.0
        %1312 = vmatprep.subr.mxu0 0.0
        %1313 = vmatpush1.msra.mxu0 0.0
        %1314 = vmatprep.subr.mxu0 0.0
        %1315 = vmatpush1.msra.mxu0 0.0
        %1316 = vmatprep.subr.mxu0 0.0
        %1317 = vmatpush1.msra.mxu0 0.0
        %1318 = vmatprep.subr.mxu0 0.0
        %1319 = vmatpush1.msra.mxu0 0.0
        %1320 = vmatprep.subr.mxu0 0.0
        %1321 = vmatpush1.msra.mxu0 0.0
        %1322 = vmatprep.subr.mxu0 0.0
        %1323 = vmatpush1.msra.mxu0 0.0
        %1324 = vmatprep.subr.mxu0 0.0
        %1325 = vmatpush1.msra.mxu0 0.0
        %1326 = vmatprep.subr.mxu0 0.0
        %1327 = vmatpush1.msra.mxu0 0.0
        %1328 = vmatprep.subr.mxu0 0.0
        %1329 = vmatpush1.msra.mxu0 0.0
        %1330 = vmatprep.subr.mxu0 0.0
        %1331 = vmatpush1.msra.mxu0 0.0
        %1332 = vmatprep.subr.mxu0 0.0
        %1333 = vmatpush1.msra.mxu0 0.0
        %1334 = vmatprep.subr.mxu0 0.0
        %1335 = vmatpush1.msra.mxu0 0.0
        %1336 = vmatprep.subr.mxu0 0.0
        %1337 = vmatpush1.msra.mxu0 0.0
        %1338 = vmatprep.subr.mxu0 0.0
        %1339 = vmatpush1.msra.mxu0 0.0
        %1340 = vmatprep.subr.mxu0 0.0
        %1341 = vmatpush1.msra.mxu0 0.0
        %1342 = vmatprep.subr.mxu0 0.0
        %1343 = vmatpush1.msra.mxu0 0.0
        %1344 = vmatprep.subr.mxu0 0.0
        %1345 = vmatpush1.msra.mxu0 0.0
        %1346 = vmatprep.subr.mxu0 0.0
        %1347 = vmatpush1.msra.mxu0 0.0
        %1348 = vmatprep.subr.mxu0 0.0
        %1349 = vmatpush1.msra.mxu0 0.0
        %1350 = vmatprep.subr.mxu0 0.0
        %1351 = vmatpush1.msra.mxu0 0.0
        %1352 = vmatprep.subr.mxu0 0.0
        %1353 = vmatpush1.msra.mxu0 0.0
        %1354 = vmatprep.subr.mxu0 0.0
        %1355 = vmatpush1.msra.mxu0 0.0
        %1356 = vmatprep.subr.mxu0 0.0
        %1357 = vmatpush1.msra.mxu0 0.0
        %1358 = vmatprep.subr.mxu0 0.0
        %1359 = vmatpush1.msra.mxu0 0.0
        %1360 = vmatprep.subr.mxu0 0.0
        %1361 = vmatpush1.msra.mxu0 0.0
        %1362 = vmatprep.subr.mxu0 0.0
        %1363 = vmatpush1.msra.mxu0 0.0
        %1364 = vmatprep.mubr.f32.mxu0 0.0
        %1365 = vmatmul.mubr.f32.gmra.mrb[0].mxu0 %v1227
        %v1366 = vpop.f32.mrb[0].mxu0
        %v1367 = vadd.f32 %v309, %v1366
        %v1368 = vpop.f32.mrb[0].mxu0
        %1369 = vdwg.mxu0
        %v1373 = vcombine.low %v1296, %v1298
        %v1375 = vunpack.c.l.s4 1983009808
        %v1376 = vunpack.c.0.s8 %v1375
        %v1377 = vlaneseq
        %v1378 = vshrl.u32 %v1377, 7
        %v1379 = vsub.s32 %v1376, %v1378
        %v1380 = vrot.slane %v1373, %v1379
        %v1382 = vunpack.c.l.s4 1983009808
        %v1383 = vunpack.c.0.s8 %v1382
        %v1384 = vlaneseq
        %v1385 = vshrl.u32 %v1384, 7
        %v1386 = vsub.s32 %v1383, %v1385
        %v1387 = vrot.slane %v1367, %v1386
        %v1388 = vcombine.low %v1380, %v1387
        %s1390 = scalar_lea.vmem [#allocation3], 30
        %1391 = vst [vmem:[%s1390] sm:$0x3f] %v1388
        %s1392 = scalar_lea.vmem %s254, 12 [#allocation4]
        %v1393 = vld [vmem:[%s1392] sm:$0x3]
        %v1394 = vld [vmem:[#allocation7] sm:$0xff]
        %v1395 = vld [vmem:[#allocation7 + $0x8] sm:$0xff]
        %v1396 = vld [vmem:[#allocation7 + $0x10] sm:$0xff]
        %v1397 = vld [vmem:[#allocation7 + $0x18] sm:$0xff]
        %v1398 = vld [vmem:[#allocation7 + $0x20] sm:$0xff]
        %v1399 = vld [vmem:[#allocation7 + $0x28] sm:$0xff]
        %v1400 = vld [vmem:[#allocation7 + $0x30] sm:$0xff]
        %v1401 = vld [vmem:[#allocation7 + $0x38] sm:$0xff]
        %v1402 = vld [vmem:[#allocation7 + $0x40] sm:$0xff]
        %v1403 = vld [vmem:[#allocation7 + $0x48] sm:$0xff]
        %v1404 = vld [vmem:[#allocation7 + $0x50] sm:$0xff]
        %v1405 = vld [vmem:[#allocation7 + $0x58] sm:$0xff]
        %v1407 = vsel %vm326, %v1393, 0
        %1409 = vmatprep.subr.mxu0 %v1395
        %1410 = vmatpush1.msra.mxu0 %v1394
        %1411 = vmatprep.subr.mxu0 %v1398
        %1412 = vmatpush1.msra.mxu0 %v1397
        %1413 = vmatprep.subr.mxu0 %v1401
        %1414 = vmatpush1.msra.mxu0 %v1400
        %1415 = vmatprep.subr.mxu0 %v1404
        %1416 = vmatpush1.msra.mxu0 %v1403
        %1417 = vmatprep.subr.mxu0 0.0
        %1418 = vmatpush1.msra.mxu0 0.0
        %1419 = vmatprep.subr.mxu0 0.0
        %1420 = vmatpush1.msra.mxu0 0.0
        %1421 = vmatprep.subr.mxu0 0.0
        %1422 = vmatpush1.msra.mxu0 0.0
        %1423 = vmatprep.subr.mxu0 0.0
        %1424 = vmatpush1.msra.mxu0 0.0
        %1425 = vmatprep.subr.mxu0 0.0
        %1426 = vmatpush1.msra.mxu0 0.0
        %1427 = vmatprep.subr.mxu0 0.0
        %1428 = vmatpush1.msra.mxu0 0.0
        %1429 = vmatprep.subr.mxu0 0.0
        %1430 = vmatpush1.msra.mxu0 0.0
        %1431 = vmatprep.subr.mxu0 0.0
        %1432 = vmatpush1.msra.mxu0 0.0
        %1433 = vmatprep.subr.mxu0 0.0
        %1434 = vmatpush1.msra.mxu0 0.0
        %1435 = vmatprep.subr.mxu0 0.0
        %1436 = vmatpush1.msra.mxu0 0.0
        %1437 = vmatprep.subr.mxu0 0.0
        %1438 = vmatpush1.msra.mxu0 0.0
        %1439 = vmatprep.subr.mxu0 0.0
        %1440 = vmatpush1.msra.mxu0 0.0
        %1441 = vmatprep.subr.mxu0 0.0
        %1442 = vmatpush1.msra.mxu0 0.0
        %1443 = vmatprep.subr.mxu0 0.0
        %1444 = vmatpush1.msra.mxu0 0.0
        %1445 = vmatprep.subr.mxu0 0.0
        %1446 = vmatpush1.msra.mxu0 0.0
        %1447 = vmatprep.subr.mxu0 0.0
        %1448 = vmatpush1.msra.mxu0 0.0
        %1449 = vmatprep.subr.mxu0 0.0
        %1450 = vmatpush1.msra.mxu0 0.0
        %1451 = vmatprep.subr.mxu0 0.0
        %1452 = vmatpush1.msra.mxu0 0.0
        %1453 = vmatprep.subr.mxu0 0.0
        %1454 = vmatpush1.msra.mxu0 0.0
        %1455 = vmatprep.subr.mxu0 0.0
        %1456 = vmatpush1.msra.mxu0 0.0
        %1457 = vmatprep.subr.mxu0 0.0
        %1458 = vmatpush1.msra.mxu0 0.0
        %1459 = vmatprep.subr.mxu0 0.0
        %1460 = vmatpush1.msra.mxu0 0.0
        %1461 = vmatprep.subr.mxu0 0.0
        %1462 = vmatpush1.msra.mxu0 0.0
        %1463 = vmatprep.subr.mxu0 0.0
        %1464 = vmatpush1.msra.mxu0 0.0
        %1465 = vmatprep.subr.mxu0 0.0
        %1466 = vmatpush1.msra.mxu0 0.0
        %1467 = vmatprep.subr.mxu0 0.0
        %1468 = vmatpush1.msra.mxu0 0.0
        %1469 = vmatprep.subr.mxu0 0.0
        %1470 = vmatpush1.msra.mxu0 0.0
        %1471 = vmatprep.subr.mxu0 0.0
        %1472 = vmatpush1.msra.mxu0 0.0
        %1473 = vmatprep.mubr.f32.mxu0 0.0
        %1474 = vmatmul.mubr.f32.gmra.mrb[0].mxu0 %v1407
        %v1475 = vpop.f32.mrb[0].mxu0
        %v1476 = vadd.f32 %v301, %v1475
        %v1477 = vpop.f32.mrb[0].mxu0
        %v1478 = vadd.f32 %v305, %v1477
        %1479 = vdwg.mxu0
        %1480 = vmatprep.subr.mxu0 0.0
        %1481 = vmatpush1.msra.mxu0 %v1396
        %1482 = vmatprep.subr.mxu0 0.0
        %1483 = vmatpush1.msra.mxu0 %v1399
        %1484 = vmatprep.subr.mxu0 0.0
        %1485 = vmatpush1.msra.mxu0 %v1402
        %1486 = vmatprep.subr.mxu0 0.0
        %1487 = vmatpush1.msra.mxu0 %v1405
        %1488 = vmatprep.subr.mxu0 0.0
        %1489 = vmatpush1.msra.mxu0 0.0
        %1490 = vmatprep.subr.mxu0 0.0
        %1491 = vmatpush1.msra.mxu0 0.0
        %1492 = vmatprep.subr.mxu0 0.0
        %1493 = vmatpush1.msra.mxu0 0.0
        %1494 = vmatprep.subr.mxu0 0.0
        %1495 = vmatpush1.msra.mxu0 0.0
        %1496 = vmatprep.subr.mxu0 0.0
        %1497 = vmatpush1.msra.mxu0 0.0
        %1498 = vmatprep.subr.mxu0 0.0
        %1499 = vmatpush1.msra.mxu0 0.0
        %1500 = vmatprep.subr.mxu0 0.0
        %1501 = vmatpush1.msra.mxu0 0.0
        %1502 = vmatprep.subr.mxu0 0.0
        %1503 = vmatpush1.msra.mxu0 0.0
        %1504 = vmatprep.subr.mxu0 0.0
        %1505 = vmatpush1.msra.mxu0 0.0
        %1506 = vmatprep.subr.mxu0 0.0
        %1507 = vmatpush1.msra.mxu0 0.0
        %1508 = vmatprep.subr.mxu0 0.0
        %1509 = vmatpush1.msra.mxu0 0.0
        %1510 = vmatprep.subr.mxu0 0.0
        %1511 = vmatpush1.msra.mxu0 0.0
        %1512 = vmatprep.subr.mxu0 0.0
        %1513 = vmatpush1.msra.mxu0 0.0
        %1514 = vmatprep.subr.mxu0 0.0
        %1515 = vmatpush1.msra.mxu0 0.0
        %1516 = vmatprep.subr.mxu0 0.0
        %1517 = vmatpush1.msra.mxu0 0.0
        %1518 = vmatprep.subr.mxu0 0.0
        %1519 = vmatpush1.msra.mxu0 0.0
        %1520 = vmatprep.subr.mxu0 0.0
        %1521 = vmatpush1.msra.mxu0 0.0
        %1522 = vmatprep.subr.mxu0 0.0
        %1523 = vmatpush1.msra.mxu0 0.0
        %1524 = vmatprep.subr.mxu0 0.0
        %1525 = vmatpush1.msra.mxu0 0.0
        %1526 = vmatprep.subr.mxu0 0.0
        %1527 = vmatpush1.msra.mxu0 0.0
        %1528 = vmatprep.subr.mxu0 0.0
        %1529 = vmatpush1.msra.mxu0 0.0
        %1530 = vmatprep.subr.mxu0 0.0
        %1531 = vmatpush1.msra.mxu0 0.0
        %1532 = vmatprep.subr.mxu0 0.0
        %1533 = vmatpush1.msra.mxu0 0.0
        %1534 = vmatprep.subr.mxu0 0.0
        %1535 = vmatpush1.msra.mxu0 0.0
        %1536 = vmatprep.subr.mxu0 0.0
        %1537 = vmatpush1.msra.mxu0 0.0
        %1538 = vmatprep.subr.mxu0 0.0
        %1539 = vmatpush1.msra.mxu0 0.0
        %1540 = vmatprep.subr.mxu0 0.0
        %1541 = vmatpush1.msra.mxu0 0.0
        %1542 = vmatprep.subr.mxu0 0.0
        %1543 = vmatpush1.msra.mxu0 0.0
        %1544 = vmatprep.mubr.f32.mxu0 0.0
        %1545 = vmatmul.mubr.f32.gmra.mrb[0].mxu0 %v1407
        %v1546 = vpop.f32.mrb[0].mxu0
        %v1547 = vadd.f32 %v309, %v1546
        %v1548 = vpop.f32.mrb[0].mxu0
        %1549 = vdwg.mxu0
        %v1553 = vcombine.low %v1476, %v1478
        %v1555 = vunpack.c.l.s4 1983009808
        %v1556 = vunpack.c.0.s8 %v1555
        %v1557 = vlaneseq
        %v1558 = vshrl.u32 %v1557, 7
        %v1559 = vsub.s32 %v1556, %v1558
        %v1560 = vrot.slane %v1553, %v1559
        %v1562 = vunpack.c.l.s4 1983009808
        %v1563 = vunpack.c.0.s8 %v1562
        %v1564 = vlaneseq
        %v1565 = vshrl.u32 %v1564, 7
        %v1566 = vsub.s32 %v1563, %v1565
        %v1567 = vrot.slane %v1547, %v1566
        %v1568 = vcombine.low %v1560, %v1567
        %s1570 = scalar_lea.vmem [#allocation3], 36
        %1571 = vst [vmem:[%s1570] sm:$0x3f] %v1568
        %s1572 = scalar_lea.vmem %s254, 14 [#allocation4]
        %v1573 = vld [vmem:[%s1572] sm:$0x3]
        %v1574 = vld [vmem:[#allocation7] sm:$0xff]
        %v1575 = vld [vmem:[#allocation7 + $0x8] sm:$0xff]
        %v1576 = vld [vmem:[#allocation7 + $0x10] sm:$0xff]
        %v1577 = vld [vmem:[#allocation7 + $0x18] sm:$0xff]
        %v1578 = vld [vmem:[#allocation7 + $0x20] sm:$0xff]
        %v1579 = vld [vmem:[#allocation7 + $0x28] sm:$0xff]
        %v1580 = vld [vmem:[#allocation7 + $0x30] sm:$0xff]
        %v1581 = vld [vmem:[#allocation7 + $0x38] sm:$0xff]
        %v1582 = vld [vmem:[#allocation7 + $0x40] sm:$0xff]
        %v1583 = vld [vmem:[#allocation7 + $0x48] sm:$0xff]
        %v1584 = vld [vmem:[#allocation7 + $0x50] sm:$0xff]
        %v1585 = vld [vmem:[#allocation7 + $0x58] sm:$0xff]
        %v1587 = vsel %vm326, %v1573, 0
        %1589 = vmatprep.subr.mxu0 %v1575
        %1590 = vmatpush1.msra.mxu0 %v1574
        %1591 = vmatprep.subr.mxu0 %v1578
        %1592 = vmatpush1.msra.mxu0 %v1577
        %1593 = vmatprep.subr.mxu0 %v1581
        %1594 = vmatpush1.msra.mxu0 %v1580
        %1595 = vmatprep.subr.mxu0 %v1584
        %1596 = vmatpush1.msra.mxu0 %v1583
        %1597 = vmatprep.subr.mxu0 0.0
        %1598 = vmatpush1.msra.mxu0 0.0
        %1599 = vmatprep.subr.mxu0 0.0
        %1600 = vmatpush1.msra.mxu0 0.0
        %1601 = vmatprep.subr.mxu0 0.0
        %1602 = vmatpush1.msra.mxu0 0.0
        %1603 = vmatprep.subr.mxu0 0.0
        %1604 = vmatpush1.msra.mxu0 0.0
        %1605 = vmatprep.subr.mxu0 0.0
        %1606 = vmatpush1.msra.mxu0 0.0
        %1607 = vmatprep.subr.mxu0 0.0
        %1608 = vmatpush1.msra.mxu0 0.0
        %1609 = vmatprep.subr.mxu0 0.0
        %1610 = vmatpush1.msra.mxu0 0.0
        %1611 = vmatprep.subr.mxu0 0.0
        %1612 = vmatpush1.msra.mxu0 0.0
        %1613 = vmatprep.subr.mxu0 0.0
        %1614 = vmatpush1.msra.mxu0 0.0
        %1615 = vmatprep.subr.mxu0 0.0
        %1616 = vmatpush1.msra.mxu0 0.0
        %1617 = vmatprep.subr.mxu0 0.0
        %1618 = vmatpush1.msra.mxu0 0.0
        %1619 = vmatprep.subr.mxu0 0.0
        %1620 = vmatpush1.msra.mxu0 0.0
        %1621 = vmatprep.subr.mxu0 0.0
        %1622 = vmatpush1.msra.mxu0 0.0
        %1623 = vmatprep.subr.mxu0 0.0
        %1624 = vmatpush1.msra.mxu0 0.0
        %1625 = vmatprep.subr.mxu0 0.0
        %1626 = vmatpush1.msra.mxu0 0.0
        %1627 = vmatprep.subr.mxu0 0.0
        %1628 = vmatpush1.msra.mxu0 0.0
        %1629 = vmatprep.subr.mxu0 0.0
        %1630 = vmatpush1.msra.mxu0 0.0
        %1631 = vmatprep.subr.mxu0 0.0
        %1632 = vmatpush1.msra.mxu0 0.0
        %1633 = vmatprep.subr.mxu0 0.0
        %1634 = vmatpush1.msra.mxu0 0.0
        %1635 = vmatprep.subr.mxu0 0.0
        %1636 = vmatpush1.msra.mxu0 0.0
        %1637 = vmatprep.subr.mxu0 0.0
        %1638 = vmatpush1.msra.mxu0 0.0
        %1639 = vmatprep.subr.mxu0 0.0
        %1640 = vmatpush1.msra.mxu0 0.0
        %1641 = vmatprep.subr.mxu0 0.0
        %1642 = vmatpush1.msra.mxu0 0.0
        %1643 = vmatprep.subr.mxu0 0.0
        %1644 = vmatpush1.msra.mxu0 0.0
        %1645 = vmatprep.subr.mxu0 0.0
        %1646 = vmatpush1.msra.mxu0 0.0
        %1647 = vmatprep.subr.mxu0 0.0
        %1648 = vmatpush1.msra.mxu0 0.0
        %1649 = vmatprep.subr.mxu0 0.0
        %1650 = vmatpush1.msra.mxu0 0.0
        %1651 = vmatprep.subr.mxu0 0.0
        %1652 = vmatpush1.msra.mxu0 0.0
        %1653 = vmatprep.mubr.f32.mxu0 0.0
        %1654 = vmatmul.mubr.f32.gmra.mrb[0].mxu0 %v1587
        %v1655 = vpop.f32.mrb[0].mxu0
        %v1656 = vadd.f32 %v301, %v1655
        %v1657 = vpop.f32.mrb[0].mxu0
        %v1658 = vadd.f32 %v305, %v1657
        %1659 = vdwg.mxu0
        %1660 = vmatprep.subr.mxu0 0.0
        %1661 = vmatpush1.msra.mxu0 %v1576
        %1662 = vmatprep.subr.mxu0 0.0
        %1663 = vmatpush1.msra.mxu0 %v1579
        %1664 = vmatprep.subr.mxu0 0.0
        %1665 = vmatpush1.msra.mxu0 %v1582
        %1666 = vmatprep.subr.mxu0 0.0
        %1667 = vmatpush1.msra.mxu0 %v1585
        %1668 = vmatprep.subr.mxu0 0.0
        %1669 = vmatpush1.msra.mxu0 0.0
        %1670 = vmatprep.subr.mxu0 0.0
        %1671 = vmatpush1.msra.mxu0 0.0
        %1672 = vmatprep.subr.mxu0 0.0
        %1673 = vmatpush1.msra.mxu0 0.0
        %1674 = vmatprep.subr.mxu0 0.0
        %1675 = vmatpush1.msra.mxu0 0.0
        %1676 = vmatprep.subr.mxu0 0.0
        %1677 = vmatpush1.msra.mxu0 0.0
        %1678 = vmatprep.subr.mxu0 0.0
        %1679 = vmatpush1.msra.mxu0 0.0
        %1680 = vmatprep.subr.mxu0 0.0
        %1681 = vmatpush1.msra.mxu0 0.0
        %1682 = vmatprep.subr.mxu0 0.0
        %1683 = vmatpush1.msra.mxu0 0.0
        %1684 = vmatprep.subr.mxu0 0.0
        %1685 = vmatpush1.msra.mxu0 0.0
        %1686 = vmatprep.subr.mxu0 0.0
        %1687 = vmatpush1.msra.mxu0 0.0
        %1688 = vmatprep.subr.mxu0 0.0
        %1689 = vmatpush1.msra.mxu0 0.0
        %1690 = vmatprep.subr.mxu0 0.0
        %1691 = vmatpush1.msra.mxu0 0.0
        %1692 = vmatprep.subr.mxu0 0.0
        %1693 = vmatpush1.msra.mxu0 0.0
        %1694 = vmatprep.subr.mxu0 0.0
        %1695 = vmatpush1.msra.mxu0 0.0
        %1696 = vmatprep.subr.mxu0 0.0
        %1697 = vmatpush1.msra.mxu0 0.0
        %1698 = vmatprep.subr.mxu0 0.0
        %1699 = vmatpush1.msra.mxu0 0.0
        %1700 = vmatprep.subr.mxu0 0.0
        %1701 = vmatpush1.msra.mxu0 0.0
        %1702 = vmatprep.subr.mxu0 0.0
        %1703 = vmatpush1.msra.mxu0 0.0
        %1704 = vmatprep.subr.mxu0 0.0
        %1705 = vmatpush1.msra.mxu0 0.0
        %1706 = vmatprep.subr.mxu0 0.0
        %1707 = vmatpush1.msra.mxu0 0.0
        %1708 = vmatprep.subr.mxu0 0.0
        %1709 = vmatpush1.msra.mxu0 0.0
        %1710 = vmatprep.subr.mxu0 0.0
        %1711 = vmatpush1.msra.mxu0 0.0
        %1712 = vmatprep.subr.mxu0 0.0
        %1713 = vmatpush1.msra.mxu0 0.0
        %1714 = vmatprep.subr.mxu0 0.0
        %1715 = vmatpush1.msra.mxu0 0.0
        %1716 = vmatprep.subr.mxu0 0.0
        %1717 = vmatpush1.msra.mxu0 0.0
        %1718 = vmatprep.subr.mxu0 0.0
        %1719 = vmatpush1.msra.mxu0 0.0
        %1720 = vmatprep.subr.mxu0 0.0
        %1721 = vmatpush1.msra.mxu0 0.0
        %1722 = vmatprep.subr.mxu0 0.0
        %1723 = vmatpush1.msra.mxu0 0.0
        %1724 = vmatprep.mubr.f32.mxu0 0.0
        %1725 = vmatmul.mubr.f32.gmra.mrb[0].mxu0 %v1587
        %v1726 = vpop.f32.mrb[0].mxu0
        %v1727 = vadd.f32 %v309, %v1726
        %v1728 = vpop.f32.mrb[0].mxu0
        %1729 = vdwg.mxu0
        %v1733 = vcombine.low %v1656, %v1658
        %v1735 = vunpack.c.l.s4 1983009808
        %v1736 = vunpack.c.0.s8 %v1735
        %v1737 = vlaneseq
        %v1738 = vshrl.u32 %v1737, 7
        %v1739 = vsub.s32 %v1736, %v1738
        %v1740 = vrot.slane %v1733, %v1739
        %v1742 = vunpack.c.l.s4 1983009808
        %v1743 = vunpack.c.0.s8 %v1742
        %v1744 = vlaneseq
        %v1745 = vshrl.u32 %v1744, 7
        %v1746 = vsub.s32 %v1743, %v1745
        %v1747 = vrot.slane %v1727, %v1746
        %v1748 = vcombine.low %v1740, %v1747
        %s1750 = scalar_lea.vmem [#allocation3], 42
        %1751 = vst [vmem:[%s1750] sm:$0x3f] %v1748
        %v1752 = vld [vmem:[%s4] sm:$0x1]
        %v1754 = vlaneseq
        %v1755 = vshrl.u32 %v1754, 7
        %v1756 = vsub.s32 0, %v1755
        %v1757 = vrot.slane %v1752, %v1756
        %v1759 = vld [vmem:[#allocation2] sm:$0x3]
        %v1760 = vld [vmem:[#allocation3] sm:$0x3f]
        %v1761 = vld [vmem:[#allocation9] sm:$0xff]
        %v1762 = vld [vmem:[#allocation9 + $0x8] sm:$0xff]
        %v1763 = vld [vmem:[#allocation9 + $0x10] sm:$0xff]
        %v1764 = vld [vmem:[#allocation9 + $0x18] sm:$0xff]
        %v1765 = vld [vmem:[#allocation9 + $0x20] sm:$0xff]
        %v1766 = vld [vmem:[#allocation9 + $0x28] sm:$0xff]
        %v1767 = vld [vmem:[#allocation9 + $0x30] sm:$0xff]
        %v1768 = vld [vmem:[#allocation9 + $0x38] sm:$0xff]
        %v1769 = vld [vmem:[#allocation9 + $0x40] sm:$0xff]
        %v1770 = vld [vmem:[#allocation9 + $0x48] sm:$0xff]
        %v1771 = vld [vmem:[#allocation9 + $0x50] sm:$0xff]
        %v1772 = vld [vmem:[#allocation9 + $0x58] sm:$0xff]
        %v1773 = vld [vmem:[#allocation9 + $0x60] sm:$0xff]
        %v1774 = vld [vmem:[#allocation9 + $0x68] sm:$0xff]
        %v1775 = vld [vmem:[#allocation9 + $0x70] sm:$0xff]
        %v1776 = vld [vmem:[#allocation9 + $0x78] sm:$0xff]
        %v1777 = vld [vmem:[#allocation9 + $0x80] sm:$0xff]
        %v1778 = vld [vmem:[#allocation9 + $0x88] sm:$0xff]
        %v1779 = vld [vmem:[#allocation9 + $0x90] sm:$0xff]
        %v1780 = vld [vmem:[#allocation9 + $0x98] sm:$0xff]
        %v1781 = vld [vmem:[#allocation9 + $0xa0] sm:$0xff]
        %v1782 = vld [vmem:[#allocation9 + $0xa8] sm:$0xff]
        %v1783 = vld [vmem:[#allocation9 + $0xb0] sm:$0xff]
        %v1784 = vld [vmem:[#allocation9 + $0xb8] sm:$0xff]
        %v1785 = vld [vmem:[#allocation9 + $0xc0] sm:$0xff]
        %v1786 = vld [vmem:[#allocation9 + $0xc8] sm:$0xff]
        %v1787 = vld [vmem:[#allocation9 + $0xd0] sm:$0xff]
        %v1788 = vld [vmem:[#allocation9 + $0xd8] sm:$0xff]
        %v1789 = vld [vmem:[#allocation9 + $0xe0] sm:$0xff]
        %v1790 = vld [vmem:[#allocation9 + $0xe8] sm:$0xff]
        %v1791 = vld [vmem:[#allocation9 + $0xf0] sm:$0xff]
        %v1792 = vld [vmem:[#allocation9 + $0xf8] sm:$0xff]
        %v1793 = vld [vmem:[#allocation9 + $0x100] sm:$0xff]
        %v1794 = vld [vmem:[#allocation9 + $0x108] sm:$0xff]
        %v1795 = vld [vmem:[#allocation9 + $0x110] sm:$0xff]
        %v1796 = vld [vmem:[#allocation9 + $0x118] sm:$0xff]
        %v1797 = vld [vmem:[#allocation9 + $0x120] sm:$0xff]
        %v1798 = vld [vmem:[#allocation9 + $0x128] sm:$0xff]
        %v1799 = vld [vmem:[#allocation9 + $0x130] sm:$0xff]
        %v1800 = vld [vmem:[#allocation9 + $0x138] sm:$0xff]
        %v1801 = vld [vmem:[#allocation9 + $0x140] sm:$0xff]
        %v1802 = vld [vmem:[#allocation9 + $0x148] sm:$0xff]
        %v1803 = vld [vmem:[#allocation9 + $0x150] sm:$0xff]
        %v1804 = vld [vmem:[#allocation9 + $0x158] sm:$0xff]
        %v1805 = vld [vmem:[#allocation9 + $0x160] sm:$0xff]
        %v1806 = vld [vmem:[#allocation9 + $0x168] sm:$0xff]
        %v1807 = vld [vmem:[#allocation9 + $0x170] sm:$0xff]
        %v1808 = vld [vmem:[#allocation9 + $0x178] sm:$0xff]
        %1809 = vmatprep.subr.mxu0 %v1762
        %1810 = vmatpush1.msra.mxu0 %v1761
        %1811 = vmatprep.subr.mxu0 %v1765
        %1812 = vmatpush1.msra.mxu0 %v1764
        %1813 = vmatprep.subr.mxu0 %v1768
        %1814 = vmatpush1.msra.mxu0 %v1767
        %1815 = vmatprep.subr.mxu0 %v1771
        %1816 = vmatpush1.msra.mxu0 %v1770
        %1817 = vmatprep.subr.mxu0 %v1774
        %1818 = vmatpush1.msra.mxu0 %v1773
        %1819 = vmatprep.subr.mxu0 %v1777
        %1820 = vmatpush1.msra.mxu0 %v1776
        %1821 = vmatprep.subr.mxu0 %v1780
        %1822 = vmatpush1.msra.mxu0 %v1779
        %1823 = vmatprep.subr.mxu0 %v1783
        %1824 = vmatpush1.msra.mxu0 %v1782
        %1825 = vmatprep.subr.mxu0 %v1786
        %1826 = vmatpush1.msra.mxu0 %v1785
        %1827 = vmatprep.subr.mxu0 %v1789
        %1828 = vmatpush1.msra.mxu0 %v1788
        %1829 = vmatprep.subr.mxu0 %v1792
        %1830 = vmatpush1.msra.mxu0 %v1791
        %1831 = vmatprep.subr.mxu0 %v1795
        %1832 = vmatpush1.msra.mxu0 %v1794
        %1833 = vmatprep.subr.mxu0 %v1798
        %1834 = vmatpush1.msra.mxu0 %v1797
        %1835 = vmatprep.subr.mxu0 %v1801
        %1836 = vmatpush1.msra.mxu0 %v1800
        %1837 = vmatprep.subr.mxu0 %v1804
        %1838 = vmatpush1.msra.mxu0 %v1803
        %1839 = vmatprep.subr.mxu0 %v1807
        %1840 = vmatpush1.msra.mxu0 %v1806
        %1841 = vmatprep.subr.mxu0 0.0
        %1842 = vmatpush1.msra.mxu0 0.0
        %1843 = vmatprep.subr.mxu0 0.0
        %1844 = vmatpush1.msra.mxu0 0.0
        %1845 = vmatprep.subr.mxu0 0.0
        %1846 = vmatpush1.msra.mxu0 0.0
        %1847 = vmatprep.subr.mxu0 0.0
        %1848 = vmatpush1.msra.mxu0 0.0
        %1849 = vmatprep.subr.mxu0 0.0
        %1850 = vmatpush1.msra.mxu0 0.0
        %1851 = vmatprep.subr.mxu0 0.0
        %1852 = vmatpush1.msra.mxu0 0.0
        %1853 = vmatprep.subr.mxu0 0.0
        %1854 = vmatpush1.msra.mxu0 0.0
        %1855 = vmatprep.subr.mxu0 0.0
        %1856 = vmatpush1.msra.mxu0 0.0
        %1857 = vmatprep.subr.mxu0 0.0
        %1858 = vmatpush1.msra.mxu0 0.0
        %1859 = vmatprep.subr.mxu0 0.0
        %1860 = vmatpush1.msra.mxu0 0.0
        %1861 = vmatprep.subr.mxu0 0.0
        %1862 = vmatpush1.msra.mxu0 0.0
        %1863 = vmatprep.subr.mxu0 0.0
        %1864 = vmatpush1.msra.mxu0 0.0
        %1865 = vmatprep.subr.mxu0 0.0
        %1866 = vmatpush1.msra.mxu0 0.0
        %1867 = vmatprep.subr.mxu0 0.0
        %1868 = vmatpush1.msra.mxu0 0.0
        %1869 = vmatprep.subr.mxu0 0.0
        %1870 = vmatpush1.msra.mxu0 0.0
        %1871 = vmatprep.subr.mxu0 0.0
        %1872 = vmatpush1.msra.mxu0 0.0
        %1873 = vmatprep.mubr.f32.mxu0 0.0
        %1874 = vmatmul.mubr.f32.gmra.mrb[0].mxu0 %v1759
        %v1875 = vpop.f32.mrb[0].mxu0
        %v1876 = vadd.f32 0.0, %v1875
        %v1877 = vpop.f32.mrb[0].mxu0
        %v1878 = vadd.f32 0.0, %v1877
        %1879 = vdwg.mxu0
        %1880 = vmatprep.subr.mxu0 0.0
        %1881 = vmatpush1.msra.mxu0 %v1763
        %1882 = vmatprep.subr.mxu0 0.0
        %1883 = vmatpush1.msra.mxu0 %v1766
        %1884 = vmatprep.subr.mxu0 0.0
        %1885 = vmatpush1.msra.mxu0 %v1769
        %1886 = vmatprep.subr.mxu0 0.0
        %1887 = vmatpush1.msra.mxu0 %v1772
        %1888 = vmatprep.subr.mxu0 0.0
        %1889 = vmatpush1.msra.mxu0 %v1775
        %1890 = vmatprep.subr.mxu0 0.0
        %1891 = vmatpush1.msra.mxu0 %v1778
        %1892 = vmatprep.subr.mxu0 0.0
        %1893 = vmatpush1.msra.mxu0 %v1781
        %1894 = vmatprep.subr.mxu0 0.0
        %1895 = vmatpush1.msra.mxu0 %v1784
        %1896 = vmatprep.subr.mxu0 0.0
        %1897 = vmatpush1.msra.mxu0 %v1787
        %1898 = vmatprep.subr.mxu0 0.0
        %1899 = vmatpush1.msra.mxu0 %v1790
        %1900 = vmatprep.subr.mxu0 0.0
        %1901 = vmatpush1.msra.mxu0 %v1793
        %1902 = vmatprep.subr.mxu0 0.0
        %1903 = vmatpush1.msra.mxu0 %v1796
        %1904 = vmatprep.subr.mxu0 0.0
        %1905 = vmatpush1.msra.mxu0 %v1799
        %1906 = vmatprep.subr.mxu0 0.0
        %1907 = vmatpush1.msra.mxu0 %v1802
        %1908 = vmatprep.subr.mxu0 0.0
        %1909 = vmatpush1.msra.mxu0 %v1805
        %1910 = vmatprep.subr.mxu0 0.0
        %1911 = vmatpush1.msra.mxu0 %v1808
        %1912 = vmatprep.subr.mxu0 0.0
        %1913 = vmatpush1.msra.mxu0 0.0
        %1914 = vmatprep.subr.mxu0 0.0
        %1915 = vmatpush1.msra.mxu0 0.0
        %1916 = vmatprep.subr.mxu0 0.0
        %1917 = vmatpush1.msra.mxu0 0.0
        %1918 = vmatprep.subr.mxu0 0.0
        %1919 = vmatpush1.msra.mxu0 0.0
        %1920 = vmatprep.subr.mxu0 0.0
        %1921 = vmatpush1.msra.mxu0 0.0
        %1922 = vmatprep.subr.mxu0 0.0
        %1923 = vmatpush1.msra.mxu0 0.0
        %1924 = vmatprep.subr.mxu0 0.0
        %1925 = vmatpush1.msra.mxu0 0.0
        %1926 = vmatprep.subr.mxu0 0.0
        %1927 = vmatpush1.msra.mxu0 0.0
        %1928 = vmatprep.subr.mxu0 0.0
        %1929 = vmatpush1.msra.mxu0 0.0
        %1930 = vmatprep.subr.mxu0 0.0
        %1931 = vmatpush1.msra.mxu0 0.0
        %1932 = vmatprep.subr.mxu0 0.0
        %1933 = vmatpush1.msra.mxu0 0.0
        %1934 = vmatprep.subr.mxu0 0.0
        %1935 = vmatpush1.msra.mxu0 0.0
        %1936 = vmatprep.subr.mxu0 0.0
        %1937 = vmatpush1.msra.mxu0 0.0
        %1938 = vmatprep.subr.mxu0 0.0
        %1939 = vmatpush1.msra.mxu0 0.0
        %1940 = vmatprep.subr.mxu0 0.0
        %1941 = vmatpush1.msra.mxu0 0.0
        %1942 = vmatprep.subr.mxu0 0.0
        %1943 = vmatpush1.msra.mxu0 0.0
        %1944 = vmatprep.mubr.f32.mxu0 0.0
        %1945 = vmatmul.mubr.f32.gmra.mrb[0].mxu0 %v1759
        %v1946 = vpop.f32.mrb[0].mxu0
        %v1947 = vadd.f32 0.0, %v1946
        %v1948 = vpop.f32.mrb[0].mxu0
        %1949 = vdwg.mxu0
        %v1950 = vadd.f32 %v1760, %v1876
        %v1951 = vxor.u32 %v1950, 2147483648
        %v1952 = vmul.f32 %v1951, 1.442695
        %v1953 = vpow.pop %v1952
        %v1954 = vadd.f32 %v1953, 1.0
        %v1955 = vrcp.pop %v1954
        %v1956 = vmul.f32 1.0, %v1955
        %v1958 = vrot.slane %v1760, 2
        %v1960 = vadd.f32 %v1958, %v1878
        %v1961 = vxor.u32 %v1960, 2147483648
        %v1962 = vmul.f32 %v1961, 1.442695
        %v1963 = vpow.pop %v1962
        %v1964 = vadd.f32 %v1963, 1.0
        %v1965 = vrcp.pop %v1964
        %v1966 = vmul.f32 1.0, %v1965
        %v1967 = vadd.f32 %v1947, %v1757
        %v1968 = vmul.f32 %v1956, %v1967
        %v1969 = vrot.slane %v1760, 4
        %v1971 = vadd.f32 %v1969, %v1968
        %v1972 = vtanh.pop %v1971
        %v1973 = vsub.f32 1.0, %v1966
        %v1974 = vmul.f32 %v1973, %v1972
        %v1975 = vmul.f32 %v1966, %v1759
        %v1976 = vadd.f32 %v1974, %v1975
        %1977 = vst [vmem:[%s288] sm:$0x3] %v1976
        %v1978 = vld [vmem:[%s670] sm:$0x3f]
        %v1979 = vld [vmem:[#allocation9] sm:$0xff]
        %v1980 = vld [vmem:[#allocation9 + $0x8] sm:$0xff]
        %v1981 = vld [vmem:[#allocation9 + $0x10] sm:$0xff]
        %v1982 = vld [vmem:[#allocation9 + $0x18] sm:$0xff]
        %v1983 = vld [vmem:[#allocation9 + $0x20] sm:$0xff]
        %v1984 = vld [vmem:[#allocation9 + $0x28] sm:$0xff]
        %v1985 = vld [vmem:[#allocation9 + $0x30] sm:$0xff]
        %v1986 = vld [vmem:[#allocation9 + $0x38] sm:$0xff]
        %v1987 = vld [vmem:[#allocation9 + $0x40] sm:$0xff]
        %v1988 = vld [vmem:[#allocation9 + $0x48] sm:$0xff]
        %v1989 = vld [vmem:[#allocation9 + $0x50] sm:$0xff]
        %v1990 = vld [vmem:[#allocation9 + $0x58] sm:$0xff]
        %v1991 = vld [vmem:[#allocation9 + $0x60] sm:$0xff]
        %v1992 = vld [vmem:[#allocation9 + $0x68] sm:$0xff]
        %v1993 = vld [vmem:[#allocation9 + $0x70] sm:$0xff]
        %v1994 = vld [vmem:[#allocation9 + $0x78] sm:$0xff]
        %v1995 = vld [vmem:[#allocation9 + $0x80] sm:$0xff]
        %v1996 = vld [vmem:[#allocation9 + $0x88] sm:$0xff]
        %v1997 = vld [vmem:[#allocation9 + $0x90] sm:$0xff]
        %v1998 = vld [vmem:[#allocation9 + $0x98] sm:$0xff]
        %v1999 = vld [vmem:[#allocation9 + $0xa0] sm:$0xff]
        %v2000 = vld [vmem:[#allocation9 + $0xa8] sm:$0xff]
        %v2001 = vld [vmem:[#allocation9 + $0xb0] sm:$0xff]
        %v2002 = vld [vmem:[#allocation9 + $0xb8] sm:$0xff]
        %v2003 = vld [vmem:[#allocation9 + $0xc0] sm:$0xff]
        %v2004 = vld [vmem:[#allocation9 + $0xc8] sm:$0xff]
        %v2005 = vld [vmem:[#allocation9 + $0xd0] sm:$0xff]
        %v2006 = vld [vmem:[#allocation9 + $0xd8] sm:$0xff]
        %v2007 = vld [vmem:[#allocation9 + $0xe0] sm:$0xff]
        %v2008 = vld [vmem:[#allocation9 + $0xe8] sm:$0xff]
        %v2009 = vld [vmem:[#allocation9 + $0xf0] sm:$0xff]
        %v2010 = vld [vmem:[#allocation9 + $0xf8] sm:$0xff]
        %v2011 = vld [vmem:[#allocation9 + $0x100] sm:$0xff]
        %v2012 = vld [vmem:[#allocation9 + $0x108] sm:$0xff]
        %v2013 = vld [vmem:[#allocation9 + $0x110] sm:$0xff]
        %v2014 = vld [vmem:[#allocation9 + $0x118] sm:$0xff]
        %v2015 = vld [vmem:[#allocation9 + $0x120] sm:$0xff]
        %v2016 = vld [vmem:[#allocation9 + $0x128] sm:$0xff]
        %v2017 = vld [vmem:[#allocation9 + $0x130] sm:$0xff]
        %v2018 = vld [vmem:[#allocation9 + $0x138] sm:$0xff]
        %v2019 = vld [vmem:[#allocation9 + $0x140] sm:$0xff]
        %v2020 = vld [vmem:[#allocation9 + $0x148] sm:$0xff]
        %v2021 = vld [vmem:[#allocation9 + $0x150] sm:$0xff]
        %v2022 = vld [vmem:[#allocation9 + $0x158] sm:$0xff]
        %v2023 = vld [vmem:[#allocation9 + $0x160] sm:$0xff]
        %v2024 = vld [vmem:[#allocation9 + $0x168] sm:$0xff]
        %v2025 = vld [vmem:[#allocation9 + $0x170] sm:$0xff]
        %v2026 = vld [vmem:[#allocation9 + $0x178] sm:$0xff]
        %2027 = vmatprep.subr.mxu0 %v1980
        %2028 = vmatpush1.msra.mxu0 %v1979
        %2029 = vmatprep.subr.mxu0 %v1983
        %2030 = vmatpush1.msra.mxu0 %v1982
        %2031 = vmatprep.subr.mxu0 %v1986
        %2032 = vmatpush1.msra.mxu0 %v1985
        %2033 = vmatprep.subr.mxu0 %v1989
        %2034 = vmatpush1.msra.mxu0 %v1988
        %2035 = vmatprep.subr.mxu0 %v1992
        %2036 = vmatpush1.msra.mxu0 %v1991
        %2037 = vmatprep.subr.mxu0 %v1995
        %2038 = vmatpush1.msra.mxu0 %v1994
        %2039 = vmatprep.subr.mxu0 %v1998
        %2040 = vmatpush1.msra.mxu0 %v1997
        %2041 = vmatprep.subr.mxu0 %v2001
        %2042 = vmatpush1.msra.mxu0 %v2000
        %2043 = vmatprep.subr.mxu0 %v2004
        %2044 = vmatpush1.msra.mxu0 %v2003
        %2045 = vmatprep.subr.mxu0 %v2007
        %2046 = vmatpush1.msra.mxu0 %v2006
        %2047 = vmatprep.subr.mxu0 %v2010
        %2048 = vmatpush1.msra.mxu0 %v2009
        %2049 = vmatprep.subr.mxu0 %v2013
        %2050 = vmatpush1.msra.mxu0 %v2012
        %2051 = vmatprep.subr.mxu0 %v2016
        %2052 = vmatpush1.msra.mxu0 %v2015
        %2053 = vmatprep.subr.mxu0 %v2019
        %2054 = vmatpush1.msra.mxu0 %v2018
        %2055 = vmatprep.subr.mxu0 %v2022
        %2056 = vmatpush1.msra.mxu0 %v2021
        %2057 = vmatprep.subr.mxu0 %v2025
        %2058 = vmatpush1.msra.mxu0 %v2024
        %2059 = vmatprep.subr.mxu0 0.0
        %2060 = vmatpush1.msra.mxu0 0.0
        %2061 = vmatprep.subr.mxu0 0.0
        %2062 = vmatpush1.msra.mxu0 0.0
        %2063 = vmatprep.subr.mxu0 0.0
        %2064 = vmatpush1.msra.mxu0 0.0
        %2065 = vmatprep.subr.mxu0 0.0
        %2066 = vmatpush1.msra.mxu0 0.0
        %2067 = vmatprep.subr.mxu0 0.0
        %2068 = vmatpush1.msra.mxu0 0.0
        %2069 = vmatprep.subr.mxu0 0.0
        %2070 = vmatpush1.msra.mxu0 0.0
        %2071 = vmatprep.subr.mxu0 0.0
        %2072 = vmatpush1.msra.mxu0 0.0
        %2073 = vmatprep.subr.mxu0 0.0
        %2074 = vmatpush1.msra.mxu0 0.0
        %2075 = vmatprep.subr.mxu0 0.0
        %2076 = vmatpush1.msra.mxu0 0.0
        %2077 = vmatprep.subr.mxu0 0.0
        %2078 = vmatpush1.msra.mxu0 0.0
        %2079 = vmatprep.subr.mxu0 0.0
        %2080 = vmatpush1.msra.mxu0 0.0
        %2081 = vmatprep.subr.mxu0 0.0
        %2082 = vmatpush1.msra.mxu0 0.0
        %2083 = vmatprep.subr.mxu0 0.0
        %2084 = vmatpush1.msra.mxu0 0.0
        %2085 = vmatprep.subr.mxu0 0.0
        %2086 = vmatpush1.msra.mxu0 0.0
        %2087 = vmatprep.subr.mxu0 0.0
        %2088 = vmatpush1.msra.mxu0 0.0
        %2089 = vmatprep.subr.mxu0 0.0
        %2090 = vmatpush1.msra.mxu0 0.0
        %2091 = vmatprep.mubr.f32.mxu0 0.0
        %2092 = vmatmul.mubr.f32.gmra.mrb[0].mxu0 %v1976
        %v2093 = vpop.f32.mrb[0].mxu0
        %v2094 = vadd.f32 0.0, %v2093
        %v2095 = vpop.f32.mrb[0].mxu0
        %v2096 = vadd.f32 0.0, %v2095
        %2097 = vdwg.mxu0
        %2098 = vmatprep.subr.mxu0 0.0
        %2099 = vmatpush1.msra.mxu0 %v1981
        %2100 = vmatprep.subr.mxu0 0.0
        %2101 = vmatpush1.msra.mxu0 %v1984
        %2102 = vmatprep.subr.mxu0 0.0
        %2103 = vmatpush1.msra.mxu0 %v1987
        %2104 = vmatprep.subr.mxu0 0.0
        %2105 = vmatpush1.msra.mxu0 %v1990
        %2106 = vmatprep.subr.mxu0 0.0
        %2107 = vmatpush1.msra.mxu0 %v1993
        %2108 = vmatprep.subr.mxu0 0.0
        %2109 = vmatpush1.msra.mxu0 %v1996
        %2110 = vmatprep.subr.mxu0 0.0
        %2111 = vmatpush1.msra.mxu0 %v1999
        %2112 = vmatprep.subr.mxu0 0.0
        %2113 = vmatpush1.msra.mxu0 %v2002
        %2114 = vmatprep.subr.mxu0 0.0
        %2115 = vmatpush1.msra.mxu0 %v2005
        %2116 = vmatprep.subr.mxu0 0.0
        %2117 = vmatpush1.msra.mxu0 %v2008
        %2118 = vmatprep.subr.mxu0 0.0
        %2119 = vmatpush1.msra.mxu0 %v2011
        %2120 = vmatprep.subr.mxu0 0.0
        %2121 = vmatpush1.msra.mxu0 %v2014
        %2122 = vmatprep.subr.mxu0 0.0
        %2123 = vmatpush1.msra.mxu0 %v2017
        %2124 = vmatprep.subr.mxu0 0.0
        %2125 = vmatpush1.msra.mxu0 %v2020
        %2126 = vmatprep.subr.mxu0 0.0
        %2127 = vmatpush1.msra.mxu0 %v2023
        %2128 = vmatprep.subr.mxu0 0.0
        %2129 = vmatpush1.msra.mxu0 %v2026
        %2130 = vmatprep.subr.mxu0 0.0
        %2131 = vmatpush1.msra.mxu0 0.0
        %2132 = vmatprep.subr.mxu0 0.0
        %2133 = vmatpush1.msra.mxu0 0.0
        %2134 = vmatprep.subr.mxu0 0.0
        %2135 = vmatpush1.msra.mxu0 0.0
        %2136 = vmatprep.subr.mxu0 0.0
        %2137 = vmatpush1.msra.mxu0 0.0
        %2138 = vmatprep.subr.mxu0 0.0
        %2139 = vmatpush1.msra.mxu0 0.0
        %2140 = vmatprep.subr.mxu0 0.0
        %2141 = vmatpush1.msra.mxu0 0.0
        %2142 = vmatprep.subr.mxu0 0.0
        %2143 = vmatpush1.msra.mxu0 0.0
        %2144 = vmatprep.subr.mxu0 0.0
        %2145 = vmatpush1.msra.mxu0 0.0
        %2146 = vmatprep.subr.mxu0 0.0
        %2147 = vmatpush1.msra.mxu0 0.0
        %2148 = vmatprep.subr.mxu0 0.0
        %2149 = vmatpush1.msra.mxu0 0.0
        %2150 = vmatprep.subr.mxu0 0.0
        %2151 = vmatpush1.msra.mxu0 0.0
        %2152 = vmatprep.subr.mxu0 0.0
        %2153 = vmatpush1.msra.mxu0 0.0
        %2154 = vmatprep.subr.mxu0 0.0
        %2155 = vmatpush1.msra.mxu0 0.0
        %2156 = vmatprep.subr.mxu0 0.0
        %2157 = vmatpush1.msra.mxu0 0.0
        %2158 = vmatprep.subr.mxu0 0.0
        %2159 = vmatpush1.msra.mxu0 0.0
        %2160 = vmatprep.subr.mxu0 0.0
        %2161 = vmatpush1.msra.mxu0 0.0
        %2162 = vmatprep.mubr.f32.mxu0 0.0
        %2163 = vmatmul.mubr.f32.gmra.mrb[0].mxu0 %v1976
        %v2164 = vpop.f32.mrb[0].mxu0
        %v2165 = vadd.f32 0.0, %v2164
        %v2166 = vpop.f32.mrb[0].mxu0
        %2167 = vdwg.mxu0
        %v2168 = vadd.f32 %v1978, %v2094
        %v2169 = vxor.u32 %v2168, 2147483648
        %v2170 = vmul.f32 %v2169, 1.442695
        %v2171 = vpow.pop %v2170
        %v2172 = vadd.f32 %v2171, 1.0
        %v2173 = vrcp.pop %v2172
        %v2174 = vmul.f32 1.0, %v2173
        %v2176 = vrot.slane %v1978, 2
        %v2178 = vadd.f32 %v2176, %v2096
        %v2179 = vxor.u32 %v2178, 2147483648
        %v2180 = vmul.f32 %v2179, 1.442695
        %v2181 = vpow.pop %v2180
        %v2182 = vadd.f32 %v2181, 1.0
        %v2183 = vrcp.pop %v2182
        %v2184 = vmul.f32 1.0, %v2183
        %v2185 = vadd.f32 %v2165, %v1757
        %v2186 = vmul.f32 %v2174, %v2185
        %v2187 = vrot.slane %v1978, 4
        %v2189 = vadd.f32 %v2187, %v2186
        %v2190 = vtanh.pop %v2189
        %v2191 = vsub.f32 1.0, %v2184
        %v2192 = vmul.f32 %v2191, %v2190
        %v2193 = vmul.f32 %v2184, %v1976
        %v2194 = vadd.f32 %v2192, %v2193
        %s2195 = scalar_lea.vmem %s288, 2 [#allocation10]
        %2196 = vst [vmem:[%s2195] sm:$0x3] %v2194
        %v2197 = vld [vmem:[%s850] sm:$0x3f]
        %v2198 = vld [vmem:[#allocation9] sm:$0xff]
        %v2199 = vld [vmem:[#allocation9 + $0x8] sm:$0xff]
        %v2200 = vld [vmem:[#allocation9 + $0x10] sm:$0xff]
        %v2201 = vld [vmem:[#allocation9 + $0x18] sm:$0xff]
        %v2202 = vld [vmem:[#allocation9 + $0x20] sm:$0xff]
        %v2203 = vld [vmem:[#allocation9 + $0x28] sm:$0xff]
        %v2204 = vld [vmem:[#allocation9 + $0x30] sm:$0xff]
        %v2205 = vld [vmem:[#allocation9 + $0x38] sm:$0xff]
        %v2206 = vld [vmem:[#allocation9 + $0x40] sm:$0xff]
        %v2207 = vld [vmem:[#allocation9 + $0x48] sm:$0xff]
        %v2208 = vld [vmem:[#allocation9 + $0x50] sm:$0xff]
        %v2209 = vld [vmem:[#allocation9 + $0x58] sm:$0xff]
        %v2210 = vld [vmem:[#allocation9 + $0x60] sm:$0xff]
        %v2211 = vld [vmem:[#allocation9 + $0x68] sm:$0xff]
        %v2212 = vld [vmem:[#allocation9 + $0x70] sm:$0xff]
        %v2213 = vld [vmem:[#allocation9 + $0x78] sm:$0xff]
        %v2214 = vld [vmem:[#allocation9 + $0x80] sm:$0xff]
        %v2215 = vld [vmem:[#allocation9 + $0x88] sm:$0xff]
        %v2216 = vld [vmem:[#allocation9 + $0x90] sm:$0xff]
        %v2217 = vld [vmem:[#allocation9 + $0x98] sm:$0xff]
        %v2218 = vld [vmem:[#allocation9 + $0xa0] sm:$0xff]
        %v2219 = vld [vmem:[#allocation9 + $0xa8] sm:$0xff]
        %v2220 = vld [vmem:[#allocation9 + $0xb0] sm:$0xff]
        %v2221 = vld [vmem:[#allocation9 + $0xb8] sm:$0xff]
        %v2222 = vld [vmem:[#allocation9 + $0xc0] sm:$0xff]
        %v2223 = vld [vmem:[#allocation9 + $0xc8] sm:$0xff]
        %v2224 = vld [vmem:[#allocation9 + $0xd0] sm:$0xff]
        %v2225 = vld [vmem:[#allocation9 + $0xd8] sm:$0xff]
        %v2226 = vld [vmem:[#allocation9 + $0xe0] sm:$0xff]
        %v2227 = vld [vmem:[#allocation9 + $0xe8] sm:$0xff]
        %v2228 = vld [vmem:[#allocation9 + $0xf0] sm:$0xff]
        %v2229 = vld [vmem:[#allocation9 + $0xf8] sm:$0xff]
        %v2230 = vld [vmem:[#allocation9 + $0x100] sm:$0xff]
        %v2231 = vld [vmem:[#allocation9 + $0x108] sm:$0xff]
        %v2232 = vld [vmem:[#allocation9 + $0x110] sm:$0xff]
        %v2233 = vld [vmem:[#allocation9 + $0x118] sm:$0xff]
        %v2234 = vld [vmem:[#allocation9 + $0x120] sm:$0xff]
        %v2235 = vld [vmem:[#allocation9 + $0x128] sm:$0xff]
        %v2236 = vld [vmem:[#allocation9 + $0x130] sm:$0xff]
        %v2237 = vld [vmem:[#allocation9 + $0x138] sm:$0xff]
        %v2238 = vld [vmem:[#allocation9 + $0x140] sm:$0xff]
        %v2239 = vld [vmem:[#allocation9 + $0x148] sm:$0xff]
        %v2240 = vld [vmem:[#allocation9 + $0x150] sm:$0xff]
        %v2241 = vld [vmem:[#allocation9 + $0x158] sm:$0xff]
        %v2242 = vld [vmem:[#allocation9 + $0x160] sm:$0xff]
        %v2243 = vld [vmem:[#allocation9 + $0x168] sm:$0xff]
        %v2244 = vld [vmem:[#allocation9 + $0x170] sm:$0xff]
        %v2245 = vld [vmem:[#allocation9 + $0x178] sm:$0xff]
        %2246 = vmatprep.subr.mxu0 %v2199
        %2247 = vmatpush1.msra.mxu0 %v2198
        %2248 = vmatprep.subr.mxu0 %v2202
        %2249 = vmatpush1.msra.mxu0 %v2201
        %2250 = vmatprep.subr.mxu0 %v2205
        %2251 = vmatpush1.msra.mxu0 %v2204
        %2252 = vmatprep.subr.mxu0 %v2208
        %2253 = vmatpush1.msra.mxu0 %v2207
        %2254 = vmatprep.subr.mxu0 %v2211
        %2255 = vmatpush1.msra.mxu0 %v2210
        %2256 = vmatprep.subr.mxu0 %v2214
        %2257 = vmatpush1.msra.mxu0 %v2213
        %2258 = vmatprep.subr.mxu0 %v2217
        %2259 = vmatpush1.msra.mxu0 %v2216
        %2260 = vmatprep.subr.mxu0 %v2220
        %2261 = vmatpush1.msra.mxu0 %v2219
        %2262 = vmatprep.subr.mxu0 %v2223
        %2263 = vmatpush1.msra.mxu0 %v2222
        %2264 = vmatprep.subr.mxu0 %v2226
        %2265 = vmatpush1.msra.mxu0 %v2225
        %2266 = vmatprep.subr.mxu0 %v2229
        %2267 = vmatpush1.msra.mxu0 %v2228
        %2268 = vmatprep.subr.mxu0 %v2232
        %2269 = vmatpush1.msra.mxu0 %v2231
        %2270 = vmatprep.subr.mxu0 %v2235
        %2271 = vmatpush1.msra.mxu0 %v2234
        %2272 = vmatprep.subr.mxu0 %v2238
        %2273 = vmatpush1.msra.mxu0 %v2237
        %2274 = vmatprep.subr.mxu0 %v2241
        %2275 = vmatpush1.msra.mxu0 %v2240
        %2276 = vmatprep.subr.mxu0 %v2244
        %2277 = vmatpush1.msra.mxu0 %v2243
        %2278 = vmatprep.subr.mxu0 0.0
        %2279 = vmatpush1.msra.mxu0 0.0
        %2280 = vmatprep.subr.mxu0 0.0
        %2281 = vmatpush1.msra.mxu0 0.0
        %2282 = vmatprep.subr.mxu0 0.0
        %2283 = vmatpush1.msra.mxu0 0.0
        %2284 = vmatprep.subr.mxu0 0.0
        %2285 = vmatpush1.msra.mxu0 0.0
        %2286 = vmatprep.subr.mxu0 0.0
        %2287 = vmatpush1.msra.mxu0 0.0
        %2288 = vmatprep.subr.mxu0 0.0
        %2289 = vmatpush1.msra.mxu0 0.0
        %2290 = vmatprep.subr.mxu0 0.0
        %2291 = vmatpush1.msra.mxu0 0.0
        %2292 = vmatprep.subr.mxu0 0.0
        %2293 = vmatpush1.msra.mxu0 0.0
        %2294 = vmatprep.subr.mxu0 0.0
        %2295 = vmatpush1.msra.mxu0 0.0
        %2296 = vmatprep.subr.mxu0 0.0
        %2297 = vmatpush1.msra.mxu0 0.0
        %2298 = vmatprep.subr.mxu0 0.0
        %2299 = vmatpush1.msra.mxu0 0.0
        %2300 = vmatprep.subr.mxu0 0.0
        %2301 = vmatpush1.msra.mxu0 0.0
        %2302 = vmatprep.subr.mxu0 0.0
        %2303 = vmatpush1.msra.mxu0 0.0
        %2304 = vmatprep.subr.mxu0 0.0
        %2305 = vmatpush1.msra.mxu0 0.0
        %2306 = vmatprep.subr.mxu0 0.0
        %2307 = vmatpush1.msra.mxu0 0.0
        %2308 = vmatprep.subr.mxu0 0.0
        %2309 = vmatpush1.msra.mxu0 0.0
        %2310 = vmatprep.mubr.f32.mxu0 0.0
        %2311 = vmatmul.mubr.f32.gmra.mrb[0].mxu0 %v2194
        %v2312 = vpop.f32.mrb[0].mxu0
        %v2313 = vadd.f32 0.0, %v2312
        %v2314 = vpop.f32.mrb[0].mxu0
        %v2315 = vadd.f32 0.0, %v2314
        %2316 = vdwg.mxu0
        %2317 = vmatprep.subr.mxu0 0.0
        %2318 = vmatpush1.msra.mxu0 %v2200
        %2319 = vmatprep.subr.mxu0 0.0
        %2320 = vmatpush1.msra.mxu0 %v2203
        %2321 = vmatprep.subr.mxu0 0.0
        %2322 = vmatpush1.msra.mxu0 %v2206
        %2323 = vmatprep.subr.mxu0 0.0
        %2324 = vmatpush1.msra.mxu0 %v2209
        %2325 = vmatprep.subr.mxu0 0.0
        %2326 = vmatpush1.msra.mxu0 %v2212
        %2327 = vmatprep.subr.mxu0 0.0
        %2328 = vmatpush1.msra.mxu0 %v2215
        %2329 = vmatprep.subr.mxu0 0.0
        %2330 = vmatpush1.msra.mxu0 %v2218
        %2331 = vmatprep.subr.mxu0 0.0
        %2332 = vmatpush1.msra.mxu0 %v2221
        %2333 = vmatprep.subr.mxu0 0.0
        %2334 = vmatpush1.msra.mxu0 %v2224
        %2335 = vmatprep.subr.mxu0 0.0
        %2336 = vmatpush1.msra.mxu0 %v2227
        %2337 = vmatprep.subr.mxu0 0.0
        %2338 = vmatpush1.msra.mxu0 %v2230
        %2339 = vmatprep.subr.mxu0 0.0
        %2340 = vmatpush1.msra.mxu0 %v2233
        %2341 = vmatprep.subr.mxu0 0.0
        %2342 = vmatpush1.msra.mxu0 %v2236
        %2343 = vmatprep.subr.mxu0 0.0
        %2344 = vmatpush1.msra.mxu0 %v2239
        %2345 = vmatprep.subr.mxu0 0.0
        %2346 = vmatpush1.msra.mxu0 %v2242
        %2347 = vmatprep.subr.mxu0 0.0
        %2348 = vmatpush1.msra.mxu0 %v2245
        %2349 = vmatprep.subr.mxu0 0.0
        %2350 = vmatpush1.msra.mxu0 0.0
        %2351 = vmatprep.subr.mxu0 0.0
        %2352 = vmatpush1.msra.mxu0 0.0
        %2353 = vmatprep.subr.mxu0 0.0
        %2354 = vmatpush1.msra.mxu0 0.0
        %2355 = vmatprep.subr.mxu0 0.0
        %2356 = vmatpush1.msra.mxu0 0.0
        %2357 = vmatprep.subr.mxu0 0.0
        %2358 = vmatpush1.msra.mxu0 0.0
        %2359 = vmatprep.subr.mxu0 0.0
        %2360 = vmatpush1.msra.mxu0 0.0
        %2361 = vmatprep.subr.mxu0 0.0
        %2362 = vmatpush1.msra.mxu0 0.0
        %2363 = vmatprep.subr.mxu0 0.0
        %2364 = vmatpush1.msra.mxu0 0.0
        %2365 = vmatprep.subr.mxu0 0.0
        %2366 = vmatpush1.msra.mxu0 0.0
        %2367 = vmatprep.subr.mxu0 0.0
        %2368 = vmatpush1.msra.mxu0 0.0
        %2369 = vmatprep.subr.mxu0 0.0
        %2370 = vmatpush1.msra.mxu0 0.0
        %2371 = vmatprep.subr.mxu0 0.0
        %2372 = vmatpush1.msra.mxu0 0.0
        %2373 = vmatprep.subr.mxu0 0.0
        %2374 = vmatpush1.msra.mxu0 0.0
        %2375 = vmatprep.subr.mxu0 0.0
        %2376 = vmatpush1.msra.mxu0 0.0
        %2377 = vmatprep.subr.mxu0 0.0
        %2378 = vmatpush1.msra.mxu0 0.0
        %2379 = vmatprep.subr.mxu0 0.0
        %2380 = vmatpush1.msra.mxu0 0.0
        %2381 = vmatprep.mubr.f32.mxu0 0.0
        %2382 = vmatmul.mubr.f32.gmra.mrb[0].mxu0 %v2194
        %v2383 = vpop.f32.mrb[0].mxu0
        %v2384 = vadd.f32 0.0, %v2383
        %v2385 = vpop.f32.mrb[0].mxu0
        %2386 = vdwg.mxu0
        %v2387 = vadd.f32 %v2197, %v2313
        %v2388 = vxor.u32 %v2387, 2147483648
        %v2389 = vmul.f32 %v2388, 1.442695
        %v2390 = vpow.pop %v2389
        %v2391 = vadd.f32 %v2390, 1.0
        %v2392 = vrcp.pop %v2391
        %v2393 = vmul.f32 1.0, %v2392
        %v2395 = vrot.slane %v2197, 2
        %v2397 = vadd.f32 %v2395, %v2315
        %v2398 = vxor.u32 %v2397, 2147483648
        %v2399 = vmul.f32 %v2398, 1.442695
        %v2400 = vpow.pop %v2399
        %v2401 = vadd.f32 %v2400, 1.0
        %v2402 = vrcp.pop %v2401
        %v2403 = vmul.f32 1.0, %v2402
        %v2404 = vadd.f32 %v2384, %v1757
        %v2405 = vmul.f32 %v2393, %v2404
        %v2406 = vrot.slane %v2197, 4
        %v2408 = vadd.f32 %v2406, %v2405
        %v2409 = vtanh.pop %v2408
        %v2410 = vsub.f32 1.0, %v2403
        %v2411 = vmul.f32 %v2410, %v2409
        %v2412 = vmul.f32 %v2403, %v2194
        %v2413 = vadd.f32 %v2411, %v2412
        %s2414 = scalar_lea.vmem %s288, 4 [#allocation10]
        %2415 = vst [vmem:[%s2414] sm:$0x3] %v2413
        %v2416 = vld [vmem:[%s1030] sm:$0x3f]
        %v2417 = vld [vmem:[#allocation9] sm:$0xff]
        %v2418 = vld [vmem:[#allocation9 + $0x8] sm:$0xff]
        %v2419 = vld [vmem:[#allocation9 + $0x10] sm:$0xff]
        %v2420 = vld [vmem:[#allocation9 + $0x18] sm:$0xff]
        %v2421 = vld [vmem:[#allocation9 + $0x20] sm:$0xff]
        %v2422 = vld [vmem:[#allocation9 + $0x28] sm:$0xff]
        %v2423 = vld [vmem:[#allocation9 + $0x30] sm:$0xff]
        %v2424 = vld [vmem:[#allocation9 + $0x38] sm:$0xff]
        %v2425 = vld [vmem:[#allocation9 + $0x40] sm:$0xff]
        %v2426 = vld [vmem:[#allocation9 + $0x48] sm:$0xff]
        %v2427 = vld [vmem:[#allocation9 + $0x50] sm:$0xff]
        %v2428 = vld [vmem:[#allocation9 + $0x58] sm:$0xff]
        %v2429 = vld [vmem:[#allocation9 + $0x60] sm:$0xff]
        %v2430 = vld [vmem:[#allocation9 + $0x68] sm:$0xff]
        %v2431 = vld [vmem:[#allocation9 + $0x70] sm:$0xff]
        %v2432 = vld [vmem:[#allocation9 + $0x78] sm:$0xff]
        %v2433 = vld [vmem:[#allocation9 + $0x80] sm:$0xff]
        %v2434 = vld [vmem:[#allocation9 + $0x88] sm:$0xff]
        %v2435 = vld [vmem:[#allocation9 + $0x90] sm:$0xff]
        %v2436 = vld [vmem:[#allocation9 + $0x98] sm:$0xff]
        %v2437 = vld [vmem:[#allocation9 + $0xa0] sm:$0xff]
        %v2438 = vld [vmem:[#allocation9 + $0xa8] sm:$0xff]
        %v2439 = vld [vmem:[#allocation9 + $0xb0] sm:$0xff]
        %v2440 = vld [vmem:[#allocation9 + $0xb8] sm:$0xff]
        %v2441 = vld [vmem:[#allocation9 + $0xc0] sm:$0xff]
        %v2442 = vld [vmem:[#allocation9 + $0xc8] sm:$0xff]
        %v2443 = vld [vmem:[#allocation9 + $0xd0] sm:$0xff]
        %v2444 = vld [vmem:[#allocation9 + $0xd8] sm:$0xff]
        %v2445 = vld [vmem:[#allocation9 + $0xe0] sm:$0xff]
        %v2446 = vld [vmem:[#allocation9 + $0xe8] sm:$0xff]
        %v2447 = vld [vmem:[#allocation9 + $0xf0] sm:$0xff]
        %v2448 = vld [vmem:[#allocation9 + $0xf8] sm:$0xff]
        %v2449 = vld [vmem:[#allocation9 + $0x100] sm:$0xff]
        %v2450 = vld [vmem:[#allocation9 + $0x108] sm:$0xff]
        %v2451 = vld [vmem:[#allocation9 + $0x110] sm:$0xff]
        %v2452 = vld [vmem:[#allocation9 + $0x118] sm:$0xff]
        %v2453 = vld [vmem:[#allocation9 + $0x120] sm:$0xff]
        %v2454 = vld [vmem:[#allocation9 + $0x128] sm:$0xff]
        %v2455 = vld [vmem:[#allocation9 + $0x130] sm:$0xff]
        %v2456 = vld [vmem:[#allocation9 + $0x138] sm:$0xff]
        %v2457 = vld [vmem:[#allocation9 + $0x140] sm:$0xff]
        %v2458 = vld [vmem:[#allocation9 + $0x148] sm:$0xff]
        %v2459 = vld [vmem:[#allocation9 + $0x150] sm:$0xff]
        %v2460 = vld [vmem:[#allocation9 + $0x158] sm:$0xff]
        %v2461 = vld [vmem:[#allocation9 + $0x160] sm:$0xff]
        %v2462 = vld [vmem:[#allocation9 + $0x168] sm:$0xff]
        %v2463 = vld [vmem:[#allocation9 + $0x170] sm:$0xff]
        %v2464 = vld [vmem:[#allocation9 + $0x178] sm:$0xff]
        %2465 = vmatprep.subr.mxu0 %v2418
        %2466 = vmatpush1.msra.mxu0 %v2417
        %2467 = vmatprep.subr.mxu0 %v2421
        %2468 = vmatpush1.msra.mxu0 %v2420
        %2469 = vmatprep.subr.mxu0 %v2424
        %2470 = vmatpush1.msra.mxu0 %v2423
        %2471 = vmatprep.subr.mxu0 %v2427
        %2472 = vmatpush1.msra.mxu0 %v2426
        %2473 = vmatprep.subr.mxu0 %v2430
        %2474 = vmatpush1.msra.mxu0 %v2429
        %2475 = vmatprep.subr.mxu0 %v2433
        %2476 = vmatpush1.msra.mxu0 %v2432
        %2477 = vmatprep.subr.mxu0 %v2436
        %2478 = vmatpush1.msra.mxu0 %v2435
        %2479 = vmatprep.subr.mxu0 %v2439
        %2480 = vmatpush1.msra.mxu0 %v2438
        %2481 = vmatprep.subr.mxu0 %v2442
        %2482 = vmatpush1.msra.mxu0 %v2441
        %2483 = vmatprep.subr.mxu0 %v2445
        %2484 = vmatpush1.msra.mxu0 %v2444
        %2485 = vmatprep.subr.mxu0 %v2448
        %2486 = vmatpush1.msra.mxu0 %v2447
        %2487 = vmatprep.subr.mxu0 %v2451
        %2488 = vmatpush1.msra.mxu0 %v2450
        %2489 = vmatprep.subr.mxu0 %v2454
        %2490 = vmatpush1.msra.mxu0 %v2453
        %2491 = vmatprep.subr.mxu0 %v2457
        %2492 = vmatpush1.msra.mxu0 %v2456
        %2493 = vmatprep.subr.mxu0 %v2460
        %2494 = vmatpush1.msra.mxu0 %v2459
        %2495 = vmatprep.subr.mxu0 %v2463
        %2496 = vmatpush1.msra.mxu0 %v2462
        %2497 = vmatprep.subr.mxu0 0.0
        %2498 = vmatpush1.msra.mxu0 0.0
        %2499 = vmatprep.subr.mxu0 0.0
        %2500 = vmatpush1.msra.mxu0 0.0
        %2501 = vmatprep.subr.mxu0 0.0
        %2502 = vmatpush1.msra.mxu0 0.0
        %2503 = vmatprep.subr.mxu0 0.0
        %2504 = vmatpush1.msra.mxu0 0.0
        %2505 = vmatprep.subr.mxu0 0.0
        %2506 = vmatpush1.msra.mxu0 0.0
        %2507 = vmatprep.subr.mxu0 0.0
        %2508 = vmatpush1.msra.mxu0 0.0
        %2509 = vmatprep.subr.mxu0 0.0
        %2510 = vmatpush1.msra.mxu0 0.0
        %2511 = vmatprep.subr.mxu0 0.0
        %2512 = vmatpush1.msra.mxu0 0.0
        %2513 = vmatprep.subr.mxu0 0.0
        %2514 = vmatpush1.msra.mxu0 0.0
        %2515 = vmatprep.subr.mxu0 0.0
        %2516 = vmatpush1.msra.mxu0 0.0
        %2517 = vmatprep.subr.mxu0 0.0
        %2518 = vmatpush1.msra.mxu0 0.0
        %2519 = vmatprep.subr.mxu0 0.0
        %2520 = vmatpush1.msra.mxu0 0.0
        %2521 = vmatprep.subr.mxu0 0.0
        %2522 = vmatpush1.msra.mxu0 0.0
        %2523 = vmatprep.subr.mxu0 0.0
        %2524 = vmatpush1.msra.mxu0 0.0
        %2525 = vmatprep.subr.mxu0 0.0
        %2526 = vmatpush1.msra.mxu0 0.0
        %2527 = vmatprep.subr.mxu0 0.0
        %2528 = vmatpush1.msra.mxu0 0.0
        %2529 = vmatprep.mubr.f32.mxu0 0.0
        %2530 = vmatmul.mubr.f32.gmra.mrb[0].mxu0 %v2413
        %v2531 = vpop.f32.mrb[0].mxu0
        %v2532 = vadd.f32 0.0, %v2531
        %v2533 = vpop.f32.mrb[0].mxu0
        %v2534 = vadd.f32 0.0, %v2533
        %2535 = vdwg.mxu0
        %2536 = vmatprep.subr.mxu0 0.0
        %2537 = vmatpush1.msra.mxu0 %v2419
        %2538 = vmatprep.subr.mxu0 0.0
        %2539 = vmatpush1.msra.mxu0 %v2422
        %2540 = vmatprep.subr.mxu0 0.0
        %2541 = vmatpush1.msra.mxu0 %v2425
        %2542 = vmatprep.subr.mxu0 0.0
        %2543 = vmatpush1.msra.mxu0 %v2428
        %2544 = vmatprep.subr.mxu0 0.0
        %2545 = vmatpush1.msra.mxu0 %v2431
        %2546 = vmatprep.subr.mxu0 0.0
        %2547 = vmatpush1.msra.mxu0 %v2434
        %2548 = vmatprep.subr.mxu0 0.0
        %2549 = vmatpush1.msra.mxu0 %v2437
        %2550 = vmatprep.subr.mxu0 0.0
        %2551 = vmatpush1.msra.mxu0 %v2440
        %2552 = vmatprep.subr.mxu0 0.0
        %2553 = vmatpush1.msra.mxu0 %v2443
        %2554 = vmatprep.subr.mxu0 0.0
        %2555 = vmatpush1.msra.mxu0 %v2446
        %2556 = vmatprep.subr.mxu0 0.0
        %2557 = vmatpush1.msra.mxu0 %v2449
        %2558 = vmatprep.subr.mxu0 0.0
        %2559 = vmatpush1.msra.mxu0 %v2452
        %2560 = vmatprep.subr.mxu0 0.0
        %2561 = vmatpush1.msra.mxu0 %v2455
        %2562 = vmatprep.subr.mxu0 0.0
        %2563 = vmatpush1.msra.mxu0 %v2458
        %2564 = vmatprep.subr.mxu0 0.0
        %2565 = vmatpush1.msra.mxu0 %v2461
        %2566 = vmatprep.subr.mxu0 0.0
        %2567 = vmatpush1.msra.mxu0 %v2464
        %2568 = vmatprep.subr.mxu0 0.0
        %2569 = vmatpush1.msra.mxu0 0.0
        %2570 = vmatprep.subr.mxu0 0.0
        %2571 = vmatpush1.msra.mxu0 0.0
        %2572 = vmatprep.subr.mxu0 0.0
        %2573 = vmatpush1.msra.mxu0 0.0
        %2574 = vmatprep.subr.mxu0 0.0
        %2575 = vmatpush1.msra.mxu0 0.0
        %2576 = vmatprep.subr.mxu0 0.0
        %2577 = vmatpush1.msra.mxu0 0.0
        %2578 = vmatprep.subr.mxu0 0.0
        %2579 = vmatpush1.msra.mxu0 0.0
        %2580 = vmatprep.subr.mxu0 0.0
        %2581 = vmatpush1.msra.mxu0 0.0
        %2582 = vmatprep.subr.mxu0 0.0
        %2583 = vmatpush1.msra.mxu0 0.0
        %2584 = vmatprep.subr.mxu0 0.0
        %2585 = vmatpush1.msra.mxu0 0.0
        %2586 = vmatprep.subr.mxu0 0.0
        %2587 = vmatpush1.msra.mxu0 0.0
        %2588 = vmatprep.subr.mxu0 0.0
        %2589 = vmatpush1.msra.mxu0 0.0
        %2590 = vmatprep.subr.mxu0 0.0
        %2591 = vmatpush1.msra.mxu0 0.0
        %2592 = vmatprep.subr.mxu0 0.0
        %2593 = vmatpush1.msra.mxu0 0.0
        %2594 = vmatprep.subr.mxu0 0.0
        %2595 = vmatpush1.msra.mxu0 0.0
        %2596 = vmatprep.subr.mxu0 0.0
        %2597 = vmatpush1.msra.mxu0 0.0
        %2598 = vmatprep.subr.mxu0 0.0
        %2599 = vmatpush1.msra.mxu0 0.0
        %2600 = vmatprep.mubr.f32.mxu0 0.0
        %2601 = vmatmul.mubr.f32.gmra.mrb[0].mxu0 %v2413
        %v2602 = vpop.f32.mrb[0].mxu0
        %v2603 = vadd.f32 0.0, %v2602
        %v2604 = vpop.f32.mrb[0].mxu0
        %2605 = vdwg.mxu0
        %v2606 = vadd.f32 %v2416, %v2532
        %v2607 = vxor.u32 %v2606, 2147483648
        %v2608 = vmul.f32 %v2607, 1.442695
        %v2609 = vpow.pop %v2608
        %v2610 = vadd.f32 %v2609, 1.0
        %v2611 = vrcp.pop %v2610
        %v2612 = vmul.f32 1.0, %v2611
        %v2614 = vrot.slane %v2416, 2
        %v2616 = vadd.f32 %v2614, %v2534
        %v2617 = vxor.u32 %v2616, 2147483648
        %v2618 = vmul.f32 %v2617, 1.442695
        %v2619 = vpow.pop %v2618
        %v2620 = vadd.f32 %v2619, 1.0
        %v2621 = vrcp.pop %v2620
        %v2622 = vmul.f32 1.0, %v2621
        %v2623 = vadd.f32 %v2603, %v1757
        %v2624 = vmul.f32 %v2612, %v2623
        %v2625 = vrot.slane %v2416, 4
        %v2627 = vadd.f32 %v2625, %v2624
        %v2628 = vtanh.pop %v2627
        %v2629 = vsub.f32 1.0, %v2622
        %v2630 = vmul.f32 %v2629, %v2628
        %v2631 = vmul.f32 %v2622, %v2413
        %v2632 = vadd.f32 %v2630, %v2631
        %s2633 = scalar_lea.vmem %s288, 6 [#allocation10]
        %2634 = vst [vmem:[%s2633] sm:$0x3] %v2632
        %v2635 = vld [vmem:[%s1210] sm:$0x3f]
        %v2636 = vld [vmem:[#allocation9] sm:$0xff]
        %v2637 = vld [vmem:[#allocation9 + $0x8] sm:$0xff]
        %v2638 = vld [vmem:[#allocation9 + $0x10] sm:$0xff]
        %v2639 = vld [vmem:[#allocation9 + $0x18] sm:$0xff]
        %v2640 = vld [vmem:[#allocation9 + $0x20] sm:$0xff]
        %v2641 = vld [vmem:[#allocation9 + $0x28] sm:$0xff]
        %v2642 = vld [vmem:[#allocation9 + $0x30] sm:$0xff]
        %v2643 = vld [vmem:[#allocation9 + $0x38] sm:$0xff]
        %v2644 = vld [vmem:[#allocation9 + $0x40] sm:$0xff]
        %v2645 = vld [vmem:[#allocation9 + $0x48] sm:$0xff]
        %v2646 = vld [vmem:[#allocation9 + $0x50] sm:$0xff]
        %v2647 = vld [vmem:[#allocation9 + $0x58] sm:$0xff]
        %v2648 = vld [vmem:[#allocation9 + $0x60] sm:$0xff]
        %v2649 = vld [vmem:[#allocation9 + $0x68] sm:$0xff]
        %v2650 = vld [vmem:[#allocation9 + $0x70] sm:$0xff]
        %v2651 = vld [vmem:[#allocation9 + $0x78] sm:$0xff]
        %v2652 = vld [vmem:[#allocation9 + $0x80] sm:$0xff]
        %v2653 = vld [vmem:[#allocation9 + $0x88] sm:$0xff]
        %v2654 = vld [vmem:[#allocation9 + $0x90] sm:$0xff]
        %v2655 = vld [vmem:[#allocation9 + $0x98] sm:$0xff]
        %v2656 = vld [vmem:[#allocation9 + $0xa0] sm:$0xff]
        %v2657 = vld [vmem:[#allocation9 + $0xa8] sm:$0xff]
        %v2658 = vld [vmem:[#allocation9 + $0xb0] sm:$0xff]
        %v2659 = vld [vmem:[#allocation9 + $0xb8] sm:$0xff]
        %v2660 = vld [vmem:[#allocation9 + $0xc0] sm:$0xff]
        %v2661 = vld [vmem:[#allocation9 + $0xc8] sm:$0xff]
        %v2662 = vld [vmem:[#allocation9 + $0xd0] sm:$0xff]
        %v2663 = vld [vmem:[#allocation9 + $0xd8] sm:$0xff]
        %v2664 = vld [vmem:[#allocation9 + $0xe0] sm:$0xff]
        %v2665 = vld [vmem:[#allocation9 + $0xe8] sm:$0xff]
        %v2666 = vld [vmem:[#allocation9 + $0xf0] sm:$0xff]
        %v2667 = vld [vmem:[#allocation9 + $0xf8] sm:$0xff]
        %v2668 = vld [vmem:[#allocation9 + $0x100] sm:$0xff]
        %v2669 = vld [vmem:[#allocation9 + $0x108] sm:$0xff]
        %v2670 = vld [vmem:[#allocation9 + $0x110] sm:$0xff]
        %v2671 = vld [vmem:[#allocation9 + $0x118] sm:$0xff]
        %v2672 = vld [vmem:[#allocation9 + $0x120] sm:$0xff]
        %v2673 = vld [vmem:[#allocation9 + $0x128] sm:$0xff]
        %v2674 = vld [vmem:[#allocation9 + $0x130] sm:$0xff]
        %v2675 = vld [vmem:[#allocation9 + $0x138] sm:$0xff]
        %v2676 = vld [vmem:[#allocation9 + $0x140] sm:$0xff]
        %v2677 = vld [vmem:[#allocation9 + $0x148] sm:$0xff]
        %v2678 = vld [vmem:[#allocation9 + $0x150] sm:$0xff]
        %v2679 = vld [vmem:[#allocation9 + $0x158] sm:$0xff]
        %v2680 = vld [vmem:[#allocation9 + $0x160] sm:$0xff]
        %v2681 = vld [vmem:[#allocation9 + $0x168] sm:$0xff]
        %v2682 = vld [vmem:[#allocation9 + $0x170] sm:$0xff]
        %v2683 = vld [vmem:[#allocation9 + $0x178] sm:$0xff]
        %2684 = vmatprep.subr.mxu0 %v2637
        %2685 = vmatpush1.msra.mxu0 %v2636
        %2686 = vmatprep.subr.mxu0 %v2640
        %2687 = vmatpush1.msra.mxu0 %v2639
        %2688 = vmatprep.subr.mxu0 %v2643
        %2689 = vmatpush1.msra.mxu0 %v2642
        %2690 = vmatprep.subr.mxu0 %v2646
        %2691 = vmatpush1.msra.mxu0 %v2645
        %2692 = vmatprep.subr.mxu0 %v2649
        %2693 = vmatpush1.msra.mxu0 %v2648
        %2694 = vmatprep.subr.mxu0 %v2652
        %2695 = vmatpush1.msra.mxu0 %v2651
        %2696 = vmatprep.subr.mxu0 %v2655
        %2697 = vmatpush1.msra.mxu0 %v2654
        %2698 = vmatprep.subr.mxu0 %v2658
        %2699 = vmatpush1.msra.mxu0 %v2657
        %2700 = vmatprep.subr.mxu0 %v2661
        %2701 = vmatpush1.msra.mxu0 %v2660
        %2702 = vmatprep.subr.mxu0 %v2664
        %2703 = vmatpush1.msra.mxu0 %v2663
        %2704 = vmatprep.subr.mxu0 %v2667
        %2705 = vmatpush1.msra.mxu0 %v2666
        %2706 = vmatprep.subr.mxu0 %v2670
        %2707 = vmatpush1.msra.mxu0 %v2669
        %2708 = vmatprep.subr.mxu0 %v2673
        %2709 = vmatpush1.msra.mxu0 %v2672
        %2710 = vmatprep.subr.mxu0 %v2676
        %2711 = vmatpush1.msra.mxu0 %v2675
        %2712 = vmatprep.subr.mxu0 %v2679
        %2713 = vmatpush1.msra.mxu0 %v2678
        %2714 = vmatprep.subr.mxu0 %v2682
        %2715 = vmatpush1.msra.mxu0 %v2681
        %2716 = vmatprep.subr.mxu0 0.0
        %2717 = vmatpush1.msra.mxu0 0.0
        %2718 = vmatprep.subr.mxu0 0.0
        %2719 = vmatpush1.msra.mxu0 0.0
        %2720 = vmatprep.subr.mxu0 0.0
        %2721 = vmatpush1.msra.mxu0 0.0
        %2722 = vmatprep.subr.mxu0 0.0
        %2723 = vmatpush1.msra.mxu0 0.0
        %2724 = vmatprep.subr.mxu0 0.0
        %2725 = vmatpush1.msra.mxu0 0.0
        %2726 = vmatprep.subr.mxu0 0.0
        %2727 = vmatpush1.msra.mxu0 0.0
        %2728 = vmatprep.subr.mxu0 0.0
        %2729 = vmatpush1.msra.mxu0 0.0
        %2730 = vmatprep.subr.mxu0 0.0
        %2731 = vmatpush1.msra.mxu0 0.0
        %2732 = vmatprep.subr.mxu0 0.0
        %2733 = vmatpush1.msra.mxu0 0.0
        %2734 = vmatprep.subr.mxu0 0.0
        %2735 = vmatpush1.msra.mxu0 0.0
        %2736 = vmatprep.subr.mxu0 0.0
        %2737 = vmatpush1.msra.mxu0 0.0
        %2738 = vmatprep.subr.mxu0 0.0
        %2739 = vmatpush1.msra.mxu0 0.0
        %2740 = vmatprep.subr.mxu0 0.0
        %2741 = vmatpush1.msra.mxu0 0.0
        %2742 = vmatprep.subr.mxu0 0.0
        %2743 = vmatpush1.msra.mxu0 0.0
        %2744 = vmatprep.subr.mxu0 0.0
        %2745 = vmatpush1.msra.mxu0 0.0
        %2746 = vmatprep.subr.mxu0 0.0
        %2747 = vmatpush1.msra.mxu0 0.0
        %2748 = vmatprep.mubr.f32.mxu0 0.0
        %2749 = vmatmul.mubr.f32.gmra.mrb[0].mxu0 %v2632
        %v2750 = vpop.f32.mrb[0].mxu0
        %v2751 = vadd.f32 0.0, %v2750
        %v2752 = vpop.f32.mrb[0].mxu0
        %v2753 = vadd.f32 0.0, %v2752
        %2754 = vdwg.mxu0
        %2755 = vmatprep.subr.mxu0 0.0
        %2756 = vmatpush1.msra.mxu0 %v2638
        %2757 = vmatprep.subr.mxu0 0.0
        %2758 = vmatpush1.msra.mxu0 %v2641
        %2759 = vmatprep.subr.mxu0 0.0
        %2760 = vmatpush1.msra.mxu0 %v2644
        %2761 = vmatprep.subr.mxu0 0.0
        %2762 = vmatpush1.msra.mxu0 %v2647
        %2763 = vmatprep.subr.mxu0 0.0
        %2764 = vmatpush1.msra.mxu0 %v2650
        %2765 = vmatprep.subr.mxu0 0.0
        %2766 = vmatpush1.msra.mxu0 %v2653
        %2767 = vmatprep.subr.mxu0 0.0
        %2768 = vmatpush1.msra.mxu0 %v2656
        %2769 = vmatprep.subr.mxu0 0.0
        %2770 = vmatpush1.msra.mxu0 %v2659
        %2771 = vmatprep.subr.mxu0 0.0
        %2772 = vmatpush1.msra.mxu0 %v2662
        %2773 = vmatprep.subr.mxu0 0.0
        %2774 = vmatpush1.msra.mxu0 %v2665
        %2775 = vmatprep.subr.mxu0 0.0
        %2776 = vmatpush1.msra.mxu0 %v2668
        %2777 = vmatprep.subr.mxu0 0.0
        %2778 = vmatpush1.msra.mxu0 %v2671
        %2779 = vmatprep.subr.mxu0 0.0
        %2780 = vmatpush1.msra.mxu0 %v2674
        %2781 = vmatprep.subr.mxu0 0.0
        %2782 = vmatpush1.msra.mxu0 %v2677
        %2783 = vmatprep.subr.mxu0 0.0
        %2784 = vmatpush1.msra.mxu0 %v2680
        %2785 = vmatprep.subr.mxu0 0.0
        %2786 = vmatpush1.msra.mxu0 %v2683
        %2787 = vmatprep.subr.mxu0 0.0
        %2788 = vmatpush1.msra.mxu0 0.0
        %2789 = vmatprep.subr.mxu0 0.0
        %2790 = vmatpush1.msra.mxu0 0.0
        %2791 = vmatprep.subr.mxu0 0.0
        %2792 = vmatpush1.msra.mxu0 0.0
        %2793 = vmatprep.subr.mxu0 0.0
        %2794 = vmatpush1.msra.mxu0 0.0
        %2795 = vmatprep.subr.mxu0 0.0
        %2796 = vmatpush1.msra.mxu0 0.0
        %2797 = vmatprep.subr.mxu0 0.0
        %2798 = vmatpush1.msra.mxu0 0.0
        %2799 = vmatprep.subr.mxu0 0.0
        %2800 = vmatpush1.msra.mxu0 0.0
        %2801 = vmatprep.subr.mxu0 0.0
        %2802 = vmatpush1.msra.mxu0 0.0
        %2803 = vmatprep.subr.mxu0 0.0
        %2804 = vmatpush1.msra.mxu0 0.0
        %2805 = vmatprep.subr.mxu0 0.0
        %2806 = vmatpush1.msra.mxu0 0.0
        %2807 = vmatprep.subr.mxu0 0.0
        %2808 = vmatpush1.msra.mxu0 0.0
        %2809 = vmatprep.subr.mxu0 0.0
        %2810 = vmatpush1.msra.mxu0 0.0
        %2811 = vmatprep.subr.mxu0 0.0
        %2812 = vmatpush1.msra.mxu0 0.0
        %2813 = vmatprep.subr.mxu0 0.0
        %2814 = vmatpush1.msra.mxu0 0.0
        %2815 = vmatprep.subr.mxu0 0.0
        %2816 = vmatpush1.msra.mxu0 0.0
        %2817 = vmatprep.subr.mxu0 0.0
        %2818 = vmatpush1.msra.mxu0 0.0
        %2819 = vmatprep.mubr.f32.mxu0 0.0
        %2820 = vmatmul.mubr.f32.gmra.mrb[0].mxu0 %v2632
        %v2821 = vpop.f32.mrb[0].mxu0
        %v2822 = vadd.f32 0.0, %v2821
        %v2823 = vpop.f32.mrb[0].mxu0
        %2824 = vdwg.mxu0
        %v2825 = vadd.f32 %v2635, %v2751
        %v2826 = vxor.u32 %v2825, 2147483648
        %v2827 = vmul.f32 %v2826, 1.442695
        %v2828 = vpow.pop %v2827
        %v2829 = vadd.f32 %v2828, 1.0
        %v2830 = vrcp.pop %v2829
        %v2831 = vmul.f32 1.0, %v2830
        %v2833 = vrot.slane %v2635, 2
        %v2835 = vadd.f32 %v2833, %v2753
        %v2836 = vxor.u32 %v2835, 2147483648
        %v2837 = vmul.f32 %v2836, 1.442695
        %v2838 = vpow.pop %v2837
        %v2839 = vadd.f32 %v2838, 1.0
        %v2840 = vrcp.pop %v2839
        %v2841 = vmul.f32 1.0, %v2840
        %v2842 = vadd.f32 %v2822, %v1757
        %v2843 = vmul.f32 %v2831, %v2842
        %v2844 = vrot.slane %v2635, 4
        %v2846 = vadd.f32 %v2844, %v2843
        %v2847 = vtanh.pop %v2846
        %v2848 = vsub.f32 1.0, %v2841
        %v2849 = vmul.f32 %v2848, %v2847
        %v2850 = vmul.f32 %v2841, %v2632
        %v2851 = vadd.f32 %v2849, %v2850
        %s2852 = scalar_lea.vmem %s288, 8 [#allocation10]
        %2853 = vst [vmem:[%s2852] sm:$0x3] %v2851
        %v2854 = vld [vmem:[%s1390] sm:$0x3f]
        %v2855 = vld [vmem:[#allocation9] sm:$0xff]
        %v2856 = vld [vmem:[#allocation9 + $0x8] sm:$0xff]
        %v2857 = vld [vmem:[#allocation9 + $0x10] sm:$0xff]
        %v2858 = vld [vmem:[#allocation9 + $0x18] sm:$0xff]
        %v2859 = vld [vmem:[#allocation9 + $0x20] sm:$0xff]
        %v2860 = vld [vmem:[#allocation9 + $0x28] sm:$0xff]
        %v2861 = vld [vmem:[#allocation9 + $0x30] sm:$0xff]
        %v2862 = vld [vmem:[#allocation9 + $0x38] sm:$0xff]
        %v2863 = vld [vmem:[#allocation9 + $0x40] sm:$0xff]
        %v2864 = vld [vmem:[#allocation9 + $0x48] sm:$0xff]
        %v2865 = vld [vmem:[#allocation9 + $0x50] sm:$0xff]
        %v2866 = vld [vmem:[#allocation9 + $0x58] sm:$0xff]
        %v2867 = vld [vmem:[#allocation9 + $0x60] sm:$0xff]
        %v2868 = vld [vmem:[#allocation9 + $0x68] sm:$0xff]
        %v2869 = vld [vmem:[#allocation9 + $0x70] sm:$0xff]
        %v2870 = vld [vmem:[#allocation9 + $0x78] sm:$0xff]
        %v2871 = vld [vmem:[#allocation9 + $0x80] sm:$0xff]
        %v2872 = vld [vmem:[#allocation9 + $0x88] sm:$0xff]
        %v2873 = vld [vmem:[#allocation9 + $0x90] sm:$0xff]
        %v2874 = vld [vmem:[#allocation9 + $0x98] sm:$0xff]
        %v2875 = vld [vmem:[#allocation9 + $0xa0] sm:$0xff]
        %v2876 = vld [vmem:[#allocation9 + $0xa8] sm:$0xff]
        %v2877 = vld [vmem:[#allocation9 + $0xb0] sm:$0xff]
        %v2878 = vld [vmem:[#allocation9 + $0xb8] sm:$0xff]
        %v2879 = vld [vmem:[#allocation9 + $0xc0] sm:$0xff]
        %v2880 = vld [vmem:[#allocation9 + $0xc8] sm:$0xff]
        %v2881 = vld [vmem:[#allocation9 + $0xd0] sm:$0xff]
        %v2882 = vld [vmem:[#allocation9 + $0xd8] sm:$0xff]
        %v2883 = vld [vmem:[#allocation9 + $0xe0] sm:$0xff]
        %v2884 = vld [vmem:[#allocation9 + $0xe8] sm:$0xff]
        %v2885 = vld [vmem:[#allocation9 + $0xf0] sm:$0xff]
        %v2886 = vld [vmem:[#allocation9 + $0xf8] sm:$0xff]
        %v2887 = vld [vmem:[#allocation9 + $0x100] sm:$0xff]
        %v2888 = vld [vmem:[#allocation9 + $0x108] sm:$0xff]
        %v2889 = vld [vmem:[#allocation9 + $0x110] sm:$0xff]
        %v2890 = vld [vmem:[#allocation9 + $0x118] sm:$0xff]
        %v2891 = vld [vmem:[#allocation9 + $0x120] sm:$0xff]
        %v2892 = vld [vmem:[#allocation9 + $0x128] sm:$0xff]
        %v2893 = vld [vmem:[#allocation9 + $0x130] sm:$0xff]
        %v2894 = vld [vmem:[#allocation9 + $0x138] sm:$0xff]
        %v2895 = vld [vmem:[#allocation9 + $0x140] sm:$0xff]
        %v2896 = vld [vmem:[#allocation9 + $0x148] sm:$0xff]
        %v2897 = vld [vmem:[#allocation9 + $0x150] sm:$0xff]
        %v2898 = vld [vmem:[#allocation9 + $0x158] sm:$0xff]
        %v2899 = vld [vmem:[#allocation9 + $0x160] sm:$0xff]
        %v2900 = vld [vmem:[#allocation9 + $0x168] sm:$0xff]
        %v2901 = vld [vmem:[#allocation9 + $0x170] sm:$0xff]
        %v2902 = vld [vmem:[#allocation9 + $0x178] sm:$0xff]
        %2903 = vmatprep.subr.mxu0 %v2856
        %2904 = vmatpush1.msra.mxu0 %v2855
        %2905 = vmatprep.subr.mxu0 %v2859
        %2906 = vmatpush1.msra.mxu0 %v2858
        %2907 = vmatprep.subr.mxu0 %v2862
        %2908 = vmatpush1.msra.mxu0 %v2861
        %2909 = vmatprep.subr.mxu0 %v2865
        %2910 = vmatpush1.msra.mxu0 %v2864
        %2911 = vmatprep.subr.mxu0 %v2868
        %2912 = vmatpush1.msra.mxu0 %v2867
        %2913 = vmatprep.subr.mxu0 %v2871
        %2914 = vmatpush1.msra.mxu0 %v2870
        %2915 = vmatprep.subr.mxu0 %v2874
        %2916 = vmatpush1.msra.mxu0 %v2873
        %2917 = vmatprep.subr.mxu0 %v2877
        %2918 = vmatpush1.msra.mxu0 %v2876
        %2919 = vmatprep.subr.mxu0 %v2880
        %2920 = vmatpush1.msra.mxu0 %v2879
        %2921 = vmatprep.subr.mxu0 %v2883
        %2922 = vmatpush1.msra.mxu0 %v2882
        %2923 = vmatprep.subr.mxu0 %v2886
        %2924 = vmatpush1.msra.mxu0 %v2885
        %2925 = vmatprep.subr.mxu0 %v2889
        %2926 = vmatpush1.msra.mxu0 %v2888
        %2927 = vmatprep.subr.mxu0 %v2892
        %2928 = vmatpush1.msra.mxu0 %v2891
        %2929 = vmatprep.subr.mxu0 %v2895
        %2930 = vmatpush1.msra.mxu0 %v2894
        %2931 = vmatprep.subr.mxu0 %v2898
        %2932 = vmatpush1.msra.mxu0 %v2897
        %2933 = vmatprep.subr.mxu0 %v2901
        %2934 = vmatpush1.msra.mxu0 %v2900
        %2935 = vmatprep.subr.mxu0 0.0
        %2936 = vmatpush1.msra.mxu0 0.0
        %2937 = vmatprep.subr.mxu0 0.0
        %2938 = vmatpush1.msra.mxu0 0.0
        %2939 = vmatprep.subr.mxu0 0.0
        %2940 = vmatpush1.msra.mxu0 0.0
        %2941 = vmatprep.subr.mxu0 0.0
        %2942 = vmatpush1.msra.mxu0 0.0
        %2943 = vmatprep.subr.mxu0 0.0
        %2944 = vmatpush1.msra.mxu0 0.0
        %2945 = vmatprep.subr.mxu0 0.0
        %2946 = vmatpush1.msra.mxu0 0.0
        %2947 = vmatprep.subr.mxu0 0.0
        %2948 = vmatpush1.msra.mxu0 0.0
        %2949 = vmatprep.subr.mxu0 0.0
        %2950 = vmatpush1.msra.mxu0 0.0
        %2951 = vmatprep.subr.mxu0 0.0
        %2952 = vmatpush1.msra.mxu0 0.0
        %2953 = vmatprep.subr.mxu0 0.0
        %2954 = vmatpush1.msra.mxu0 0.0
        %2955 = vmatprep.subr.mxu0 0.0
        %2956 = vmatpush1.msra.mxu0 0.0
        %2957 = vmatprep.subr.mxu0 0.0
        %2958 = vmatpush1.msra.mxu0 0.0
        %2959 = vmatprep.subr.mxu0 0.0
        %2960 = vmatpush1.msra.mxu0 0.0
        %2961 = vmatprep.subr.mxu0 0.0
        %2962 = vmatpush1.msra.mxu0 0.0
        %2963 = vmatprep.subr.mxu0 0.0
        %2964 = vmatpush1.msra.mxu0 0.0
        %2965 = vmatprep.subr.mxu0 0.0
        %2966 = vmatpush1.msra.mxu0 0.0
        %2967 = vmatprep.mubr.f32.mxu0 0.0
        %2968 = vmatmul.mubr.f32.gmra.mrb[0].mxu0 %v2851
        %v2969 = vpop.f32.mrb[0].mxu0
        %v2970 = vadd.f32 0.0, %v2969
        %v2971 = vpop.f32.mrb[0].mxu0
        %v2972 = vadd.f32 0.0, %v2971
        %2973 = vdwg.mxu0
        %2974 = vmatprep.subr.mxu0 0.0
        %2975 = vmatpush1.msra.mxu0 %v2857
        %2976 = vmatprep.subr.mxu0 0.0
        %2977 = vmatpush1.msra.mxu0 %v2860
        %2978 = vmatprep.subr.mxu0 0.0
        %2979 = vmatpush1.msra.mxu0 %v2863
        %2980 = vmatprep.subr.mxu0 0.0
        %2981 = vmatpush1.msra.mxu0 %v2866
        %2982 = vmatprep.subr.mxu0 0.0
        %2983 = vmatpush1.msra.mxu0 %v2869
        %2984 = vmatprep.subr.mxu0 0.0
        %2985 = vmatpush1.msra.mxu0 %v2872
        %2986 = vmatprep.subr.mxu0 0.0
        %2987 = vmatpush1.msra.mxu0 %v2875
        %2988 = vmatprep.subr.mxu0 0.0
        %2989 = vmatpush1.msra.mxu0 %v2878
        %2990 = vmatprep.subr.mxu0 0.0
        %2991 = vmatpush1.msra.mxu0 %v2881
        %2992 = vmatprep.subr.mxu0 0.0
        %2993 = vmatpush1.msra.mxu0 %v2884
        %2994 = vmatprep.subr.mxu0 0.0
        %2995 = vmatpush1.msra.mxu0 %v2887
        %2996 = vmatprep.subr.mxu0 0.0
        %2997 = vmatpush1.msra.mxu0 %v2890
        %2998 = vmatprep.subr.mxu0 0.0
        %2999 = vmatpush1.msra.mxu0 %v2893
        %3000 = vmatprep.subr.mxu0 0.0
        %3001 = vmatpush1.msra.mxu0 %v2896
        %3002 = vmatprep.subr.mxu0 0.0
        %3003 = vmatpush1.msra.mxu0 %v2899
        %3004 = vmatprep.subr.mxu0 0.0
        %3005 = vmatpush1.msra.mxu0 %v2902
        %3006 = vmatprep.subr.mxu0 0.0
        %3007 = vmatpush1.msra.mxu0 0.0
        %3008 = vmatprep.subr.mxu0 0.0
        %3009 = vmatpush1.msra.mxu0 0.0
        %3010 = vmatprep.subr.mxu0 0.0
        %3011 = vmatpush1.msra.mxu0 0.0
        %3012 = vmatprep.subr.mxu0 0.0
        %3013 = vmatpush1.msra.mxu0 0.0
        %3014 = vmatprep.subr.mxu0 0.0
        %3015 = vmatpush1.msra.mxu0 0.0
        %3016 = vmatprep.subr.mxu0 0.0
        %3017 = vmatpush1.msra.mxu0 0.0
        %3018 = vmatprep.subr.mxu0 0.0
        %3019 = vmatpush1.msra.mxu0 0.0
        %3020 = vmatprep.subr.mxu0 0.0
        %3021 = vmatpush1.msra.mxu0 0.0
        %3022 = vmatprep.subr.mxu0 0.0
        %3023 = vmatpush1.msra.mxu0 0.0
        %3024 = vmatprep.subr.mxu0 0.0
        %3025 = vmatpush1.msra.mxu0 0.0
        %3026 = vmatprep.subr.mxu0 0.0
        %3027 = vmatpush1.msra.mxu0 0.0
        %3028 = vmatprep.subr.mxu0 0.0
        %3029 = vmatpush1.msra.mxu0 0.0
        %3030 = vmatprep.subr.mxu0 0.0
        %3031 = vmatpush1.msra.mxu0 0.0
        %3032 = vmatprep.subr.mxu0 0.0
        %3033 = vmatpush1.msra.mxu0 0.0
        %3034 = vmatprep.subr.mxu0 0.0
        %3035 = vmatpush1.msra.mxu0 0.0
        %3036 = vmatprep.subr.mxu0 0.0
        %3037 = vmatpush1.msra.mxu0 0.0
        %3038 = vmatprep.mubr.f32.mxu0 0.0
        %3039 = vmatmul.mubr.f32.gmra.mrb[0].mxu0 %v2851
        %v3040 = vpop.f32.mrb[0].mxu0
        %v3041 = vadd.f32 0.0, %v3040
        %v3042 = vpop.f32.mrb[0].mxu0
        %3043 = vdwg.mxu0
        %v3044 = vadd.f32 %v2854, %v2970
        %v3045 = vxor.u32 %v3044, 2147483648
        %v3046 = vmul.f32 %v3045, 1.442695
        %v3047 = vpow.pop %v3046
        %v3048 = vadd.f32 %v3047, 1.0
        %v3049 = vrcp.pop %v3048
        %v3050 = vmul.f32 1.0, %v3049
        %v3052 = vrot.slane %v2854, 2
        %v3054 = vadd.f32 %v3052, %v2972
        %v3055 = vxor.u32 %v3054, 2147483648
        %v3056 = vmul.f32 %v3055, 1.442695
        %v3057 = vpow.pop %v3056
        %v3058 = vadd.f32 %v3057, 1.0
        %v3059 = vrcp.pop %v3058
        %v3060 = vmul.f32 1.0, %v3059
        %v3061 = vadd.f32 %v3041, %v1757
        %v3062 = vmul.f32 %v3050, %v3061
        %v3063 = vrot.slane %v2854, 4
        %v3065 = vadd.f32 %v3063, %v3062
        %v3066 = vtanh.pop %v3065
        %v3067 = vsub.f32 1.0, %v3060
        %v3068 = vmul.f32 %v3067, %v3066
        %v3069 = vmul.f32 %v3060, %v2851
        %v3070 = vadd.f32 %v3068, %v3069
        %s3071 = scalar_lea.vmem %s288, 10 [#allocation10]
        %3072 = vst [vmem:[%s3071] sm:$0x3] %v3070
        %v3073 = vld [vmem:[%s1570] sm:$0x3f]
        %v3074 = vld [vmem:[#allocation9] sm:$0xff]
        %v3075 = vld [vmem:[#allocation9 + $0x8] sm:$0xff]
        %v3076 = vld [vmem:[#allocation9 + $0x10] sm:$0xff]
        %v3077 = vld [vmem:[#allocation9 + $0x18] sm:$0xff]
        %v3078 = vld [vmem:[#allocation9 + $0x20] sm:$0xff]
        %v3079 = vld [vmem:[#allocation9 + $0x28] sm:$0xff]
        %v3080 = vld [vmem:[#allocation9 + $0x30] sm:$0xff]
        %v3081 = vld [vmem:[#allocation9 + $0x38] sm:$0xff]
        %v3082 = vld [vmem:[#allocation9 + $0x40] sm:$0xff]
        %v3083 = vld [vmem:[#allocation9 + $0x48] sm:$0xff]
        %v3084 = vld [vmem:[#allocation9 + $0x50] sm:$0xff]
        %v3085 = vld [vmem:[#allocation9 + $0x58] sm:$0xff]
        %v3086 = vld [vmem:[#allocation9 + $0x60] sm:$0xff]
        %v3087 = vld [vmem:[#allocation9 + $0x68] sm:$0xff]
        %v3088 = vld [vmem:[#allocation9 + $0x70] sm:$0xff]
        %v3089 = vld [vmem:[#allocation9 + $0x78] sm:$0xff]
        %v3090 = vld [vmem:[#allocation9 + $0x80] sm:$0xff]
        %v3091 = vld [vmem:[#allocation9 + $0x88] sm:$0xff]
        %v3092 = vld [vmem:[#allocation9 + $0x90] sm:$0xff]
        %v3093 = vld [vmem:[#allocation9 + $0x98] sm:$0xff]
        %v3094 = vld [vmem:[#allocation9 + $0xa0] sm:$0xff]
        %v3095 = vld [vmem:[#allocation9 + $0xa8] sm:$0xff]
        %v3096 = vld [vmem:[#allocation9 + $0xb0] sm:$0xff]
        %v3097 = vld [vmem:[#allocation9 + $0xb8] sm:$0xff]
        %v3098 = vld [vmem:[#allocation9 + $0xc0] sm:$0xff]
        %v3099 = vld [vmem:[#allocation9 + $0xc8] sm:$0xff]
        %v3100 = vld [vmem:[#allocation9 + $0xd0] sm:$0xff]
        %v3101 = vld [vmem:[#allocation9 + $0xd8] sm:$0xff]
        %v3102 = vld [vmem:[#allocation9 + $0xe0] sm:$0xff]
        %v3103 = vld [vmem:[#allocation9 + $0xe8] sm:$0xff]
        %v3104 = vld [vmem:[#allocation9 + $0xf0] sm:$0xff]
        %v3105 = vld [vmem:[#allocation9 + $0xf8] sm:$0xff]
        %v3106 = vld [vmem:[#allocation9 + $0x100] sm:$0xff]
        %v3107 = vld [vmem:[#allocation9 + $0x108] sm:$0xff]
        %v3108 = vld [vmem:[#allocation9 + $0x110] sm:$0xff]
        %v3109 = vld [vmem:[#allocation9 + $0x118] sm:$0xff]
        %v3110 = vld [vmem:[#allocation9 + $0x120] sm:$0xff]
        %v3111 = vld [vmem:[#allocation9 + $0x128] sm:$0xff]
        %v3112 = vld [vmem:[#allocation9 + $0x130] sm:$0xff]
        %v3113 = vld [vmem:[#allocation9 + $0x138] sm:$0xff]
        %v3114 = vld [vmem:[#allocation9 + $0x140] sm:$0xff]
        %v3115 = vld [vmem:[#allocation9 + $0x148] sm:$0xff]
        %v3116 = vld [vmem:[#allocation9 + $0x150] sm:$0xff]
        %v3117 = vld [vmem:[#allocation9 + $0x158] sm:$0xff]
        %v3118 = vld [vmem:[#allocation9 + $0x160] sm:$0xff]
        %v3119 = vld [vmem:[#allocation9 + $0x168] sm:$0xff]
        %v3120 = vld [vmem:[#allocation9 + $0x170] sm:$0xff]
        %v3121 = vld [vmem:[#allocation9 + $0x178] sm:$0xff]
        %3122 = vmatprep.subr.mxu0 %v3075
        %3123 = vmatpush1.msra.mxu0 %v3074
        %3124 = vmatprep.subr.mxu0 %v3078
        %3125 = vmatpush1.msra.mxu0 %v3077
        %3126 = vmatprep.subr.mxu0 %v3081
        %3127 = vmatpush1.msra.mxu0 %v3080
        %3128 = vmatprep.subr.mxu0 %v3084
        %3129 = vmatpush1.msra.mxu0 %v3083
        %3130 = vmatprep.subr.mxu0 %v3087
        %3131 = vmatpush1.msra.mxu0 %v3086
        %3132 = vmatprep.subr.mxu0 %v3090
        %3133 = vmatpush1.msra.mxu0 %v3089
        %3134 = vmatprep.subr.mxu0 %v3093
        %3135 = vmatpush1.msra.mxu0 %v3092
        %3136 = vmatprep.subr.mxu0 %v3096
        %3137 = vmatpush1.msra.mxu0 %v3095
        %3138 = vmatprep.subr.mxu0 %v3099
        %3139 = vmatpush1.msra.mxu0 %v3098
        %3140 = vmatprep.subr.mxu0 %v3102
        %3141 = vmatpush1.msra.mxu0 %v3101
        %3142 = vmatprep.subr.mxu0 %v3105
        %3143 = vmatpush1.msra.mxu0 %v3104
        %3144 = vmatprep.subr.mxu0 %v3108
        %3145 = vmatpush1.msra.mxu0 %v3107
        %3146 = vmatprep.subr.mxu0 %v3111
        %3147 = vmatpush1.msra.mxu0 %v3110
        %3148 = vmatprep.subr.mxu0 %v3114
        %3149 = vmatpush1.msra.mxu0 %v3113
        %3150 = vmatprep.subr.mxu0 %v3117
        %3151 = vmatpush1.msra.mxu0 %v3116
        %3152 = vmatprep.subr.mxu0 %v3120
        %3153 = vmatpush1.msra.mxu0 %v3119
        %3154 = vmatprep.subr.mxu0 0.0
        %3155 = vmatpush1.msra.mxu0 0.0
        %3156 = vmatprep.subr.mxu0 0.0
        %3157 = vmatpush1.msra.mxu0 0.0
        %3158 = vmatprep.subr.mxu0 0.0
        %3159 = vmatpush1.msra.mxu0 0.0
        %3160 = vmatprep.subr.mxu0 0.0
        %3161 = vmatpush1.msra.mxu0 0.0
        %3162 = vmatprep.subr.mxu0 0.0
        %3163 = vmatpush1.msra.mxu0 0.0
        %3164 = vmatprep.subr.mxu0 0.0
        %3165 = vmatpush1.msra.mxu0 0.0
        %3166 = vmatprep.subr.mxu0 0.0
        %3167 = vmatpush1.msra.mxu0 0.0
        %3168 = vmatprep.subr.mxu0 0.0
        %3169 = vmatpush1.msra.mxu0 0.0
        %3170 = vmatprep.subr.mxu0 0.0
        %3171 = vmatpush1.msra.mxu0 0.0
        %3172 = vmatprep.subr.mxu0 0.0
        %3173 = vmatpush1.msra.mxu0 0.0
        %3174 = vmatprep.subr.mxu0 0.0
        %3175 = vmatpush1.msra.mxu0 0.0
        %3176 = vmatprep.subr.mxu0 0.0
        %3177 = vmatpush1.msra.mxu0 0.0
        %3178 = vmatprep.subr.mxu0 0.0
        %3179 = vmatpush1.msra.mxu0 0.0
        %3180 = vmatprep.subr.mxu0 0.0
        %3181 = vmatpush1.msra.mxu0 0.0
        %3182 = vmatprep.subr.mxu0 0.0
        %3183 = vmatpush1.msra.mxu0 0.0
        %3184 = vmatprep.subr.mxu0 0.0
        %3185 = vmatpush1.msra.mxu0 0.0
        %3186 = vmatprep.mubr.f32.mxu0 0.0
        %3187 = vmatmul.mubr.f32.gmra.mrb[0].mxu0 %v3070
        %v3188 = vpop.f32.mrb[0].mxu0
        %v3189 = vadd.f32 0.0, %v3188
        %v3190 = vpop.f32.mrb[0].mxu0
        %v3191 = vadd.f32 0.0, %v3190
        %3192 = vdwg.mxu0
        %3193 = vmatprep.subr.mxu0 0.0
        %3194 = vmatpush1.msra.mxu0 %v3076
        %3195 = vmatprep.subr.mxu0 0.0
        %3196 = vmatpush1.msra.mxu0 %v3079
        %3197 = vmatprep.subr.mxu0 0.0
        %3198 = vmatpush1.msra.mxu0 %v3082
        %3199 = vmatprep.subr.mxu0 0.0
        %3200 = vmatpush1.msra.mxu0 %v3085
        %3201 = vmatprep.subr.mxu0 0.0
        %3202 = vmatpush1.msra.mxu0 %v3088
        %3203 = vmatprep.subr.mxu0 0.0
        %3204 = vmatpush1.msra.mxu0 %v3091
        %3205 = vmatprep.subr.mxu0 0.0
        %3206 = vmatpush1.msra.mxu0 %v3094
        %3207 = vmatprep.subr.mxu0 0.0
        %3208 = vmatpush1.msra.mxu0 %v3097
        %3209 = vmatprep.subr.mxu0 0.0
        %3210 = vmatpush1.msra.mxu0 %v3100
        %3211 = vmatprep.subr.mxu0 0.0
        %3212 = vmatpush1.msra.mxu0 %v3103
        %3213 = vmatprep.subr.mxu0 0.0
        %3214 = vmatpush1.msra.mxu0 %v3106
        %3215 = vmatprep.subr.mxu0 0.0
        %3216 = vmatpush1.msra.mxu0 %v3109
        %3217 = vmatprep.subr.mxu0 0.0
        %3218 = vmatpush1.msra.mxu0 %v3112
        %3219 = vmatprep.subr.mxu0 0.0
        %3220 = vmatpush1.msra.mxu0 %v3115
        %3221 = vmatprep.subr.mxu0 0.0
        %3222 = vmatpush1.msra.mxu0 %v3118
        %3223 = vmatprep.subr.mxu0 0.0
        %3224 = vmatpush1.msra.mxu0 %v3121
        %3225 = vmatprep.subr.mxu0 0.0
        %3226 = vmatpush1.msra.mxu0 0.0
        %3227 = vmatprep.subr.mxu0 0.0
        %3228 = vmatpush1.msra.mxu0 0.0
        %3229 = vmatprep.subr.mxu0 0.0
        %3230 = vmatpush1.msra.mxu0 0.0
        %3231 = vmatprep.subr.mxu0 0.0
        %3232 = vmatpush1.msra.mxu0 0.0
        %3233 = vmatprep.subr.mxu0 0.0
        %3234 = vmatpush1.msra.mxu0 0.0
        %3235 = vmatprep.subr.mxu0 0.0
        %3236 = vmatpush1.msra.mxu0 0.0
        %3237 = vmatprep.subr.mxu0 0.0
        %3238 = vmatpush1.msra.mxu0 0.0
        %3239 = vmatprep.subr.mxu0 0.0
        %3240 = vmatpush1.msra.mxu0 0.0
        %3241 = vmatprep.subr.mxu0 0.0
        %3242 = vmatpush1.msra.mxu0 0.0
        %3243 = vmatprep.subr.mxu0 0.0
        %3244 = vmatpush1.msra.mxu0 0.0
        %3245 = vmatprep.subr.mxu0 0.0
        %3246 = vmatpush1.msra.mxu0 0.0
        %3247 = vmatprep.subr.mxu0 0.0
        %3248 = vmatpush1.msra.mxu0 0.0
        %3249 = vmatprep.subr.mxu0 0.0
        %3250 = vmatpush1.msra.mxu0 0.0
        %3251 = vmatprep.subr.mxu0 0.0
        %3252 = vmatpush1.msra.mxu0 0.0
        %3253 = vmatprep.subr.mxu0 0.0
        %3254 = vmatpush1.msra.mxu0 0.0
        %3255 = vmatprep.subr.mxu0 0.0
        %3256 = vmatpush1.msra.mxu0 0.0
        %3257 = vmatprep.mubr.f32.mxu0 0.0
        %3258 = vmatmul.mubr.f32.gmra.mrb[0].mxu0 %v3070
        %v3259 = vpop.f32.mrb[0].mxu0
        %v3260 = vadd.f32 0.0, %v3259
        %v3261 = vpop.f32.mrb[0].mxu0
        %3262 = vdwg.mxu0
        %v3263 = vadd.f32 %v3073, %v3189
        %v3264 = vxor.u32 %v3263, 2147483648
        %v3265 = vmul.f32 %v3264, 1.442695
        %v3266 = vpow.pop %v3265
        %v3267 = vadd.f32 %v3266, 1.0
        %v3268 = vrcp.pop %v3267
        %v3269 = vmul.f32 1.0, %v3268
        %v3271 = vrot.slane %v3073, 2
        %v3273 = vadd.f32 %v3271, %v3191
        %v3274 = vxor.u32 %v3273, 2147483648
        %v3275 = vmul.f32 %v3274, 1.442695
        %v3276 = vpow.pop %v3275
        %v3277 = vadd.f32 %v3276, 1.0
        %v3278 = vrcp.pop %v3277
        %v3279 = vmul.f32 1.0, %v3278
        %v3280 = vadd.f32 %v3260, %v1757
        %v3281 = vmul.f32 %v3269, %v3280
        %v3282 = vrot.slane %v3073, 4
        %v3284 = vadd.f32 %v3282, %v3281
        %v3285 = vtanh.pop %v3284
        %v3286 = vsub.f32 1.0, %v3279
        %v3287 = vmul.f32 %v3286, %v3285
        %v3288 = vmul.f32 %v3279, %v3070
        %v3289 = vadd.f32 %v3287, %v3288
        %s3290 = scalar_lea.vmem %s288, 12 [#allocation10]
        %3291 = vst [vmem:[%s3290] sm:$0x3] %v3289
        %v3292 = vld [vmem:[%s1750] sm:$0x3f]
        %v3293 = vld [vmem:[#allocation9] sm:$0xff]
        %v3294 = vld [vmem:[#allocation9 + $0x8] sm:$0xff]
        %v3295 = vld [vmem:[#allocation9 + $0x10] sm:$0xff]
        %v3296 = vld [vmem:[#allocation9 + $0x18] sm:$0xff]
        %v3297 = vld [vmem:[#allocation9 + $0x20] sm:$0xff]
        %v3298 = vld [vmem:[#allocation9 + $0x28] sm:$0xff]
        %v3299 = vld [vmem:[#allocation9 + $0x30] sm:$0xff]
        %v3300 = vld [vmem:[#allocation9 + $0x38] sm:$0xff]
        %v3301 = vld [vmem:[#allocation9 + $0x40] sm:$0xff]
        %v3302 = vld [vmem:[#allocation9 + $0x48] sm:$0xff]
        %v3303 = vld [vmem:[#allocation9 + $0x50] sm:$0xff]
        %v3304 = vld [vmem:[#allocation9 + $0x58] sm:$0xff]
        %v3305 = vld [vmem:[#allocation9 + $0x60] sm:$0xff]
        %v3306 = vld [vmem:[#allocation9 + $0x68] sm:$0xff]
        %v3307 = vld [vmem:[#allocation9 + $0x70] sm:$0xff]
        %v3308 = vld [vmem:[#allocation9 + $0x78] sm:$0xff]
        %v3309 = vld [vmem:[#allocation9 + $0x80] sm:$0xff]
        %v3310 = vld [vmem:[#allocation9 + $0x88] sm:$0xff]
        %v3311 = vld [vmem:[#allocation9 + $0x90] sm:$0xff]
        %v3312 = vld [vmem:[#allocation9 + $0x98] sm:$0xff]
        %v3313 = vld [vmem:[#allocation9 + $0xa0] sm:$0xff]
        %v3314 = vld [vmem:[#allocation9 + $0xa8] sm:$0xff]
        %v3315 = vld [vmem:[#allocation9 + $0xb0] sm:$0xff]
        %v3316 = vld [vmem:[#allocation9 + $0xb8] sm:$0xff]
        %v3317 = vld [vmem:[#allocation9 + $0xc0] sm:$0xff]
        %v3318 = vld [vmem:[#allocation9 + $0xc8] sm:$0xff]
        %v3319 = vld [vmem:[#allocation9 + $0xd0] sm:$0xff]
        %v3320 = vld [vmem:[#allocation9 + $0xd8] sm:$0xff]
        %v3321 = vld [vmem:[#allocation9 + $0xe0] sm:$0xff]
        %v3322 = vld [vmem:[#allocation9 + $0xe8] sm:$0xff]
        %v3323 = vld [vmem:[#allocation9 + $0xf0] sm:$0xff]
        %v3324 = vld [vmem:[#allocation9 + $0xf8] sm:$0xff]
        %v3325 = vld [vmem:[#allocation9 + $0x100] sm:$0xff]
        %v3326 = vld [vmem:[#allocation9 + $0x108] sm:$0xff]
        %v3327 = vld [vmem:[#allocation9 + $0x110] sm:$0xff]
        %v3328 = vld [vmem:[#allocation9 + $0x118] sm:$0xff]
        %v3329 = vld [vmem:[#allocation9 + $0x120] sm:$0xff]
        %v3330 = vld [vmem:[#allocation9 + $0x128] sm:$0xff]
        %v3331 = vld [vmem:[#allocation9 + $0x130] sm:$0xff]
        %v3332 = vld [vmem:[#allocation9 + $0x138] sm:$0xff]
        %v3333 = vld [vmem:[#allocation9 + $0x140] sm:$0xff]
        %v3334 = vld [vmem:[#allocation9 + $0x148] sm:$0xff]
        %v3335 = vld [vmem:[#allocation9 + $0x150] sm:$0xff]
        %v3336 = vld [vmem:[#allocation9 + $0x158] sm:$0xff]
        %v3337 = vld [vmem:[#allocation9 + $0x160] sm:$0xff]
        %v3338 = vld [vmem:[#allocation9 + $0x168] sm:$0xff]
        %v3339 = vld [vmem:[#allocation9 + $0x170] sm:$0xff]
        %v3340 = vld [vmem:[#allocation9 + $0x178] sm:$0xff]
        %3341 = vmatprep.subr.mxu0 %v3294
        %3342 = vmatpush1.msra.mxu0 %v3293
        %3343 = vmatprep.subr.mxu0 %v3297
        %3344 = vmatpush1.msra.mxu0 %v3296
        %3345 = vmatprep.subr.mxu0 %v3300
        %3346 = vmatpush1.msra.mxu0 %v3299
        %3347 = vmatprep.subr.mxu0 %v3303
        %3348 = vmatpush1.msra.mxu0 %v3302
        %3349 = vmatprep.subr.mxu0 %v3306
        %3350 = vmatpush1.msra.mxu0 %v3305
        %3351 = vmatprep.subr.mxu0 %v3309
        %3352 = vmatpush1.msra.mxu0 %v3308
        %3353 = vmatprep.subr.mxu0 %v3312
        %3354 = vmatpush1.msra.mxu0 %v3311
        %3355 = vmatprep.subr.mxu0 %v3315
        %3356 = vmatpush1.msra.mxu0 %v3314
        %3357 = vmatprep.subr.mxu0 %v3318
        %3358 = vmatpush1.msra.mxu0 %v3317
        %3359 = vmatprep.subr.mxu0 %v3321
        %3360 = vmatpush1.msra.mxu0 %v3320
        %3361 = vmatprep.subr.mxu0 %v3324
        %3362 = vmatpush1.msra.mxu0 %v3323
        %3363 = vmatprep.subr.mxu0 %v3327
        %3364 = vmatpush1.msra.mxu0 %v3326
        %3365 = vmatprep.subr.mxu0 %v3330
        %3366 = vmatpush1.msra.mxu0 %v3329
        %3367 = vmatprep.subr.mxu0 %v3333
        %3368 = vmatpush1.msra.mxu0 %v3332
        %3369 = vmatprep.subr.mxu0 %v3336
        %3370 = vmatpush1.msra.mxu0 %v3335
        %3371 = vmatprep.subr.mxu0 %v3339
        %3372 = vmatpush1.msra.mxu0 %v3338
        %3373 = vmatprep.subr.mxu0 0.0
        %3374 = vmatpush1.msra.mxu0 0.0
        %3375 = vmatprep.subr.mxu0 0.0
        %3376 = vmatpush1.msra.mxu0 0.0
        %3377 = vmatprep.subr.mxu0 0.0
        %3378 = vmatpush1.msra.mxu0 0.0
        %3379 = vmatprep.subr.mxu0 0.0
        %3380 = vmatpush1.msra.mxu0 0.0
        %3381 = vmatprep.subr.mxu0 0.0
        %3382 = vmatpush1.msra.mxu0 0.0
        %3383 = vmatprep.subr.mxu0 0.0
        %3384 = vmatpush1.msra.mxu0 0.0
        %3385 = vmatprep.subr.mxu0 0.0
        %3386 = vmatpush1.msra.mxu0 0.0
        %3387 = vmatprep.subr.mxu0 0.0
        %3388 = vmatpush1.msra.mxu0 0.0
        %3389 = vmatprep.subr.mxu0 0.0
        %3390 = vmatpush1.msra.mxu0 0.0
        %3391 = vmatprep.subr.mxu0 0.0
        %3392 = vmatpush1.msra.mxu0 0.0
        %3393 = vmatprep.subr.mxu0 0.0
        %3394 = vmatpush1.msra.mxu0 0.0
        %3395 = vmatprep.subr.mxu0 0.0
        %3396 = vmatpush1.msra.mxu0 0.0
        %3397 = vmatprep.subr.mxu0 0.0
        %3398 = vmatpush1.msra.mxu0 0.0
        %3399 = vmatprep.subr.mxu0 0.0
        %3400 = vmatpush1.msra.mxu0 0.0
        %3401 = vmatprep.subr.mxu0 0.0
        %3402 = vmatpush1.msra.mxu0 0.0
        %3403 = vmatprep.subr.mxu0 0.0
        %3404 = vmatpush1.msra.mxu0 0.0
        %3405 = vmatprep.mubr.f32.mxu0 0.0
        %3406 = vmatmul.mubr.f32.gmra.mrb[0].mxu0 %v3289
        %v3407 = vpop.f32.mrb[0].mxu0
        %v3408 = vadd.f32 0.0, %v3407
        %v3409 = vpop.f32.mrb[0].mxu0
        %v3410 = vadd.f32 0.0, %v3409
        %3411 = vdwg.mxu0
        %3412 = vmatprep.subr.mxu0 0.0
        %3413 = vmatpush1.msra.mxu0 %v3295
        %3414 = vmatprep.subr.mxu0 0.0
        %3415 = vmatpush1.msra.mxu0 %v3298
        %3416 = vmatprep.subr.mxu0 0.0
        %3417 = vmatpush1.msra.mxu0 %v3301
        %3418 = vmatprep.subr.mxu0 0.0
        %3419 = vmatpush1.msra.mxu0 %v3304
        %3420 = vmatprep.subr.mxu0 0.0
        %3421 = vmatpush1.msra.mxu0 %v3307
        %3422 = vmatprep.subr.mxu0 0.0
        %3423 = vmatpush1.msra.mxu0 %v3310
        %3424 = vmatprep.subr.mxu0 0.0
        %3425 = vmatpush1.msra.mxu0 %v3313
        %3426 = vmatprep.subr.mxu0 0.0
        %3427 = vmatpush1.msra.mxu0 %v3316
        %3428 = vmatprep.subr.mxu0 0.0
        %3429 = vmatpush1.msra.mxu0 %v3319
        %3430 = vmatprep.subr.mxu0 0.0
        %3431 = vmatpush1.msra.mxu0 %v3322
        %3432 = vmatprep.subr.mxu0 0.0
        %3433 = vmatpush1.msra.mxu0 %v3325
        %3434 = vmatprep.subr.mxu0 0.0
        %3435 = vmatpush1.msra.mxu0 %v3328
        %3436 = vmatprep.subr.mxu0 0.0
        %3437 = vmatpush1.msra.mxu0 %v3331
        %3438 = vmatprep.subr.mxu0 0.0
        %3439 = vmatpush1.msra.mxu0 %v3334
        %3440 = vmatprep.subr.mxu0 0.0
        %3441 = vmatpush1.msra.mxu0 %v3337
        %3442 = vmatprep.subr.mxu0 0.0
        %3443 = vmatpush1.msra.mxu0 %v3340
        %3444 = vmatprep.subr.mxu0 0.0
        %3445 = vmatpush1.msra.mxu0 0.0
        %3446 = vmatprep.subr.mxu0 0.0
        %3447 = vmatpush1.msra.mxu0 0.0
        %3448 = vmatprep.subr.mxu0 0.0
        %3449 = vmatpush1.msra.mxu0 0.0
        %3450 = vmatprep.subr.mxu0 0.0
        %3451 = vmatpush1.msra.mxu0 0.0
        %3452 = vmatprep.subr.mxu0 0.0
        %3453 = vmatpush1.msra.mxu0 0.0
        %3454 = vmatprep.subr.mxu0 0.0
        %3455 = vmatpush1.msra.mxu0 0.0
        %3456 = vmatprep.subr.mxu0 0.0
        %3457 = vmatpush1.msra.mxu0 0.0
        %3458 = vmatprep.subr.mxu0 0.0
        %3459 = vmatpush1.msra.mxu0 0.0
        %3460 = vmatprep.subr.mxu0 0.0
        %3461 = vmatpush1.msra.mxu0 0.0
        %3462 = vmatprep.subr.mxu0 0.0
        %3463 = vmatpush1.msra.mxu0 0.0
        %3464 = vmatprep.subr.mxu0 0.0
        %3465 = vmatpush1.msra.mxu0 0.0
        %3466 = vmatprep.subr.mxu0 0.0
        %3467 = vmatpush1.msra.mxu0 0.0
        %3468 = vmatprep.subr.mxu0 0.0
        %3469 = vmatpush1.msra.mxu0 0.0
        %3470 = vmatprep.subr.mxu0 0.0
        %3471 = vmatpush1.msra.mxu0 0.0
        %3472 = vmatprep.subr.mxu0 0.0
        %3473 = vmatpush1.msra.mxu0 0.0
        %3474 = vmatprep.subr.mxu0 0.0
        %3475 = vmatpush1.msra.mxu0 0.0
        %3476 = vmatprep.mubr.f32.mxu0 0.0
        %3477 = vmatmul.mubr.f32.gmra.mrb[0].mxu0 %v3289
        %v3478 = vpop.f32.mrb[0].mxu0
        %v3479 = vadd.f32 0.0, %v3478
        %v3480 = vpop.f32.mrb[0].mxu0
        %3481 = vdwg.mxu0
        %v3482 = vadd.f32 %v3292, %v3408
        %v3483 = vxor.u32 %v3482, 2147483648
        %v3484 = vmul.f32 %v3483, 1.442695
        %v3485 = vpow.pop %v3484
        %v3486 = vadd.f32 %v3485, 1.0
        %v3487 = vrcp.pop %v3486
        %v3488 = vmul.f32 1.0, %v3487
        %v3490 = vrot.slane %v3292, 2
        %v3492 = vadd.f32 %v3490, %v3410
        %v3493 = vxor.u32 %v3492, 2147483648
        %v3494 = vmul.f32 %v3493, 1.442695
        %v3495 = vpow.pop %v3494
        %v3496 = vadd.f32 %v3495, 1.0
        %v3497 = vrcp.pop %v3496
        %v3498 = vmul.f32 1.0, %v3497
        %v3499 = vadd.f32 %v3479, %v1757
        %v3500 = vmul.f32 %v3488, %v3499
        %v3501 = vrot.slane %v3292, 4
        %v3503 = vadd.f32 %v3501, %v3500
        %v3504 = vtanh.pop %v3503
        %v3505 = vsub.f32 1.0, %v3498
        %v3506 = vmul.f32 %v3505, %v3504
        %v3507 = vmul.f32 %v3498, %v3289
        %v3508 = vadd.f32 %v3506, %v3507
        %s3509 = scalar_lea.vmem %s288, 14 [#allocation10]
        %3510 = vst [vmem:[%s3509] sm:$0x3] %v3508
        %3511 = vst [vmem:[#allocation2] sm:$0x3] %v3508
        %s3512 = sand.u32 %s157, 1
        %s3513 = scalar_lea.sflag [#allocation6], %s3512
        %s3514 = sand.u32 %s157, 1
        %s3515 = smul.addr %s3514, 16
        %s3516 = scalar_lea.vmem [#allocation10], %s3515
        // Predicated region
        $region57: #{tpu_custom_call.1} parent=39 // pred_check
          %p3517 = pneg %p167
        $region58: #{tpu_custom_call.1} parent=39 // pred_check_branch
          %3519 = sbr.rel (%p3517) target = $region60
        $region59: #{tpu_custom_call.1} parent=39 // pred_region
          %s3520 = smul.u32 8, %s28
          %s3522 = ssub.s32 256, 256
          %3523 = vsyncadd %s3513, %s3522
          %s3524 = sadd.s32 %s27, %s3520
          %s3525 = smul.addr %s3524, 32
          %s3526 = scalar_lea.hbm %s5, %s3525
          %s3527 = sshll.u32 %s3516, 4
          %s3528 = int_to_ptr.vmem [resolvable:$true] %s3527
          %3533 = dma.vmem_to_hbm [thread:$0]  %s3528, 256, %s3526, %s3513, 32, 32, 2
        $region60: #{tpu_custom_call.1} parent=39 // pred_fallthru
          _
      $region40: #{tpu_custom_call.1} parent=5 // pred_fallthru
        _
      %p3534 = scmp.le.s32.totalorder 2, %s18
      // Predicated region
      $region61: #{tpu_custom_call.1} parent=5 // pred_check
        %p3535 = pneg %p3534
      $region62: #{tpu_custom_call.1} parent=5 // pred_check_branch
        %3537 = sbr.rel (%p3535) target = $region64
      $region63: #{tpu_custom_call.1} parent=5 // pred_region
        %s3538 = ssub.s32 %s18, 2
        // Predicated region
        $region65: #{tpu_custom_call.1} parent=63 // pred_check
          %p3539 = pneg %p173
        $region66: #{tpu_custom_call.1} parent=63 // pred_check_branch
          %3541 = sbr.rel (%p3539) target = $region68
        $region67: #{tpu_custom_call.1} parent=63 // pred_region
          %s3542 = sand.u32 %s158, 1
          %s3543 = scalar_lea.sflag [#allocation6], %s3542
          %s3544 = sand.u32 %s158, 1
          %s3545 = smul.addr %s3544, 16
          %s3546 = scalar_lea.vmem [#allocation10], %s3545
          %3547 = dma.done %s3543, 256
        $region68: #{tpu_custom_call.1} parent=63 // pred_fallthru
          _
      $region64: #{tpu_custom_call.1} parent=5 // pred_fallthru
        _
    $region6: #{tpu_custom_call.1} parent=1 // loop_footer
      %s22 = sadd.s32 1, %s18
    $region7: #{tpu_custom_call.1} parent=1 // loop_footer_branch
      %17 = sbr.rel target = $region3
    $region8: #{tpu_custom_call.1} parent=1 // loop_exit
      _
    %3548 = vsyncpa [#allocation5], 1
    %s3549 = scalar_lea.sflag [#allocation5], 1
    %3550 = vsyncpa %s3549, 1
    %3551 = vsyncpa [#allocation8], 1
    %3552 = vsyncpa [#allocation6], 1
    %s3553 = scalar_lea.sflag [#allocation6], 1
    %3554 = vsyncpa %s3553, 1

</llo_original>
